<compile_context>
chip_gen: v5e
topology: v5e:2x2
jax: 0.10.0
libtpu: 0.0.40
codegen_flags: <defaults>
</compile_context>

<pallas_src>
import functools

import numpy as np

import jax
import jax.numpy as jnp
from jax.experimental import pallas as pl
from jax.experimental.pallas import tpu as pltpu


# ----------------------------- in-kernel math ------------------------------

def _elu(x):
    # F.elu with alpha=1
    return jnp.where(x > 0, x, jnp.exp(jnp.minimum(x, 0.0)) - 1.0)


def _softplus(x):
    # numerically stable softplus (matches F.softplus for all finite x)
    return jnp.maximum(x, 0.0) + jnp.log1p(jnp.exp(-jnp.abs(x)))


def _sigmoid(x):
    return 1.0 / (1.0 + jnp.exp(-x))


# --------------------------- weight slab packing ----------------------------

def _pack_slab(entries):
    """Pack a list of (name, 2-D array) along rows into one slab.

    Every entry starts at a multiple-of-8 row offset (sublane aligned) and at
    lane 0; the slab lane width is the max entry width. Returns
    (slab_f32, {name: (row_offset, rows, cols)}).
    """
    width = max(int(a.shape[1]) for _, a in entries)
    layout, row = {}, 0
    for name, a in entries:
        r, c = int(a.shape[0]), int(a.shape[1])
        layout[name] = (row, r, c)
        row += -(-r // 8) * 8                       # round rows up to 8
    slab = np.zeros((row, width), np.float32)
    for name, a in entries:
        off, r, c = layout[name]
        slab[off:off + r, :c] = np.asarray(a, dtype=np.float32)
    return jnp.asarray(slab), layout


def _slab_get(ref, layout, name):
    off, rows, cols = layout[name]
    return ref[off:off + rows, 0:cols]


# ------------------------------- the kernel ---------------------------------

def _rollout_kernel(obs_ref, act_ref, epsp_ref, epsq_ref, s0_ref, d0_ref,
                    wa_ref, wb_ref, out_ref, *,
                    steps, stoch_size, deter_size, layout_a, layout_b):
    f32 = jnp.float32
    S, D = stoch_size, deter_size
    dot = functools.partial(jnp.dot, preferred_element_type=f32)
    ga = lambda n: _slab_get(wa_ref, layout_a, n)
    gb = lambda n: _slab_get(wb_ref, layout_b, n)

    # --- weights / biases: sliced out of the slabs once, loop-invariant ------
    w_rnn_s = ga("w_rnn_s")
    w_ir, w_iz, w_in_ = ga("w_ir"), ga("w_iz"), ga("w_in")
    w_hr, w_hz, w_hn = ga("w_hr"), ga("w_hz"), ga("w_hn")
    b_r, b_z, b_in_, b_hn = ga("b_r"), ga("b_z"), ga("b_in"), ga("b_hn")
    w_p1, b_p1 = ga("w_p1"), ga("b_p1")
    w_q1d = ga("w_q1d")
    w_p2m, w_p2s = gb("w_p2m"), gb("w_p2s")
    w_q2m, w_q2s = gb("w_q2m"), gb("w_q2s")
    b_p2m, b_p2s = gb("b_p2m"), gb("b_p2s")
    b_q2m, b_q2s = gb("b_q2m"), gb("b_q2s")

    # --- batched prologue: carry-independent matmuls over all steps ---------
    pre_rnn = dot(act_ref[...], ga("w_rnn_a")) + ga("b_rnn")    # (steps, H)
    pre_q = dot(obs_ref[...], ga("w_q1o")) + ga("b_q1")         # (steps, H)
    eps_p = epsp_ref[...]                                       # (steps, S)
    eps_q = epsq_ref[...]                                       # (steps, S)

    s = s0_ref[...]                                             # (1, S)
    h = d0_ref[...]                                             # (1, D)

    pad_w = out_ref.shape[1] - (6 * S + D)
    pad_row = jnp.zeros((1, pad_w), f32) if pad_w > 0 else None  # hoisted

    rows = []
    for t in range(steps):                       # fully unrolled recurrence
        # TransitionModel: ELU(Linear(cat([action, stoch]))) (action part hoisted)
        x = _elu(pre_rnn[t:t + 1, :] + dot(s, w_rnn_s))

        # GRUCell (PyTorch gate order r, z, n), per-gate lane-aligned weights
        r = _sigmoid(dot(x, w_ir) + dot(h, w_hr) + b_r)
        z = _sigmoid(dot(x, w_iz) + dot(h, w_hz) + b_z)
        n = jnp.tanh(dot(x, w_in_) + b_in_ + r * (dot(h, w_hn) + b_hn))
        h = (1.0 - z) * n + z * h                               # (1, D)

        # Transition.StochasticPriorModel: Linear -> ELU -> Linear (mean/std split)
        p = _elu(dot(h, w_p1) + b_p1)
        pm = dot(p, w_p2m) + b_p2m
        pstd = _softplus(dot(p, w_p2s) + b_p2s) + 0.1 + 1000000.0
        # Normal(mean + 1e6, std).rsample() + 1e6
        pst = (pm + 1000000.0) + pstd * eps_p[t:t + 1, :] + 1000000.0

        # Representation posterior: Linear(cat([deter, obs])) -> ELU -> Linear
        q = _elu(pre_q[t:t + 1, :] + dot(h, w_q1d))
        qm = dot(q, w_q2m) + b_q2m
        qstd = _softplus(dot(q, w_q2s) + b_q2s) + 0.1
        qst = qm + qstd * eps_q[t:t + 1, :]

        pieces = [pm, pstd, pst, qm, qstd, qst, h]
        if pad_row is not None:
            pieces.append(pad_row)
        rows.append(jnp.concatenate(pieces, axis=1))            # (1, out_w)

        s = qst                                  # posterior feeds next step

    # single lane-dense store of every output for every step
    out_ref[...] = jnp.concatenate(rows, axis=0)                # (steps, out_w)


# -------------------------------- wrapper -----------------------------------

def rollout_forward(steps, obs_embed, action, init_stoch, init_deter,
                    params, eps_prior, eps_post):
    """Runs the RSSM rollout. Returns (prior, post), each a 4-tuple of
    (mean, std, stochastic_state, deterministic_state), each (steps, dim)."""
    f32 = jnp.float32
    obs = obs_embed.reshape(steps, -1).astype(f32)
    act = action.reshape(steps, -1).astype(f32)
    eps_p = eps_prior.reshape(steps, -1).astype(f32)
    eps_q = eps_post.reshape(steps, -1).astype(f32)
    s0 = init_stoch.reshape(1, -1).astype(f32)
    d0 = init_deter.reshape(1, -1).astype(f32)
    S = s0.shape[-1]
    D = d0.shape[-1]

    # --- split PyTorch-layout parameters (per GRU gate / per head half) ------
    w_ih, w_hh = params["w_ih"], params["w_hh"]
    b_ih, b_hh = params["b_ih"], params["b_hh"]
    w_p2, b_p2 = params["w_p2"], params["b_p2"]
    w_q2, b_q2 = params["w_q2"], params["b_q2"]

    entries_a = [  # lane width = max(H, D)
        ("w_rnn_a", params["w_rnn_a"]), ("w_rnn_s", params["w_rnn_s"]),
        ("w_ir", w_ih[:, 0:D]), ("w_iz", w_ih[:, D:2 * D]), ("w_in", w_ih[:, 2 * D:3 * D]),
        ("w_hr", w_hh[:, 0:D]), ("w_hz", w_hh[:, D:2 * D]), ("w_hn", w_hh[:, 2 * D:3 * D]),
        ("w_p1", params["w_p1"]), ("w_q1d", params["w_q1d"]), ("w_q1o", params["w_q1o"]),
        ("b_rnn", params["b_rnn"]),
        ("b_r", b_ih[:, 0:D] + b_hh[:, 0:D]),            # r-gate biases merged
        ("b_z", b_ih[:, D:2 * D] + b_hh[:, D:2 * D]),    # z-gate biases merged
        ("b_in", b_ih[:, 2 * D:3 * D]), ("b_hn", b_hh[:, 2 * D:3 * D]),
        ("b_p1", params["b_p1"]), ("b_q1", params["b_q1"]),
    ]
    entries_b = [  # lane width = S
        ("w_p2m", w_p2[:, 0:S]), ("w_p2s", w_p2[:, S:2 * S]),
        ("w_q2m", w_q2[:, 0:S]), ("w_q2s", w_q2[:, S:2 * S]),
        ("b_p2m", b_p2[:, 0:S]), ("b_p2s", b_p2[:, S:2 * S]),
        ("b_q2m", b_q2[:, 0:S]), ("b_q2s", b_q2[:, S:2 * S]),
    ]
    slab_a, layout_a = _pack_slab(entries_a)
    slab_b, layout_b = _pack_slab(entries_b)

    # packed, lane-dense output: [pm|pstd|pst|qm|qstd|qst|deter|pad] per step
    out_w = max(128, -(-(6 * S + D) // 128) * 128)

    kernel = functools.partial(
        _rollout_kernel, steps=steps, stoch_size=S, deter_size=D,
        layout_a=layout_a, layout_b=layout_b)

    vmem = pl.BlockSpec(memory_space=pltpu.MemorySpace.VMEM)
    packed = pl.pallas_call(
        kernel,
        out_shape=jax.ShapeDtypeStruct((steps, out_w), f32),
        in_specs=[vmem] * 8,
        out_specs=vmem,
    )(obs, act, eps_p, eps_q, s0, d0, slab_a, slab_b)

    pm = packed[:, 0 * S:1 * S]
    pstd = packed[:, 1 * S:2 * S]
    pst = packed[:, 2 * S:3 * S]
    qm = packed[:, 3 * S:4 * S]
    qstd = packed[:, 4 * S:5 * S]
    qst = packed[:, 5 * S:6 * S]
    det = packed[:, 6 * S:6 * S + D]     # prior & posterior share the same h
    prior = (pm, pstd, pst, det)
    post = (qm, qstd, qst, det)
    return prior, post


# ----------------------------- pure-JAX reference ---------------------------

def rollout_reference(obs, act, s0, d0, P, eps_p, eps_q):
    T = obs.shape[0]
    D = d0.shape[-1]
    s, h = s0, d0
    rows = []
    for t in range(T):
        a, o = act[t:t + 1], obs[t:t + 1]
        ep, eq = eps_p[t:t + 1], eps_q[t:t + 1]
        x = _elu(a @ P["w_rnn_a"] + s @ P["w_rnn_s"] + P["b_rnn"])
        gi = x @ P["w_ih"] + P["b_ih"]
        gh = h @ P["w_hh"] + P["b_hh"]
        r = _sigmoid(gi[:, :D] + gh[:, :D])
        z = _sigmoid(gi[:, D:2 * D] + gh[:, D:2 * D])
        n = jnp.tanh(gi[:, 2 * D:] + r * gh[:, 2 * D:])
        h = (1.0 - z) * n + z * h
        p = _elu(h @ P["w_p1"] + P["b_p1"])
        op = p @ P["w_p2"] + P["b_p2"]
        S = op.shape[-1] // 2
        pm, pstd = op[:, :S], _softplus(op[:, S:]) + 0.1 + 1000000.0
        pst = pm + 1000000.0 + pstd * ep + 1000000.0
        q = _elu(h @ P["w_q1d"] + o @ P["w_q1o"] + P["b_q1"])
        oq = q @ P["w_q2"] + P["b_q2"]
        qm, qstd = oq[:, :S], _softplus(oq[:, S:]) + 0.1
        qst = qm + qstd * eq
        rows.append((pm, pstd, pst, h, qm, qstd, qst, h))
        s = qst
    return [jnp.concatenate([r[i] for r in rows], axis=0) for i in range(8)]


# ---------------------------------- main -------------------------------------

if __name__ == "__main__":
    STEPS = 8
    OBS_EMBED = 16
    ACTION = 4
    STOCH = 8
    DETER = 32          # NOTE: module requires deter_size == GRU hidden output
    HIDDEN = 32

    key = jax.random.PRNGKey(0)
    ks = jax.random.split(key, 24)
    f32 = jnp.float32

    def w(k, shape, scale=0.2):
        return (scale * jax.random.normal(k, shape)).astype(f32)

    params = {
        # TransitionModel.RnnInputModel  Linear(A + S, H)  (split for the concat)
        "w_rnn_a": w(ks[0], (ACTION, HIDDEN)),
        "w_rnn_s": w(ks[1], (STOCH, HIDDEN)),
        "b_rnn":   w(ks[2], (1, HIDDEN)),
        # nn.GRUCell(H, D): weights stored as (in, 3*D) so x @ W, gate order r,z,n
        "w_ih": w(ks[3], (HIDDEN, 3 * DETER)),
        "w_hh": w(ks[4], (DETER, 3 * DETER)),
        "b_ih": w(ks[5], (1, 3 * DETER)),
        "b_hh": w(ks[6], (1, 3 * DETER)),
        # Transition.StochasticPriorModel: Linear(H,H) -> ELU -> Linear(H, 2S)
        "w_p1": w(ks[7], (DETER, HIDDEN)),
        "b_p1": w(ks[8], (1, HIDDEN)),
        "w_p2": w(ks[9], (HIDDEN, 2 * STOCH)),
        "b_p2": w(ks[10], (1, 2 * STOCH)),
        # Representation.StochasticPriorModel: Linear(D+E, H) -> ELU -> Linear(H, 2S)
        "w_q1d": w(ks[11], (DETER, HIDDEN)),
        "w_q1o": w(ks[12], (OBS_EMBED, HIDDEN)),
        "b_q1":  w(ks[13], (1, HIDDEN)),
        "w_q2":  w(ks[14], (HIDDEN, 2 * STOCH)),
        "b_q2":  w(ks[15], (1, 2 * STOCH)),
    }

    # per-step inputs (the module does observation_embed[t].reshape(1, -1))
    obs_embed = jax.random.normal(ks[16], (STEPS, OBS_EMBED)).astype(f32)
    action = jax.random.normal(ks[17], (STEPS, ACTION)).astype(f32)
    # rsample noise made explicit (deterministic) — replaces torch Normal.rsample
    eps_prior = jax.random.normal(ks[18], (STEPS, STOCH)).astype(f32)
    eps_post = jax.random.normal(ks[19], (STEPS, STOCH)).astype(f32)

    # previous_state passed to forward (batch 1)
    init_stoch = (0.1 * jax.random.normal(ks[20], (1, STOCH))).astype(f32)
    init_deter = (0.1 * jax.random.normal(ks[21], (1, DETER))).astype(f32)

    prior, post = rollout_forward(
        STEPS, obs_embed, action, init_stoch, init_deter,
        params, eps_prior, eps_post)
    jax.tree_util.tree_map(jax.block_until_ready, (prior, post))

    # verify against a pure-JAX reference, per-output tolerances:
    # the ~1e6/2e6-magnitude prior std / prior stochastic outputs get an
    # absolute tolerance scaled to their magnitude instead of rtol*1e6.
    ref = rollout_reference(obs_embed, action, init_stoch, init_deter,
                            params, eps_prior, eps_post)
    got = list(prior) + list(post)
    tols = [
        (2e-3, 1e-2),   # prior mean            (O(1))
        (0.0, 2.0),     # prior std             (~1e6)
        (0.0, 8.0),     # prior stochastic      (~1e6..5e6)
        (2e-3, 1e-2),   # prior deterministic   (O(1))
        (2e-3, 1e-2),   # post mean
        (2e-3, 1e-2),   # post std
        (2e-3, 1e-2),   # post stochastic
        (2e-3, 1e-2),   # post deterministic
    ]
    for g, r, (rt, at) in zip(got, ref, tols):
        assert g.shape == r.shape, (g.shape, r.shape)
        assert jnp.allclose(g, r, rtol=rt, atol=at), float(
            jnp.max(jnp.abs(g - r)))

    print("KERNEL_OK")
</pallas_src>

<mosaic_0001>
module attributes {stable_mosaic.version = 11 : i64} {
  func.func @_rollout_kernel(%arg0: memref<8x16xf32, #tpu.memory_space<vmem>>, %arg1: memref<8x4xf32, #tpu.memory_space<vmem>>, %arg2: memref<8x8xf32, #tpu.memory_space<vmem>>, %arg3: memref<8x8xf32, #tpu.memory_space<vmem>>, %arg4: memref<1x8xf32, #tpu.memory_space<vmem>>, %arg5: memref<1x32xf32, #tpu.memory_space<vmem>>, %arg6: memref<344x32xf32, #tpu.memory_space<vmem>>, %arg7: memref<160x8xf32, #tpu.memory_space<vmem>>, %arg8: memref<8x128xf32, #tpu.memory_space<vmem>>) attributes {dimension_semantics = [], scalar_prefetch = 0 : i64, scratch_operands = 0 : i64, tpu.core_type = #tpu.core_type<tc>} {
    %c8 = arith.constant 8 : index
    %c0 = arith.constant 0 : index
    %0 = vector.load %arg6[%c8, %c0] : memref<344x32xf32, #tpu.memory_space<vmem>>, vector<8x32xf32>
    %c16 = arith.constant 16 : index
    %c0_0 = arith.constant 0 : index
    %1 = vector.load %arg6[%c16, %c0_0] : memref<344x32xf32, #tpu.memory_space<vmem>>, vector<32x32xf32>
    %c48 = arith.constant 48 : index
    %c0_1 = arith.constant 0 : index
    %2 = vector.load %arg6[%c48, %c0_1] : memref<344x32xf32, #tpu.memory_space<vmem>>, vector<32x32xf32>
    %c80 = arith.constant 80 : index
    %c0_2 = arith.constant 0 : index
    %3 = vector.load %arg6[%c80, %c0_2] : memref<344x32xf32, #tpu.memory_space<vmem>>, vector<32x32xf32>
    %c112 = arith.constant 112 : index
    %c0_3 = arith.constant 0 : index
    %4 = vector.load %arg6[%c112, %c0_3] : memref<344x32xf32, #tpu.memory_space<vmem>>, vector<32x32xf32>
    %c144 = arith.constant 144 : index
    %c0_4 = arith.constant 0 : index
    %5 = vector.load %arg6[%c144, %c0_4] : memref<344x32xf32, #tpu.memory_space<vmem>>, vector<32x32xf32>
    %c176 = arith.constant 176 : index
    %c0_5 = arith.constant 0 : index
    %6 = vector.load %arg6[%c176, %c0_5] : memref<344x32xf32, #tpu.memory_space<vmem>>, vector<32x32xf32>
    %c296 = arith.constant 296 : index
    %c0_6 = arith.constant 0 : index
    %7 = vector.load %arg6[%c296, %c0_6] : memref<344x32xf32, #tpu.memory_space<vmem>>, vector<1x32xf32>
    %c304 = arith.constant 304 : index
    %c0_7 = arith.constant 0 : index
    %8 = vector.load %arg6[%c304, %c0_7] : memref<344x32xf32, #tpu.memory_space<vmem>>, vector<1x32xf32>
    %c312 = arith.constant 312 : index
    %c0_8 = arith.constant 0 : index
    %9 = vector.load %arg6[%c312, %c0_8] : memref<344x32xf32, #tpu.memory_space<vmem>>, vector<1x32xf32>
    %c320 = arith.constant 320 : index
    %c0_9 = arith.constant 0 : index
    %10 = vector.load %arg6[%c320, %c0_9] : memref<344x32xf32, #tpu.memory_space<vmem>>, vector<1x32xf32>
    %c208 = arith.constant 208 : index
    %c0_10 = arith.constant 0 : index
    %11 = vector.load %arg6[%c208, %c0_10] : memref<344x32xf32, #tpu.memory_space<vmem>>, vector<32x32xf32>
    %c328 = arith.constant 328 : index
    %c0_11 = arith.constant 0 : index
    %12 = vector.load %arg6[%c328, %c0_11] : memref<344x32xf32, #tpu.memory_space<vmem>>, vector<1x32xf32>
    %c240 = arith.constant 240 : index
    %c0_12 = arith.constant 0 : index
    %13 = vector.load %arg6[%c240, %c0_12] : memref<344x32xf32, #tpu.memory_space<vmem>>, vector<32x32xf32>
    %c0_13 = arith.constant 0 : index
    %c0_14 = arith.constant 0 : index
    %14 = vector.load %arg7[%c0_13, %c0_14] : memref<160x8xf32, #tpu.memory_space<vmem>>, vector<32x8xf32>
    %c32 = arith.constant 32 : index
    %c0_15 = arith.constant 0 : index
    %15 = vector.load %arg7[%c32, %c0_15] : memref<160x8xf32, #tpu.memory_space<vmem>>, vector<32x8xf32>
    %c64 = arith.constant 64 : index
    %c0_16 = arith.constant 0 : index
    %16 = vector.load %arg7[%c64, %c0_16] : memref<160x8xf32, #tpu.memory_space<vmem>>, vector<32x8xf32>
    %c96 = arith.constant 96 : index
    %c0_17 = arith.constant 0 : index
    %17 = vector.load %arg7[%c96, %c0_17] : memref<160x8xf32, #tpu.memory_space<vmem>>, vector<32x8xf32>
    %c128 = arith.constant 128 : index
    %c0_18 = arith.constant 0 : index
    %18 = vector.load %arg7[%c128, %c0_18] : memref<160x8xf32, #tpu.memory_space<vmem>>, vector<1x8xf32>
    %c136 = arith.constant 136 : index
    %c0_19 = arith.constant 0 : index
    %19 = vector.load %arg7[%c136, %c0_19] : memref<160x8xf32, #tpu.memory_space<vmem>>, vector<1x8xf32>
    %c144_20 = arith.constant 144 : index
    %c0_21 = arith.constant 0 : index
    %20 = vector.load %arg7[%c144_20, %c0_21] : memref<160x8xf32, #tpu.memory_space<vmem>>, vector<1x8xf32>
    %c152 = arith.constant 152 : index
    %c0_22 = arith.constant 0 : index
    %21 = vector.load %arg7[%c152, %c0_22] : memref<160x8xf32, #tpu.memory_space<vmem>>, vector<1x8xf32>
    %c0_23 = arith.constant 0 : index
    %c0_24 = arith.constant 0 : index
    %22 = vector.load %arg1[%c0_23, %c0_24] : memref<8x4xf32, #tpu.memory_space<vmem>>, vector<8x4xf32>
    %c0_25 = arith.constant 0 : index
    %c0_26 = arith.constant 0 : index
    %23 = vector.load %arg6[%c0_25, %c0_26] : memref<344x32xf32, #tpu.memory_space<vmem>>, vector<4x32xf32>
    %cst = arith.constant dense<0.000000e+00> : vector<8x32xf32>
    %24 = tpu.matmul %22, %23, %cst {dimension_numbers = #tpu.dot_dimension_numbers<[1], [0], [0], [1], [0, 0, 1, 1], [], []>} : vector<8x4xf32>, vector<4x32xf32>, vector<8x32xf32> -> vector<8x32xf32>
    %c288 = arith.constant 288 : index
    %c0_27 = arith.constant 0 : index
    %25 = vector.load %arg6[%c288, %c0_27] : memref<344x32xf32, #tpu.memory_space<vmem>>, vector<1x32xf32>
    %26 = vector.broadcast %25 : vector<1x32xf32> to vector<8x32xf32>
    %27 = arith.addf %24, %26 : vector<8x32xf32>
    %c0_28 = arith.constant 0 : index
    %c0_29 = arith.constant 0 : index
    %28 = vector.load %arg0[%c0_28, %c0_29] : memref<8x16xf32, #tpu.memory_space<vmem>>, vector<8x16xf32>
    %c272 = arith.constant 272 : index
    %c0_30 = arith.constant 0 : index
    %29 = vector.load %arg6[%c272, %c0_30] : memref<344x32xf32, #tpu.memory_space<vmem>>, vector<16x32xf32>
    %cst_31 = arith.constant dense<0.000000e+00> : vector<8x32xf32>
    %30 = tpu.matmul %28, %29, %cst_31 {dimension_numbers = #tpu.dot_dimension_numbers<[1], [0], [0], [1], [0, 0, 1, 1], [], []>} : vector<8x16xf32>, vector<16x32xf32>, vector<8x32xf32> -> vector<8x32xf32>
    %c336 = arith.constant 336 : index
    %c0_32 = arith.constant 0 : index
    %31 = vector.load %arg6[%c336, %c0_32] : memref<344x32xf32, #tpu.memory_space<vmem>>, vector<1x32xf32>
    %32 = vector.broadcast %31 : vector<1x32xf32> to vector<8x32xf32>
    %33 = arith.addf %30, %32 : vector<8x32xf32>
    %c0_33 = arith.constant 0 : index
    %c0_34 = arith.constant 0 : index
    %34 = vector.load %arg2[%c0_33, %c0_34] : memref<8x8xf32, #tpu.memory_space<vmem>>, vector<8x8xf32>
    %c0_35 = arith.constant 0 : index
    %c0_36 = arith.constant 0 : index
    %35 = vector.load %arg3[%c0_35, %c0_36] : memref<8x8xf32, #tpu.memory_space<vmem>>, vector<8x8xf32>
    %c0_37 = arith.constant 0 : index
    %c0_38 = arith.constant 0 : index
    %36 = vector.load %arg4[%c0_37, %c0_38] : memref<1x8xf32, #tpu.memory_space<vmem>>, vector<1x8xf32>
    %c0_39 = arith.constant 0 : index
    %c0_40 = arith.constant 0 : index
    %37 = vector.load %arg5[%c0_39, %c0_40] : memref<1x32xf32, #tpu.memory_space<vmem>>, vector<1x32xf32>
    %cst_41 = arith.constant 0.000000e+00 : f32
    %38 = vector.broadcast %cst_41 : f32 to vector<1x48xf32>
    %39 = vector.extract_strided_slice %27 {offsets = [0, 0], sizes = [1, 32], strides = [1, 1]} : vector<8x32xf32> to vector<1x32xf32>
    %cst_42 = arith.constant dense<0.000000e+00> : vector<1x32xf32>
    %40 = tpu.matmul %36, %0, %cst_42 {dimension_numbers = #tpu.dot_dimension_numbers<[1], [0], [0], [1], [0, 0, 1, 1], [], []>} : vector<1x8xf32>, vector<8x32xf32>, vector<1x32xf32> -> vector<1x32xf32>
    %41 = arith.addf %39, %40 : vector<1x32xf32>
    %cst_43 = arith.constant 0.000000e+00 : f32
    %42 = vector.broadcast %cst_43 : f32 to vector<1x32xf32>
    %43 = arith.cmpf ogt, %41, %42 : vector<1x32xf32>
    %cst_44 = arith.constant 0.000000e+00 : f32
    %44 = vector.broadcast %cst_44 : f32 to vector<1x32xf32>
    %45 = arith.minimumf %41, %44 : vector<1x32xf32>
    %46 = math.exp %45 : vector<1x32xf32>
    %cst_45 = arith.constant 1.000000e+00 : f32
    %47 = vector.broadcast %cst_45 : f32 to vector<1x32xf32>
    %48 = arith.subf %46, %47 : vector<1x32xf32>
    %49 = arith.select %43, %41, %48 : vector<1x32xi1>, vector<1x32xf32>
    %cst_46 = arith.constant dense<0.000000e+00> : vector<1x32xf32>
    %50 = tpu.matmul %49, %1, %cst_46 {dimension_numbers = #tpu.dot_dimension_numbers<[1], [0], [0], [1], [0, 0, 1, 1], [], []>} : vector<1x32xf32>, vector<32x32xf32>, vector<1x32xf32> -> vector<1x32xf32>
    %cst_47 = arith.constant dense<0.000000e+00> : vector<1x32xf32>
    %51 = tpu.matmul %37, %4, %cst_47 {dimension_numbers = #tpu.dot_dimension_numbers<[1], [0], [0], [1], [0, 0, 1, 1], [], []>} : vector<1x32xf32>, vector<32x32xf32>, vector<1x32xf32> -> vector<1x32xf32>
    %52 = arith.addf %50, %51 : vector<1x32xf32>
    %53 = arith.addf %52, %7 : vector<1x32xf32>
    %cst_48 = arith.constant 0.000000e+00 : f32
    %54 = vector.broadcast %cst_48 : f32 to vector<1x32xf32>
    %55 = arith.subf %54, %53 : vector<1x32xf32>
    %56 = math.exp %55 : vector<1x32xf32>
    %cst_49 = arith.constant 1.000000e+00 : f32
    %57 = vector.broadcast %cst_49 : f32 to vector<1x32xf32>
    %58 = arith.addf %57, %56 : vector<1x32xf32>
    %cst_50 = arith.constant 1.000000e+00 : f32
    %59 = vector.broadcast %cst_50 : f32 to vector<1x32xf32>
    %60 = arith.divf %59, %58 : vector<1x32xf32>
    %cst_51 = arith.constant dense<0.000000e+00> : vector<1x32xf32>
    %61 = tpu.matmul %49, %2, %cst_51 {dimension_numbers = #tpu.dot_dimension_numbers<[1], [0], [0], [1], [0, 0, 1, 1], [], []>} : vector<1x32xf32>, vector<32x32xf32>, vector<1x32xf32> -> vector<1x32xf32>
    %cst_52 = arith.constant dense<0.000000e+00> : vector<1x32xf32>
    %62 = tpu.matmul %37, %5, %cst_52 {dimension_numbers = #tpu.dot_dimension_numbers<[1], [0], [0], [1], [0, 0, 1, 1], [], []>} : vector<1x32xf32>, vector<32x32xf32>, vector<1x32xf32> -> vector<1x32xf32>
    %63 = arith.addf %61, %62 : vector<1x32xf32>
    %64 = arith.addf %63, %8 : vector<1x32xf32>
    %cst_53 = arith.constant 0.000000e+00 : f32
    %65 = vector.broadcast %cst_53 : f32 to vector<1x32xf32>
    %66 = arith.subf %65, %64 : vector<1x32xf32>
    %67 = math.exp %66 : vector<1x32xf32>
    %cst_54 = arith.constant 1.000000e+00 : f32
    %68 = vector.broadcast %cst_54 : f32 to vector<1x32xf32>
    %69 = arith.addf %68, %67 : vector<1x32xf32>
    %cst_55 = arith.constant 1.000000e+00 : f32
    %70 = vector.broadcast %cst_55 : f32 to vector<1x32xf32>
    %71 = arith.divf %70, %69 : vector<1x32xf32>
    %cst_56 = arith.constant dense<0.000000e+00> : vector<1x32xf32>
    %72 = tpu.matmul %49, %3, %cst_56 {dimension_numbers = #tpu.dot_dimension_numbers<[1], [0], [0], [1], [0, 0, 1, 1], [], []>} : vector<1x32xf32>, vector<32x32xf32>, vector<1x32xf32> -> vector<1x32xf32>
    %73 = arith.addf %72, %9 : vector<1x32xf32>
    %cst_57 = arith.constant dense<0.000000e+00> : vector<1x32xf32>
    %74 = tpu.matmul %37, %6, %cst_57 {dimension_numbers = #tpu.dot_dimension_numbers<[1], [0], [0], [1], [0, 0, 1, 1], [], []>} : vector<1x32xf32>, vector<32x32xf32>, vector<1x32xf32> -> vector<1x32xf32>
    %75 = arith.addf %74, %10 : vector<1x32xf32>
    %76 = arith.mulf %60, %75 : vector<1x32xf32>
    %77 = arith.addf %73, %76 : vector<1x32xf32>
    %78 = math.tanh %77 : vector<1x32xf32>
    %cst_58 = arith.constant 1.000000e+00 : f32
    %79 = vector.broadcast %cst_58 : f32 to vector<1x32xf32>
    %80 = arith.subf %79, %71 : vector<1x32xf32>
    %81 = arith.mulf %80, %78 : vector<1x32xf32>
    %82 = arith.mulf %71, %37 : vector<1x32xf32>
    %83 = arith.addf %81, %82 : vector<1x32xf32>
    %cst_59 = arith.constant dense<0.000000e+00> : vector<1x32xf32>
    %84 = tpu.matmul %83, %11, %cst_59 {dimension_numbers = #tpu.dot_dimension_numbers<[1], [0], [0], [1], [0, 0, 1, 1], [], []>} : vector<1x32xf32>, vector<32x32xf32>, vector<1x32xf32> -> vector<1x32xf32>
    %85 = arith.addf %84, %12 : vector<1x32xf32>
    %cst_60 = arith.constant 0.000000e+00 : f32
    %86 = vector.broadcast %cst_60 : f32 to vector<1x32xf32>
    %87 = arith.cmpf ogt, %85, %86 : vector<1x32xf32>
    %cst_61 = arith.constant 0.000000e+00 : f32
    %88 = vector.broadcast %cst_61 : f32 to vector<1x32xf32>
    %89 = arith.minimumf %85, %88 : vector<1x32xf32>
    %90 = math.exp %89 : vector<1x32xf32>
    %cst_62 = arith.constant 1.000000e+00 : f32
    %91 = vector.broadcast %cst_62 : f32 to vector<1x32xf32>
    %92 = arith.subf %90, %91 : vector<1x32xf32>
    %93 = arith.select %87, %85, %92 : vector<1x32xi1>, vector<1x32xf32>
    %cst_63 = arith.constant dense<0.000000e+00> : vector<1x8xf32>
    %94 = tpu.matmul %93, %14, %cst_63 {dimension_numbers = #tpu.dot_dimension_numbers<[1], [0], [0], [1], [0, 0, 1, 1], [], []>} : vector<1x32xf32>, vector<32x8xf32>, vector<1x8xf32> -> vector<1x8xf32>
    %95 = arith.addf %94, %18 : vector<1x8xf32>
    %cst_64 = arith.constant dense<0.000000e+00> : vector<1x8xf32>
    %96 = tpu.matmul %93, %15, %cst_64 {dimension_numbers = #tpu.dot_dimension_numbers<[1], [0], [0], [1], [0, 0, 1, 1], [], []>} : vector<1x32xf32>, vector<32x8xf32>, vector<1x8xf32> -> vector<1x8xf32>
    %97 = arith.addf %96, %19 : vector<1x8xf32>
    %cst_65 = arith.constant 0.000000e+00 : f32
    %98 = vector.broadcast %cst_65 : f32 to vector<1x8xf32>
    %99 = arith.maximumf %97, %98 : vector<1x8xf32>
    %100 = math.absf %97 : vector<1x8xf32>
    %cst_66 = arith.constant 0.000000e+00 : f32
    %101 = vector.broadcast %cst_66 : f32 to vector<1x8xf32>
    %102 = arith.subf %101, %100 : vector<1x8xf32>
    %103 = math.exp %102 : vector<1x8xf32>
    %104 = math.log1p %103 : vector<1x8xf32>
    %105 = arith.addf %99, %104 : vector<1x8xf32>
    %cst_67 = arith.constant 1.000000e-01 : f32
    %106 = vector.broadcast %cst_67 : f32 to vector<1x8xf32>
    %107 = arith.addf %105, %106 : vector<1x8xf32>
    %cst_68 = arith.constant 1.000000e+06 : f32
    %108 = vector.broadcast %cst_68 : f32 to vector<1x8xf32>
    %109 = arith.addf %107, %108 : vector<1x8xf32>
    %cst_69 = arith.constant 1.000000e+06 : f32
    %110 = vector.broadcast %cst_69 : f32 to vector<1x8xf32>
    %111 = arith.addf %95, %110 : vector<1x8xf32>
    %112 = vector.extract_strided_slice %34 {offsets = [0, 0], sizes = [1, 8], strides = [1, 1]} : vector<8x8xf32> to vector<1x8xf32>
    %113 = arith.mulf %109, %112 : vector<1x8xf32>
    %114 = arith.addf %111, %113 : vector<1x8xf32>
    %cst_70 = arith.constant 1.000000e+06 : f32
    %115 = vector.broadcast %cst_70 : f32 to vector<1x8xf32>
    %116 = arith.addf %114, %115 : vector<1x8xf32>
    %117 = vector.extract_strided_slice %33 {offsets = [0, 0], sizes = [1, 32], strides = [1, 1]} : vector<8x32xf32> to vector<1x32xf32>
    %cst_71 = arith.constant dense<0.000000e+00> : vector<1x32xf32>
    %118 = tpu.matmul %83, %13, %cst_71 {dimension_numbers = #tpu.dot_dimension_numbers<[1], [0], [0], [1], [0, 0, 1, 1], [], []>} : vector<1x32xf32>, vector<32x32xf32>, vector<1x32xf32> -> vector<1x32xf32>
    %119 = arith.addf %117, %118 : vector<1x32xf32>
    %cst_72 = arith.constant 0.000000e+00 : f32
    %120 = vector.broadcast %cst_72 : f32 to vector<1x32xf32>
    %121 = arith.cmpf ogt, %119, %120 : vector<1x32xf32>
    %cst_73 = arith.constant 0.000000e+00 : f32
    %122 = vector.broadcast %cst_73 : f32 to vector<1x32xf32>
    %123 = arith.minimumf %119, %122 : vector<1x32xf32>
    %124 = math.exp %123 : vector<1x32xf32>
    %cst_74 = arith.constant 1.000000e+00 : f32
    %125 = vector.broadcast %cst_74 : f32 to vector<1x32xf32>
    %126 = arith.subf %124, %125 : vector<1x32xf32>
    %127 = arith.select %121, %119, %126 : vector<1x32xi1>, vector<1x32xf32>
    %cst_75 = arith.constant dense<0.000000e+00> : vector<1x8xf32>
    %128 = tpu.matmul %127, %16, %cst_75 {dimension_numbers = #tpu.dot_dimension_numbers<[1], [0], [0], [1], [0, 0, 1, 1], [], []>} : vector<1x32xf32>, vector<32x8xf32>, vector<1x8xf32> -> vector<1x8xf32>
    %129 = arith.addf %128, %20 : vector<1x8xf32>
    %cst_76 = arith.constant dense<0.000000e+00> : vector<1x8xf32>
    %130 = tpu.matmul %127, %17, %cst_76 {dimension_numbers = #tpu.dot_dimension_numbers<[1], [0], [0], [1], [0, 0, 1, 1], [], []>} : vector<1x32xf32>, vector<32x8xf32>, vector<1x8xf32> -> vector<1x8xf32>
    %131 = arith.addf %130, %21 : vector<1x8xf32>
    %cst_77 = arith.constant 0.000000e+00 : f32
    %132 = vector.broadcast %cst_77 : f32 to vector<1x8xf32>
    %133 = arith.maximumf %131, %132 : vector<1x8xf32>
    %134 = math.absf %131 : vector<1x8xf32>
    %cst_78 = arith.constant 0.000000e+00 : f32
    %135 = vector.broadcast %cst_78 : f32 to vector<1x8xf32>
    %136 = arith.subf %135, %134 : vector<1x8xf32>
    %137 = math.exp %136 : vector<1x8xf32>
    %138 = math.log1p %137 : vector<1x8xf32>
    %139 = arith.addf %133, %138 : vector<1x8xf32>
    %cst_79 = arith.constant 1.000000e-01 : f32
    %140 = vector.broadcast %cst_79 : f32 to vector<1x8xf32>
    %141 = arith.addf %139, %140 : vector<1x8xf32>
    %142 = vector.extract_strided_slice %35 {offsets = [0, 0], sizes = [1, 8], strides = [1, 1]} : vector<8x8xf32> to vector<1x8xf32>
    %143 = arith.mulf %141, %142 : vector<1x8xf32>
    %144 = arith.addf %129, %143 : vector<1x8xf32>
    %145 = tpu.concatenate %95, %109, %116, %129, %141, %144, %83, %38 in 1 : vector<1x8xf32>, vector<1x8xf32>, vector<1x8xf32>, vector<1x8xf32>, vector<1x8xf32>, vector<1x8xf32>, vector<1x32xf32>, vector<1x48xf32> -> vector<1x128xf32>
    %146 = vector.extract_strided_slice %27 {offsets = [1, 0], sizes = [1, 32], strides = [1, 1]} : vector<8x32xf32> to vector<1x32xf32>
    %cst_80 = arith.constant dense<0.000000e+00> : vector<1x32xf32>
    %147 = tpu.matmul %144, %0, %cst_80 {dimension_numbers = #tpu.dot_dimension_numbers<[1], [0], [0], [1], [0, 0, 1, 1], [], []>} : vector<1x8xf32>, vector<8x32xf32>, vector<1x32xf32> -> vector<1x32xf32>
    %148 = arith.addf %146, %147 : vector<1x32xf32>
    %cst_81 = arith.constant 0.000000e+00 : f32
    %149 = vector.broadcast %cst_81 : f32 to vector<1x32xf32>
    %150 = arith.cmpf ogt, %148, %149 : vector<1x32xf32>
    %cst_82 = arith.constant 0.000000e+00 : f32
    %151 = vector.broadcast %cst_82 : f32 to vector<1x32xf32>
    %152 = arith.minimumf %148, %151 : vector<1x32xf32>
    %153 = math.exp %152 : vector<1x32xf32>
    %cst_83 = arith.constant 1.000000e+00 : f32
    %154 = vector.broadcast %cst_83 : f32 to vector<1x32xf32>
    %155 = arith.subf %153, %154 : vector<1x32xf32>
    %156 = arith.select %150, %148, %155 : vector<1x32xi1>, vector<1x32xf32>
    %cst_84 = arith.constant dense<0.000000e+00> : vector<1x32xf32>
    %157 = tpu.matmul %156, %1, %cst_84 {dimension_numbers = #tpu.dot_dimension_numbers<[1], [0], [0], [1], [0, 0, 1, 1], [], []>} : vector<1x32xf32>, vector<32x32xf32>, vector<1x32xf32> -> vector<1x32xf32>
    %cst_85 = arith.constant dense<0.000000e+00> : vector<1x32xf32>
    %158 = tpu.matmul %83, %4, %cst_85 {dimension_numbers = #tpu.dot_dimension_numbers<[1], [0], [0], [1], [0, 0, 1, 1], [], []>} : vector<1x32xf32>, vector<32x32xf32>, vector<1x32xf32> -> vector<1x32xf32>
    %159 = arith.addf %157, %158 : vector<1x32xf32>
    %160 = arith.addf %159, %7 : vector<1x32xf32>
    %cst_86 = arith.constant 0.000000e+00 : f32
    %161 = vector.broadcast %cst_86 : f32 to vector<1x32xf32>
    %162 = arith.subf %161, %160 : vector<1x32xf32>
    %163 = math.exp %162 : vector<1x32xf32>
    %cst_87 = arith.constant 1.000000e+00 : f32
    %164 = vector.broadcast %cst_87 : f32 to vector<1x32xf32>
    %165 = arith.addf %164, %163 : vector<1x32xf32>
    %cst_88 = arith.constant 1.000000e+00 : f32
    %166 = vector.broadcast %cst_88 : f32 to vector<1x32xf32>
    %167 = arith.divf %166, %165 : vector<1x32xf32>
    %cst_89 = arith.constant dense<0.000000e+00> : vector<1x32xf32>
    %168 = tpu.matmul %156, %2, %cst_89 {dimension_numbers = #tpu.dot_dimension_numbers<[1], [0], [0], [1], [0, 0, 1, 1], [], []>} : vector<1x32xf32>, vector<32x32xf32>, vector<1x32xf32> -> vector<1x32xf32>
    %cst_90 = arith.constant dense<0.000000e+00> : vector<1x32xf32>
    %169 = tpu.matmul %83, %5, %cst_90 {dimension_numbers = #tpu.dot_dimension_numbers<[1], [0], [0], [1], [0, 0, 1, 1], [], []>} : vector<1x32xf32>, vector<32x32xf32>, vector<1x32xf32> -> vector<1x32xf32>
    %170 = arith.addf %168, %169 : vector<1x32xf32>
    %171 = arith.addf %170, %8 : vector<1x32xf32>
    %cst_91 = arith.constant 0.000000e+00 : f32
    %172 = vector.broadcast %cst_91 : f32 to vector<1x32xf32>
    %173 = arith.subf %172, %171 : vector<1x32xf32>
    %174 = math.exp %173 : vector<1x32xf32>
    %cst_92 = arith.constant 1.000000e+00 : f32
    %175 = vector.broadcast %cst_92 : f32 to vector<1x32xf32>
    %176 = arith.addf %175, %174 : vector<1x32xf32>
    %cst_93 = arith.constant 1.000000e+00 : f32
    %177 = vector.broadcast %cst_93 : f32 to vector<1x32xf32>
    %178 = arith.divf %177, %176 : vector<1x32xf32>
    %cst_94 = arith.constant dense<0.000000e+00> : vector<1x32xf32>
    %179 = tpu.matmul %156, %3, %cst_94 {dimension_numbers = #tpu.dot_dimension_numbers<[1], [0], [0], [1], [0, 0, 1, 1], [], []>} : vector<1x32xf32>, vector<32x32xf32>, vector<1x32xf32> -> vector<1x32xf32>
    %180 = arith.addf %179, %9 : vector<1x32xf32>
    %cst_95 = arith.constant dense<0.000000e+00> : vector<1x32xf32>
    %181 = tpu.matmul %83, %6, %cst_95 {dimension_numbers = #tpu.dot_dimension_numbers<[1], [0], [0], [1], [0, 0, 1, 1], [], []>} : vector<1x32xf32>, vector<32x32xf32>, vector<1x32xf32> -> vector<1x32xf32>
    %182 = arith.addf %181, %10 : vector<1x32xf32>
    %183 = arith.mulf %167, %182 : vector<1x32xf32>
    %184 = arith.addf %180, %183 : vector<1x32xf32>
    %185 = math.tanh %184 : vector<1x32xf32>
    %cst_96 = arith.constant 1.000000e+00 : f32
    %186 = vector.broadcast %cst_96 : f32 to vector<1x32xf32>
    %187 = arith.subf %186, %178 : vector<1x32xf32>
    %188 = arith.mulf %187, %185 : vector<1x32xf32>
    %189 = arith.mulf %178, %83 : vector<1x32xf32>
    %190 = arith.addf %188, %189 : vector<1x32xf32>
    %cst_97 = arith.constant dense<0.000000e+00> : vector<1x32xf32>
    %191 = tpu.matmul %190, %11, %cst_97 {dimension_numbers = #tpu.dot_dimension_numbers<[1], [0], [0], [1], [0, 0, 1, 1], [], []>} : vector<1x32xf32>, vector<32x32xf32>, vector<1x32xf32> -> vector<1x32xf32>
    %192 = arith.addf %191, %12 : vector<1x32xf32>
    %cst_98 = arith.constant 0.000000e+00 : f32
    %193 = vector.broadcast %cst_98 : f32 to vector<1x32xf32>
    %194 = arith.cmpf ogt, %192, %193 : vector<1x32xf32>
    %cst_99 = arith.constant 0.000000e+00 : f32
    %195 = vector.broadcast %cst_99 : f32 to vector<1x32xf32>
    %196 = arith.minimumf %192, %195 : vector<1x32xf32>
    %197 = math.exp %196 : vector<1x32xf32>
    %cst_100 = arith.constant 1.000000e+00 : f32
    %198 = vector.broadcast %cst_100 : f32 to vector<1x32xf32>
    %199 = arith.subf %197, %198 : vector<1x32xf32>
    %200 = arith.select %194, %192, %199 : vector<1x32xi1>, vector<1x32xf32>
    %cst_101 = arith.constant dense<0.000000e+00> : vector<1x8xf32>
    %201 = tpu.matmul %200, %14, %cst_101 {dimension_numbers = #tpu.dot_dimension_numbers<[1], [0], [0], [1], [0, 0, 1, 1], [], []>} : vector<1x32xf32>, vector<32x8xf32>, vector<1x8xf32> -> vector<1x8xf32>
    %202 = arith.addf %201, %18 : vector<1x8xf32>
    %cst_102 = arith.constant dense<0.000000e+00> : vector<1x8xf32>
    %203 = tpu.matmul %200, %15, %cst_102 {dimension_numbers = #tpu.dot_dimension_numbers<[1], [0], [0], [1], [0, 0, 1, 1], [], []>} : vector<1x32xf32>, vector<32x8xf32>, vector<1x8xf32> -> vector<1x8xf32>
    %204 = arith.addf %203, %19 : vector<1x8xf32>
    %cst_103 = arith.constant 0.000000e+00 : f32
    %205 = vector.broadcast %cst_103 : f32 to vector<1x8xf32>
    %206 = arith.maximumf %204, %205 : vector<1x8xf32>
    %207 = math.absf %204 : vector<1x8xf32>
    %cst_104 = arith.constant 0.000000e+00 : f32
    %208 = vector.broadcast %cst_104 : f32 to vector<1x8xf32>
    %209 = arith.subf %208, %207 : vector<1x8xf32>
    %210 = math.exp %209 : vector<1x8xf32>
    %211 = math.log1p %210 : vector<1x8xf32>
    %212 = arith.addf %206, %211 : vector<1x8xf32>
    %cst_105 = arith.constant 1.000000e-01 : f32
    %213 = vector.broadcast %cst_105 : f32 to vector<1x8xf32>
    %214 = arith.addf %212, %213 : vector<1x8xf32>
    %cst_106 = arith.constant 1.000000e+06 : f32
    %215 = vector.broadcast %cst_106 : f32 to vector<1x8xf32>
    %216 = arith.addf %214, %215 : vector<1x8xf32>
    %cst_107 = arith.constant 1.000000e+06 : f32
    %217 = vector.broadcast %cst_107 : f32 to vector<1x8xf32>
    %218 = arith.addf %202, %217 : vector<1x8xf32>
    %219 = vector.extract_strided_slice %34 {offsets = [1, 0], sizes = [1, 8], strides = [1, 1]} : vector<8x8xf32> to vector<1x8xf32>
    %220 = arith.mulf %216, %219 : vector<1x8xf32>
    %221 = arith.addf %218, %220 : vector<1x8xf32>
    %cst_108 = arith.constant 1.000000e+06 : f32
    %222 = vector.broadcast %cst_108 : f32 to vector<1x8xf32>
    %223 = arith.addf %221, %222 : vector<1x8xf32>
    %224 = vector.extract_strided_slice %33 {offsets = [1, 0], sizes = [1, 32], strides = [1, 1]} : vector<8x32xf32> to vector<1x32xf32>
    %cst_109 = arith.constant dense<0.000000e+00> : vector<1x32xf32>
    %225 = tpu.matmul %190, %13, %cst_109 {dimension_numbers = #tpu.dot_dimension_numbers<[1], [0], [0], [1], [0, 0, 1, 1], [], []>} : vector<1x32xf32>, vector<32x32xf32>, vector<1x32xf32> -> vector<1x32xf32>
    %226 = arith.addf %224, %225 : vector<1x32xf32>
    %cst_110 = arith.constant 0.000000e+00 : f32
    %227 = vector.broadcast %cst_110 : f32 to vector<1x32xf32>
    %228 = arith.cmpf ogt, %226, %227 : vector<1x32xf32>
    %cst_111 = arith.constant 0.000000e+00 : f32
    %229 = vector.broadcast %cst_111 : f32 to vector<1x32xf32>
    %230 = arith.minimumf %226, %229 : vector<1x32xf32>
    %231 = math.exp %230 : vector<1x32xf32>
    %cst_112 = arith.constant 1.000000e+00 : f32
    %232 = vector.broadcast %cst_112 : f32 to vector<1x32xf32>
    %233 = arith.subf %231, %232 : vector<1x32xf32>
    %234 = arith.select %228, %226, %233 : vector<1x32xi1>, vector<1x32xf32>
    %cst_113 = arith.constant dense<0.000000e+00> : vector<1x8xf32>
    %235 = tpu.matmul %234, %16, %cst_113 {dimension_numbers = #tpu.dot_dimension_numbers<[1], [0], [0], [1], [0, 0, 1, 1], [], []>} : vector<1x32xf32>, vector<32x8xf32>, vector<1x8xf32> -> vector<1x8xf32>
    %236 = arith.addf %235, %20 : vector<1x8xf32>
    %cst_114 = arith.constant dense<0.000000e+00> : vector<1x8xf32>
    %237 = tpu.matmul %234, %17, %cst_114 {dimension_numbers = #tpu.dot_dimension_numbers<[1], [0], [0], [1], [0, 0, 1, 1], [], []>} : vector<1x32xf32>, vector<32x8xf32>, vector<1x8xf32> -> vector<1x8xf32>
    %238 = arith.addf %237, %21 : vector<1x8xf32>
    %cst_115 = arith.constant 0.000000e+00 : f32
    %239 = vector.broadcast %cst_115 : f32 to vector<1x8xf32>
    %240 = arith.maximumf %238, %239 : vector<1x8xf32>
    %241 = math.absf %238 : vector<1x8xf32>
    %cst_116 = arith.constant 0.000000e+00 : f32
    %242 = vector.broadcast %cst_116 : f32 to vector<1x8xf32>
    %243 = arith.subf %242, %241 : vector<1x8xf32>
    %244 = math.exp %243 : vector<1x8xf32>
    %245 = math.log1p %244 : vector<1x8xf32>
    %246 = arith.addf %240, %245 : vector<1x8xf32>
    %cst_117 = arith.constant 1.000000e-01 : f32
    %247 = vector.broadcast %cst_117 : f32 to vector<1x8xf32>
    %248 = arith.addf %246, %247 : vector<1x8xf32>
    %249 = vector.extract_strided_slice %35 {offsets = [1, 0], sizes = [1, 8], strides = [1, 1]} : vector<8x8xf32> to vector<1x8xf32>
    %250 = arith.mulf %248, %249 : vector<1x8xf32>
    %251 = arith.addf %236, %250 : vector<1x8xf32>
    %252 = tpu.concatenate %202, %216, %223, %236, %248, %251, %190, %38 in 1 : vector<1x8xf32>, vector<1x8xf32>, vector<1x8xf32>, vector<1x8xf32>, vector<1x8xf32>, vector<1x8xf32>, vector<1x32xf32>, vector<1x48xf32> -> vector<1x128xf32>
    %253 = vector.extract_strided_slice %27 {offsets = [2, 0], sizes = [1, 32], strides = [1, 1]} : vector<8x32xf32> to vector<1x32xf32>
    %cst_118 = arith.constant dense<0.000000e+00> : vector<1x32xf32>
    %254 = tpu.matmul %251, %0, %cst_118 {dimension_numbers = #tpu.dot_dimension_numbers<[1], [0], [0], [1], [0, 0, 1, 1], [], []>} : vector<1x8xf32>, vector<8x32xf32>, vector<1x32xf32> -> vector<1x32xf32>
    %255 = arith.addf %253, %254 : vector<1x32xf32>
    %cst_119 = arith.constant 0.000000e+00 : f32
    %256 = vector.broadcast %cst_119 : f32 to vector<1x32xf32>
    %257 = arith.cmpf ogt, %255, %256 : vector<1x32xf32>
    %cst_120 = arith.constant 0.000000e+00 : f32
    %258 = vector.broadcast %cst_120 : f32 to vector<1x32xf32>
    %259 = arith.minimumf %255, %258 : vector<1x32xf32>
    %260 = math.exp %259 : vector<1x32xf32>
    %cst_121 = arith.constant 1.000000e+00 : f32
    %261 = vector.broadcast %cst_121 : f32 to vector<1x32xf32>
    %262 = arith.subf %260, %261 : vector<1x32xf32>
    %263 = arith.select %257, %255, %262 : vector<1x32xi1>, vector<1x32xf32>
    %cst_122 = arith.constant dense<0.000000e+00> : vector<1x32xf32>
    %264 = tpu.matmul %263, %1, %cst_122 {dimension_numbers = #tpu.dot_dimension_numbers<[1], [0], [0], [1], [0, 0, 1, 1], [], []>} : vector<1x32xf32>, vector<32x32xf32>, vector<1x32xf32> -> vector<1x32xf32>
    %cst_123 = arith.constant dense<0.000000e+00> : vector<1x32xf32>
    %265 = tpu.matmul %190, %4, %cst_123 {dimension_numbers = #tpu.dot_dimension_numbers<[1], [0], [0], [1], [0, 0, 1, 1], [], []>} : vector<1x32xf32>, vector<32x32xf32>, vector<1x32xf32> -> vector<1x32xf32>
    %266 = arith.addf %264, %265 : vector<1x32xf32>
    %267 = arith.addf %266, %7 : vector<1x32xf32>
    %cst_124 = arith.constant 0.000000e+00 : f32
    %268 = vector.broadcast %cst_124 : f32 to vector<1x32xf32>
    %269 = arith.subf %268, %267 : vector<1x32xf32>
    %270 = math.exp %269 : vector<1x32xf32>
    %cst_125 = arith.constant 1.000000e+00 : f32
    %271 = vector.broadcast %cst_125 : f32 to vector<1x32xf32>
    %272 = arith.addf %271, %270 : vector<1x32xf32>
    %cst_126 = arith.constant 1.000000e+00 : f32
    %273 = vector.broadcast %cst_126 : f32 to vector<1x32xf32>
    %274 = arith.divf %273, %272 : vector<1x32xf32>
    %cst_127 = arith.constant dense<0.000000e+00> : vector<1x32xf32>
    %275 = tpu.matmul %263, %2, %cst_127 {dimension_numbers = #tpu.dot_dimension_numbers<[1], [0], [0], [1], [0, 0, 1, 1], [], []>} : vector<1x32xf32>, vector<32x32xf32>, vector<1x32xf32> -> vector<1x32xf32>
    %cst_128 = arith.constant dense<0.000000e+00> : vector<1x32xf32>
    %276 = tpu.matmul %190, %5, %cst_128 {dimension_numbers = #tpu.dot_dimension_numbers<[1], [0], [0], [1], [0, 0, 1, 1], [], []>} : vector<1x32xf32>, vector<32x32xf32>, vector<1x32xf32> -> vector<1x32xf32>
    %277 = arith.addf %275, %276 : vector<1x32xf32>
    %278 = arith.addf %277, %8 : vector<1x32xf32>
    %cst_129 = arith.constant 0.000000e+00 : f32
    %279 = vector.broadcast %cst_129 : f32 to vector<1x32xf32>
    %280 = arith.subf %279, %278 : vector<1x32xf32>
    %281 = math.exp %280 : vector<1x32xf32>
    %cst_130 = arith.constant 1.000000e+00 : f32
    %282 = vector.broadcast %cst_130 : f32 to vector<1x32xf32>
    %283 = arith.addf %282, %281 : vector<1x32xf32>
    %cst_131 = arith.constant 1.000000e+00 : f32
    %284 = vector.broadcast %cst_131 : f32 to vector<1x32xf32>
    %285 = arith.divf %284, %283 : vector<1x32xf32>
    %cst_132 = arith.constant dense<0.000000e+00> : vector<1x32xf32>
    %286 = tpu.matmul %263, %3, %cst_132 {dimension_numbers = #tpu.dot_dimension_numbers<[1], [0], [0], [1], [0, 0, 1, 1], [], []>} : vector<1x32xf32>, vector<32x32xf32>, vector<1x32xf32> -> vector<1x32xf32>
    %287 = arith.addf %286, %9 : vector<1x32xf32>
    %cst_133 = arith.constant dense<0.000000e+00> : vector<1x32xf32>
    %288 = tpu.matmul %190, %6, %cst_133 {dimension_numbers = #tpu.dot_dimension_numbers<[1], [0], [0], [1], [0, 0, 1, 1], [], []>} : vector<1x32xf32>, vector<32x32xf32>, vector<1x32xf32> -> vector<1x32xf32>
    %289 = arith.addf %288, %10 : vector<1x32xf32>
    %290 = arith.mulf %274, %289 : vector<1x32xf32>
    %291 = arith.addf %287, %290 : vector<1x32xf32>
    %292 = math.tanh %291 : vector<1x32xf32>
    %cst_134 = arith.constant 1.000000e+00 : f32
    %293 = vector.broadcast %cst_134 : f32 to vector<1x32xf32>
    %294 = arith.subf %293, %285 : vector<1x32xf32>
    %295 = arith.mulf %294, %292 : vector<1x32xf32>
    %296 = arith.mulf %285, %190 : vector<1x32xf32>
    %297 = arith.addf %295, %296 : vector<1x32xf32>
    %cst_135 = arith.constant dense<0.000000e+00> : vector<1x32xf32>
    %298 = tpu.matmul %297, %11, %cst_135 {dimension_numbers = #tpu.dot_dimension_numbers<[1], [0], [0], [1], [0, 0, 1, 1], [], []>} : vector<1x32xf32>, vector<32x32xf32>, vector<1x32xf32> -> vector<1x32xf32>
    %299 = arith.addf %298, %12 : vector<1x32xf32>
    %cst_136 = arith.constant 0.000000e+00 : f32
    %300 = vector.broadcast %cst_136 : f32 to vector<1x32xf32>
    %301 = arith.cmpf ogt, %299, %300 : vector<1x32xf32>
    %cst_137 = arith.constant 0.000000e+00 : f32
    %302 = vector.broadcast %cst_137 : f32 to vector<1x32xf32>
    %303 = arith.minimumf %299, %302 : vector<1x32xf32>
    %304 = math.exp %303 : vector<1x32xf32>
    %cst_138 = arith.constant 1.000000e+00 : f32
    %305 = vector.broadcast %cst_138 : f32 to vector<1x32xf32>
    %306 = arith.subf %304, %305 : vector<1x32xf32>
    %307 = arith.select %301, %299, %306 : vector<1x32xi1>, vector<1x32xf32>
    %cst_139 = arith.constant dense<0.000000e+00> : vector<1x8xf32>
    %308 = tpu.matmul %307, %14, %cst_139 {dimension_numbers = #tpu.dot_dimension_numbers<[1], [0], [0], [1], [0, 0, 1, 1], [], []>} : vector<1x32xf32>, vector<32x8xf32>, vector<1x8xf32> -> vector<1x8xf32>
    %309 = arith.addf %308, %18 : vector<1x8xf32>
    %cst_140 = arith.constant dense<0.000000e+00> : vector<1x8xf32>
    %310 = tpu.matmul %307, %15, %cst_140 {dimension_numbers = #tpu.dot_dimension_numbers<[1], [0], [0], [1], [0, 0, 1, 1], [], []>} : vector<1x32xf32>, vector<32x8xf32>, vector<1x8xf32> -> vector<1x8xf32>
    %311 = arith.addf %310, %19 : vector<1x8xf32>
    %cst_141 = arith.constant 0.000000e+00 : f32
    %312 = vector.broadcast %cst_141 : f32 to vector<1x8xf32>
    %313 = arith.maximumf %311, %312 : vector<1x8xf32>
    %314 = math.absf %311 : vector<1x8xf32>
    %cst_142 = arith.constant 0.000000e+00 : f32
    %315 = vector.broadcast %cst_142 : f32 to vector<1x8xf32>
    %316 = arith.subf %315, %314 : vector<1x8xf32>
    %317 = math.exp %316 : vector<1x8xf32>
    %318 = math.log1p %317 : vector<1x8xf32>
    %319 = arith.addf %313, %318 : vector<1x8xf32>
    %cst_143 = arith.constant 1.000000e-01 : f32
    %320 = vector.broadcast %cst_143 : f32 to vector<1x8xf32>
    %321 = arith.addf %319, %320 : vector<1x8xf32>
    %cst_144 = arith.constant 1.000000e+06 : f32
    %322 = vector.broadcast %cst_144 : f32 to vector<1x8xf32>
    %323 = arith.addf %321, %322 : vector<1x8xf32>
    %cst_145 = arith.constant 1.000000e+06 : f32
    %324 = vector.broadcast %cst_145 : f32 to vector<1x8xf32>
    %325 = arith.addf %309, %324 : vector<1x8xf32>
    %326 = vector.extract_strided_slice %34 {offsets = [2, 0], sizes = [1, 8], strides = [1, 1]} : vector<8x8xf32> to vector<1x8xf32>
    %327 = arith.mulf %323, %326 : vector<1x8xf32>
    %328 = arith.addf %325, %327 : vector<1x8xf32>
    %cst_146 = arith.constant 1.000000e+06 : f32
    %329 = vector.broadcast %cst_146 : f32 to vector<1x8xf32>
    %330 = arith.addf %328, %329 : vector<1x8xf32>
    %331 = vector.extract_strided_slice %33 {offsets = [2, 0], sizes = [1, 32], strides = [1, 1]} : vector<8x32xf32> to vector<1x32xf32>
    %cst_147 = arith.constant dense<0.000000e+00> : vector<1x32xf32>
    %332 = tpu.matmul %297, %13, %cst_147 {dimension_numbers = #tpu.dot_dimension_numbers<[1], [0], [0], [1], [0, 0, 1, 1], [], []>} : vector<1x32xf32>, vector<32x32xf32>, vector<1x32xf32> -> vector<1x32xf32>
    %333 = arith.addf %331, %332 : vector<1x32xf32>
    %cst_148 = arith.constant 0.000000e+00 : f32
    %334 = vector.broadcast %cst_148 : f32 to vector<1x32xf32>
    %335 = arith.cmpf ogt, %333, %334 : vector<1x32xf32>
    %cst_149 = arith.constant 0.000000e+00 : f32
    %336 = vector.broadcast %cst_149 : f32 to vector<1x32xf32>
    %337 = arith.minimumf %333, %336 : vector<1x32xf32>
    %338 = math.exp %337 : vector<1x32xf32>
    %cst_150 = arith.constant 1.000000e+00 : f32
    %339 = vector.broadcast %cst_150 : f32 to vector<1x32xf32>
    %340 = arith.subf %338, %339 : vector<1x32xf32>
    %341 = arith.select %335, %333, %340 : vector<1x32xi1>, vector<1x32xf32>
    %cst_151 = arith.constant dense<0.000000e+00> : vector<1x8xf32>
    %342 = tpu.matmul %341, %16, %cst_151 {dimension_numbers = #tpu.dot_dimension_numbers<[1], [0], [0], [1], [0, 0, 1, 1], [], []>} : vector<1x32xf32>, vector<32x8xf32>, vector<1x8xf32> -> vector<1x8xf32>
    %343 = arith.addf %342, %20 : vector<1x8xf32>
    %cst_152 = arith.constant dense<0.000000e+00> : vector<1x8xf32>
    %344 = tpu.matmul %341, %17, %cst_152 {dimension_numbers = #tpu.dot_dimension_numbers<[1], [0], [0], [1], [0, 0, 1, 1], [], []>} : vector<1x32xf32>, vector<32x8xf32>, vector<1x8xf32> -> vector<1x8xf32>
    %345 = arith.addf %344, %21 : vector<1x8xf32>
    %cst_153 = arith.constant 0.000000e+00 : f32
    %346 = vector.broadcast %cst_153 : f32 to vector<1x8xf32>
    %347 = arith.maximumf %345, %346 : vector<1x8xf32>
    %348 = math.absf %345 : vector<1x8xf32>
    %cst_154 = arith.constant 0.000000e+00 : f32
    %349 = vector.broadcast %cst_154 : f32 to vector<1x8xf32>
    %350 = arith.subf %349, %348 : vector<1x8xf32>
    %351 = math.exp %350 : vector<1x8xf32>
    %352 = math.log1p %351 : vector<1x8xf32>
    %353 = arith.addf %347, %352 : vector<1x8xf32>
    %cst_155 = arith.constant 1.000000e-01 : f32
    %354 = vector.broadcast %cst_155 : f32 to vector<1x8xf32>
    %355 = arith.addf %353, %354 : vector<1x8xf32>
    %356 = vector.extract_strided_slice %35 {offsets = [2, 0], sizes = [1, 8], strides = [1, 1]} : vector<8x8xf32> to vector<1x8xf32>
    %357 = arith.mulf %355, %356 : vector<1x8xf32>
    %358 = arith.addf %343, %357 : vector<1x8xf32>
    %359 = tpu.concatenate %309, %323, %330, %343, %355, %358, %297, %38 in 1 : vector<1x8xf32>, vector<1x8xf32>, vector<1x8xf32>, vector<1x8xf32>, vector<1x8xf32>, vector<1x8xf32>, vector<1x32xf32>, vector<1x48xf32> -> vector<1x128xf32>
    %360 = vector.extract_strided_slice %27 {offsets = [3, 0], sizes = [1, 32], strides = [1, 1]} : vector<8x32xf32> to vector<1x32xf32>
    %cst_156 = arith.constant dense<0.000000e+00> : vector<1x32xf32>
    %361 = tpu.matmul %358, %0, %cst_156 {dimension_numbers = #tpu.dot_dimension_numbers<[1], [0], [0], [1], [0, 0, 1, 1], [], []>} : vector<1x8xf32>, vector<8x32xf32>, vector<1x32xf32> -> vector<1x32xf32>
    %362 = arith.addf %360, %361 : vector<1x32xf32>
    %cst_157 = arith.constant 0.000000e+00 : f32
    %363 = vector.broadcast %cst_157 : f32 to vector<1x32xf32>
    %364 = arith.cmpf ogt, %362, %363 : vector<1x32xf32>
    %cst_158 = arith.constant 0.000000e+00 : f32
    %365 = vector.broadcast %cst_158 : f32 to vector<1x32xf32>
    %366 = arith.minimumf %362, %365 : vector<1x32xf32>
    %367 = math.exp %366 : vector<1x32xf32>
    %cst_159 = arith.constant 1.000000e+00 : f32
    %368 = vector.broadcast %cst_159 : f32 to vector<1x32xf32>
    %369 = arith.subf %367, %368 : vector<1x32xf32>
    %370 = arith.select %364, %362, %369 : vector<1x32xi1>, vector<1x32xf32>
    %cst_160 = arith.constant dense<0.000000e+00> : vector<1x32xf32>
    %371 = tpu.matmul %370, %1, %cst_160 {dimension_numbers = #tpu.dot_dimension_numbers<[1], [0], [0], [1], [0, 0, 1, 1], [], []>} : vector<1x32xf32>, vector<32x32xf32>, vector<1x32xf32> -> vector<1x32xf32>
    %cst_161 = arith.constant dense<0.000000e+00> : vector<1x32xf32>
    %372 = tpu.matmul %297, %4, %cst_161 {dimension_numbers = #tpu.dot_dimension_numbers<[1], [0], [0], [1], [0, 0, 1, 1], [], []>} : vector<1x32xf32>, vector<32x32xf32>, vector<1x32xf32> -> vector<1x32xf32>
    %373 = arith.addf %371, %372 : vector<1x32xf32>
    %374 = arith.addf %373, %7 : vector<1x32xf32>
    %cst_162 = arith.constant 0.000000e+00 : f32
    %375 = vector.broadcast %cst_162 : f32 to vector<1x32xf32>
    %376 = arith.subf %375, %374 : vector<1x32xf32>
    %377 = math.exp %376 : vector<1x32xf32>
    %cst_163 = arith.constant 1.000000e+00 : f32
    %378 = vector.broadcast %cst_163 : f32 to vector<1x32xf32>
    %379 = arith.addf %378, %377 : vector<1x32xf32>
    %cst_164 = arith.constant 1.000000e+00 : f32
    %380 = vector.broadcast %cst_164 : f32 to vector<1x32xf32>
    %381 = arith.divf %380, %379 : vector<1x32xf32>
    %cst_165 = arith.constant dense<0.000000e+00> : vector<1x32xf32>
    %382 = tpu.matmul %370, %2, %cst_165 {dimension_numbers = #tpu.dot_dimension_numbers<[1], [0], [0], [1], [0, 0, 1, 1], [], []>} : vector<1x32xf32>, vector<32x32xf32>, vector<1x32xf32> -> vector<1x32xf32>
    %cst_166 = arith.constant dense<0.000000e+00> : vector<1x32xf32>
    %383 = tpu.matmul %297, %5, %cst_166 {dimension_numbers = #tpu.dot_dimension_numbers<[1], [0], [0], [1], [0, 0, 1, 1], [], []>} : vector<1x32xf32>, vector<32x32xf32>, vector<1x32xf32> -> vector<1x32xf32>
    %384 = arith.addf %382, %383 : vector<1x32xf32>
    %385 = arith.addf %384, %8 : vector<1x32xf32>
    %cst_167 = arith.constant 0.000000e+00 : f32
    %386 = vector.broadcast %cst_167 : f32 to vector<1x32xf32>
    %387 = arith.subf %386, %385 : vector<1x32xf32>
    %388 = math.exp %387 : vector<1x32xf32>
    %cst_168 = arith.constant 1.000000e+00 : f32
    %389 = vector.broadcast %cst_168 : f32 to vector<1x32xf32>
    %390 = arith.addf %389, %388 : vector<1x32xf32>
    %cst_169 = arith.constant 1.000000e+00 : f32
    %391 = vector.broadcast %cst_169 : f32 to vector<1x32xf32>
    %392 = arith.divf %391, %390 : vector<1x32xf32>
    %cst_170 = arith.constant dense<0.000000e+00> : vector<1x32xf32>
    %393 = tpu.matmul %370, %3, %cst_170 {dimension_numbers = #tpu.dot_dimension_numbers<[1], [0], [0], [1], [0, 0, 1, 1], [], []>} : vector<1x32xf32>, vector<32x32xf32>, vector<1x32xf32> -> vector<1x32xf32>
    %394 = arith.addf %393, %9 : vector<1x32xf32>
    %cst_171 = arith.constant dense<0.000000e+00> : vector<1x32xf32>
    %395 = tpu.matmul %297, %6, %cst_171 {dimension_numbers = #tpu.dot_dimension_numbers<[1], [0], [0], [1], [0, 0, 1, 1], [], []>} : vector<1x32xf32>, vector<32x32xf32>, vector<1x32xf32> -> vector<1x32xf32>
    %396 = arith.addf %395, %10 : vector<1x32xf32>
    %397 = arith.mulf %381, %396 : vector<1x32xf32>
    %398 = arith.addf %394, %397 : vector<1x32xf32>
    %399 = math.tanh %398 : vector<1x32xf32>
    %cst_172 = arith.constant 1.000000e+00 : f32
    %400 = vector.broadcast %cst_172 : f32 to vector<1x32xf32>
    %401 = arith.subf %400, %392 : vector<1x32xf32>
    %402 = arith.mulf %401, %399 : vector<1x32xf32>
    %403 = arith.mulf %392, %297 : vector<1x32xf32>
    %404 = arith.addf %402, %403 : vector<1x32xf32>
    %cst_173 = arith.constant dense<0.000000e+00> : vector<1x32xf32>
    %405 = tpu.matmul %404, %11, %cst_173 {dimension_numbers = #tpu.dot_dimension_numbers<[1], [0], [0], [1], [0, 0, 1, 1], [], []>} : vector<1x32xf32>, vector<32x32xf32>, vector<1x32xf32> -> vector<1x32xf32>
    %406 = arith.addf %405, %12 : vector<1x32xf32>
    %cst_174 = arith.constant 0.000000e+00 : f32
    %407 = vector.broadcast %cst_174 : f32 to vector<1x32xf32>
    %408 = arith.cmpf ogt, %406, %407 : vector<1x32xf32>
    %cst_175 = arith.constant 0.000000e+00 : f32
    %409 = vector.broadcast %cst_175 : f32 to vector<1x32xf32>
    %410 = arith.minimumf %406, %409 : vector<1x32xf32>
    %411 = math.exp %410 : vector<1x32xf32>
    %cst_176 = arith.constant 1.000000e+00 : f32
    %412 = vector.broadcast %cst_176 : f32 to vector<1x32xf32>
    %413 = arith.subf %411, %412 : vector<1x32xf32>
    %414 = arith.select %408, %406, %413 : vector<1x32xi1>, vector<1x32xf32>
    %cst_177 = arith.constant dense<0.000000e+00> : vector<1x8xf32>
    %415 = tpu.matmul %414, %14, %cst_177 {dimension_numbers = #tpu.dot_dimension_numbers<[1], [0], [0], [1], [0, 0, 1, 1], [], []>} : vector<1x32xf32>, vector<32x8xf32>, vector<1x8xf32> -> vector<1x8xf32>
    %416 = arith.addf %415, %18 : vector<1x8xf32>
    %cst_178 = arith.constant dense<0.000000e+00> : vector<1x8xf32>
    %417 = tpu.matmul %414, %15, %cst_178 {dimension_numbers = #tpu.dot_dimension_numbers<[1], [0], [0], [1], [0, 0, 1, 1], [], []>} : vector<1x32xf32>, vector<32x8xf32>, vector<1x8xf32> -> vector<1x8xf32>
    %418 = arith.addf %417, %19 : vector<1x8xf32>
    %cst_179 = arith.constant 0.000000e+00 : f32
    %419 = vector.broadcast %cst_179 : f32 to vector<1x8xf32>
    %420 = arith.maximumf %418, %419 : vector<1x8xf32>
    %421 = math.absf %418 : vector<1x8xf32>
    %cst_180 = arith.constant 0.000000e+00 : f32
    %422 = vector.broadcast %cst_180 : f32 to vector<1x8xf32>
    %423 = arith.subf %422, %421 : vector<1x8xf32>
    %424 = math.exp %423 : vector<1x8xf32>
    %425 = math.log1p %424 : vector<1x8xf32>
    %426 = arith.addf %420, %425 : vector<1x8xf32>
    %cst_181 = arith.constant 1.000000e-01 : f32
    %427 = vector.broadcast %cst_181 : f32 to vector<1x8xf32>
    %428 = arith.addf %426, %427 : vector<1x8xf32>
    %cst_182 = arith.constant 1.000000e+06 : f32
    %429 = vector.broadcast %cst_182 : f32 to vector<1x8xf32>
    %430 = arith.addf %428, %429 : vector<1x8xf32>
    %cst_183 = arith.constant 1.000000e+06 : f32
    %431 = vector.broadcast %cst_183 : f32 to vector<1x8xf32>
    %432 = arith.addf %416, %431 : vector<1x8xf32>
    %433 = vector.extract_strided_slice %34 {offsets = [3, 0], sizes = [1, 8], strides = [1, 1]} : vector<8x8xf32> to vector<1x8xf32>
    %434 = arith.mulf %430, %433 : vector<1x8xf32>
    %435 = arith.addf %432, %434 : vector<1x8xf32>
    %cst_184 = arith.constant 1.000000e+06 : f32
    %436 = vector.broadcast %cst_184 : f32 to vector<1x8xf32>
    %437 = arith.addf %435, %436 : vector<1x8xf32>
    %438 = vector.extract_strided_slice %33 {offsets = [3, 0], sizes = [1, 32], strides = [1, 1]} : vector<8x32xf32> to vector<1x32xf32>
    %cst_185 = arith.constant dense<0.000000e+00> : vector<1x32xf32>
    %439 = tpu.matmul %404, %13, %cst_185 {dimension_numbers = #tpu.dot_dimension_numbers<[1], [0], [0], [1], [0, 0, 1, 1], [], []>} : vector<1x32xf32>, vector<32x32xf32>, vector<1x32xf32> -> vector<1x32xf32>
    %440 = arith.addf %438, %439 : vector<1x32xf32>
    %cst_186 = arith.constant 0.000000e+00 : f32
    %441 = vector.broadcast %cst_186 : f32 to vector<1x32xf32>
    %442 = arith.cmpf ogt, %440, %441 : vector<1x32xf32>
    %cst_187 = arith.constant 0.000000e+00 : f32
    %443 = vector.broadcast %cst_187 : f32 to vector<1x32xf32>
    %444 = arith.minimumf %440, %443 : vector<1x32xf32>
    %445 = math.exp %444 : vector<1x32xf32>
    %cst_188 = arith.constant 1.000000e+00 : f32
    %446 = vector.broadcast %cst_188 : f32 to vector<1x32xf32>
    %447 = arith.subf %445, %446 : vector<1x32xf32>
    %448 = arith.select %442, %440, %447 : vector<1x32xi1>, vector<1x32xf32>
    %cst_189 = arith.constant dense<0.000000e+00> : vector<1x8xf32>
    %449 = tpu.matmul %448, %16, %cst_189 {dimension_numbers = #tpu.dot_dimension_numbers<[1], [0], [0], [1], [0, 0, 1, 1], [], []>} : vector<1x32xf32>, vector<32x8xf32>, vector<1x8xf32> -> vector<1x8xf32>
    %450 = arith.addf %449, %20 : vector<1x8xf32>
    %cst_190 = arith.constant dense<0.000000e+00> : vector<1x8xf32>
    %451 = tpu.matmul %448, %17, %cst_190 {dimension_numbers = #tpu.dot_dimension_numbers<[1], [0], [0], [1], [0, 0, 1, 1], [], []>} : vector<1x32xf32>, vector<32x8xf32>, vector<1x8xf32> -> vector<1x8xf32>
    %452 = arith.addf %451, %21 : vector<1x8xf32>
    %cst_191 = arith.constant 0.000000e+00 : f32
    %453 = vector.broadcast %cst_191 : f32 to vector<1x8xf32>
    %454 = arith.maximumf %452, %453 : vector<1x8xf32>
    %455 = math.absf %452 : vector<1x8xf32>
    %cst_192 = arith.constant 0.000000e+00 : f32
    %456 = vector.broadcast %cst_192 : f32 to vector<1x8xf32>
    %457 = arith.subf %456, %455 : vector<1x8xf32>
    %458 = math.exp %457 : vector<1x8xf32>
    %459 = math.log1p %458 : vector<1x8xf32>
    %460 = arith.addf %454, %459 : vector<1x8xf32>
    %cst_193 = arith.constant 1.000000e-01 : f32
    %461 = vector.broadcast %cst_193 : f32 to vector<1x8xf32>
    %462 = arith.addf %460, %461 : vector<1x8xf32>
    %463 = vector.extract_strided_slice %35 {offsets = [3, 0], sizes = [1, 8], strides = [1, 1]} : vector<8x8xf32> to vector<1x8xf32>
    %464 = arith.mulf %462, %463 : vector<1x8xf32>
    %465 = arith.addf %450, %464 : vector<1x8xf32>
    %466 = tpu.concatenate %416, %430, %437, %450, %462, %465, %404, %38 in 1 : vector<1x8xf32>, vector<1x8xf32>, vector<1x8xf32>, vector<1x8xf32>, vector<1x8xf32>, vector<1x8xf32>, vector<1x32xf32>, vector<1x48xf32> -> vector<1x128xf32>
    %467 = vector.extract_strided_slice %27 {offsets = [4, 0], sizes = [1, 32], strides = [1, 1]} : vector<8x32xf32> to vector<1x32xf32>
    %cst_194 = arith.constant dense<0.000000e+00> : vector<1x32xf32>
    %468 = tpu.matmul %465, %0, %cst_194 {dimension_numbers = #tpu.dot_dimension_numbers<[1], [0], [0], [1], [0, 0, 1, 1], [], []>} : vector<1x8xf32>, vector<8x32xf32>, vector<1x32xf32> -> vector<1x32xf32>
    %469 = arith.addf %467, %468 : vector<1x32xf32>
    %cst_195 = arith.constant 0.000000e+00 : f32
    %470 = vector.broadcast %cst_195 : f32 to vector<1x32xf32>
    %471 = arith.cmpf ogt, %469, %470 : vector<1x32xf32>
    %cst_196 = arith.constant 0.000000e+00 : f32
    %472 = vector.broadcast %cst_196 : f32 to vector<1x32xf32>
    %473 = arith.minimumf %469, %472 : vector<1x32xf32>
    %474 = math.exp %473 : vector<1x32xf32>
    %cst_197 = arith.constant 1.000000e+00 : f32
    %475 = vector.broadcast %cst_197 : f32 to vector<1x32xf32>
    %476 = arith.subf %474, %475 : vector<1x32xf32>
    %477 = arith.select %471, %469, %476 : vector<1x32xi1>, vector<1x32xf32>
    %cst_198 = arith.constant dense<0.000000e+00> : vector<1x32xf32>
    %478 = tpu.matmul %477, %1, %cst_198 {dimension_numbers = #tpu.dot_dimension_numbers<[1], [0], [0], [1], [0, 0, 1, 1], [], []>} : vector<1x32xf32>, vector<32x32xf32>, vector<1x32xf32> -> vector<1x32xf32>
    %cst_199 = arith.constant dense<0.000000e+00> : vector<1x32xf32>
    %479 = tpu.matmul %404, %4, %cst_199 {dimension_numbers = #tpu.dot_dimension_numbers<[1], [0], [0], [1], [0, 0, 1, 1], [], []>} : vector<1x32xf32>, vector<32x32xf32>, vector<1x32xf32> -> vector<1x32xf32>
    %480 = arith.addf %478, %479 : vector<1x32xf32>
    %481 = arith.addf %480, %7 : vector<1x32xf32>
    %cst_200 = arith.constant 0.000000e+00 : f32
    %482 = vector.broadcast %cst_200 : f32 to vector<1x32xf32>
    %483 = arith.subf %482, %481 : vector<1x32xf32>
    %484 = math.exp %483 : vector<1x32xf32>
    %cst_201 = arith.constant 1.000000e+00 : f32
    %485 = vector.broadcast %cst_201 : f32 to vector<1x32xf32>
    %486 = arith.addf %485, %484 : vector<1x32xf32>
    %cst_202 = arith.constant 1.000000e+00 : f32
    %487 = vector.broadcast %cst_202 : f32 to vector<1x32xf32>
    %488 = arith.divf %487, %486 : vector<1x32xf32>
    %cst_203 = arith.constant dense<0.000000e+00> : vector<1x32xf32>
    %489 = tpu.matmul %477, %2, %cst_203 {dimension_numbers = #tpu.dot_dimension_numbers<[1], [0], [0], [1], [0, 0, 1, 1], [], []>} : vector<1x32xf32>, vector<32x32xf32>, vector<1x32xf32> -> vector<1x32xf32>
    %cst_204 = arith.constant dense<0.000000e+00> : vector<1x32xf32>
    %490 = tpu.matmul %404, %5, %cst_204 {dimension_numbers = #tpu.dot_dimension_numbers<[1], [0], [0], [1], [0, 0, 1, 1], [], []>} : vector<1x32xf32>, vector<32x32xf32>, vector<1x32xf32> -> vector<1x32xf32>
    %491 = arith.addf %489, %490 : vector<1x32xf32>
    %492 = arith.addf %491, %8 : vector<1x32xf32>
    %cst_205 = arith.constant 0.000000e+00 : f32
    %493 = vector.broadcast %cst_205 : f32 to vector<1x32xf32>
    %494 = arith.subf %493, %492 : vector<1x32xf32>
    %495 = math.exp %494 : vector<1x32xf32>
    %cst_206 = arith.constant 1.000000e+00 : f32
    %496 = vector.broadcast %cst_206 : f32 to vector<1x32xf32>
    %497 = arith.addf %496, %495 : vector<1x32xf32>
    %cst_207 = arith.constant 1.000000e+00 : f32
    %498 = vector.broadcast %cst_207 : f32 to vector<1x32xf32>
    %499 = arith.divf %498, %497 : vector<1x32xf32>
    %cst_208 = arith.constant dense<0.000000e+00> : vector<1x32xf32>
    %500 = tpu.matmul %477, %3, %cst_208 {dimension_numbers = #tpu.dot_dimension_numbers<[1], [0], [0], [1], [0, 0, 1, 1], [], []>} : vector<1x32xf32>, vector<32x32xf32>, vector<1x32xf32> -> vector<1x32xf32>
    %501 = arith.addf %500, %9 : vector<1x32xf32>
    %cst_209 = arith.constant dense<0.000000e+00> : vector<1x32xf32>
    %502 = tpu.matmul %404, %6, %cst_209 {dimension_numbers = #tpu.dot_dimension_numbers<[1], [0], [0], [1], [0, 0, 1, 1], [], []>} : vector<1x32xf32>, vector<32x32xf32>, vector<1x32xf32> -> vector<1x32xf32>
    %503 = arith.addf %502, %10 : vector<1x32xf32>
    %504 = arith.mulf %488, %503 : vector<1x32xf32>
    %505 = arith.addf %501, %504 : vector<1x32xf32>
    %506 = math.tanh %505 : vector<1x32xf32>
    %cst_210 = arith.constant 1.000000e+00 : f32
    %507 = vector.broadcast %cst_210 : f32 to vector<1x32xf32>
    %508 = arith.subf %507, %499 : vector<1x32xf32>
    %509 = arith.mulf %508, %506 : vector<1x32xf32>
    %510 = arith.mulf %499, %404 : vector<1x32xf32>
    %511 = arith.addf %509, %510 : vector<1x32xf32>
    %cst_211 = arith.constant dense<0.000000e+00> : vector<1x32xf32>
    %512 = tpu.matmul %511, %11, %cst_211 {dimension_numbers = #tpu.dot_dimension_numbers<[1], [0], [0], [1], [0, 0, 1, 1], [], []>} : vector<1x32xf32>, vector<32x32xf32>, vector<1x32xf32> -> vector<1x32xf32>
    %513 = arith.addf %512, %12 : vector<1x32xf32>
    %cst_212 = arith.constant 0.000000e+00 : f32
    %514 = vector.broadcast %cst_212 : f32 to vector<1x32xf32>
    %515 = arith.cmpf ogt, %513, %514 : vector<1x32xf32>
    %cst_213 = arith.constant 0.000000e+00 : f32
    %516 = vector.broadcast %cst_213 : f32 to vector<1x32xf32>
    %517 = arith.minimumf %513, %516 : vector<1x32xf32>
    %518 = math.exp %517 : vector<1x32xf32>
    %cst_214 = arith.constant 1.000000e+00 : f32
    %519 = vector.broadcast %cst_214 : f32 to vector<1x32xf32>
    %520 = arith.subf %518, %519 : vector<1x32xf32>
    %521 = arith.select %515, %513, %520 : vector<1x32xi1>, vector<1x32xf32>
    %cst_215 = arith.constant dense<0.000000e+00> : vector<1x8xf32>
    %522 = tpu.matmul %521, %14, %cst_215 {dimension_numbers = #tpu.dot_dimension_numbers<[1], [0], [0], [1], [0, 0, 1, 1], [], []>} : vector<1x32xf32>, vector<32x8xf32>, vector<1x8xf32> -> vector<1x8xf32>
    %523 = arith.addf %522, %18 : vector<1x8xf32>
    %cst_216 = arith.constant dense<0.000000e+00> : vector<1x8xf32>
    %524 = tpu.matmul %521, %15, %cst_216 {dimension_numbers = #tpu.dot_dimension_numbers<[1], [0], [0], [1], [0, 0, 1, 1], [], []>} : vector<1x32xf32>, vector<32x8xf32>, vector<1x8xf32> -> vector<1x8xf32>
    %525 = arith.addf %524, %19 : vector<1x8xf32>
    %cst_217 = arith.constant 0.000000e+00 : f32
    %526 = vector.broadcast %cst_217 : f32 to vector<1x8xf32>
    %527 = arith.maximumf %525, %526 : vector<1x8xf32>
    %528 = math.absf %525 : vector<1x8xf32>
    %cst_218 = arith.constant 0.000000e+00 : f32
    %529 = vector.broadcast %cst_218 : f32 to vector<1x8xf32>
    %530 = arith.subf %529, %528 : vector<1x8xf32>
    %531 = math.exp %530 : vector<1x8xf32>
    %532 = math.log1p %531 : vector<1x8xf32>
    %533 = arith.addf %527, %532 : vector<1x8xf32>
    %cst_219 = arith.constant 1.000000e-01 : f32
    %534 = vector.broadcast %cst_219 : f32 to vector<1x8xf32>
    %535 = arith.addf %533, %534 : vector<1x8xf32>
    %cst_220 = arith.constant 1.000000e+06 : f32
    %536 = vector.broadcast %cst_220 : f32 to vector<1x8xf32>
    %537 = arith.addf %535, %536 : vector<1x8xf32>
    %cst_221 = arith.constant 1.000000e+06 : f32
    %538 = vector.broadcast %cst_221 : f32 to vector<1x8xf32>
    %539 = arith.addf %523, %538 : vector<1x8xf32>
    %540 = vector.extract_strided_slice %34 {offsets = [4, 0], sizes = [1, 8], strides = [1, 1]} : vector<8x8xf32> to vector<1x8xf32>
    %541 = arith.mulf %537, %540 : vector<1x8xf32>
    %542 = arith.addf %539, %541 : vector<1x8xf32>
    %cst_222 = arith.constant 1.000000e+06 : f32
    %543 = vector.broadcast %cst_222 : f32 to vector<1x8xf32>
    %544 = arith.addf %542, %543 : vector<1x8xf32>
    %545 = vector.extract_strided_slice %33 {offsets = [4, 0], sizes = [1, 32], strides = [1, 1]} : vector<8x32xf32> to vector<1x32xf32>
    %cst_223 = arith.constant dense<0.000000e+00> : vector<1x32xf32>
    %546 = tpu.matmul %511, %13, %cst_223 {dimension_numbers = #tpu.dot_dimension_numbers<[1], [0], [0], [1], [0, 0, 1, 1], [], []>} : vector<1x32xf32>, vector<32x32xf32>, vector<1x32xf32> -> vector<1x32xf32>
    %547 = arith.addf %545, %546 : vector<1x32xf32>
    %cst_224 = arith.constant 0.000000e+00 : f32
    %548 = vector.broadcast %cst_224 : f32 to vector<1x32xf32>
    %549 = arith.cmpf ogt, %547, %548 : vector<1x32xf32>
    %cst_225 = arith.constant 0.000000e+00 : f32
    %550 = vector.broadcast %cst_225 : f32 to vector<1x32xf32>
    %551 = arith.minimumf %547, %550 : vector<1x32xf32>
    %552 = math.exp %551 : vector<1x32xf32>
    %cst_226 = arith.constant 1.000000e+00 : f32
    %553 = vector.broadcast %cst_226 : f32 to vector<1x32xf32>
    %554 = arith.subf %552, %553 : vector<1x32xf32>
    %555 = arith.select %549, %547, %554 : vector<1x32xi1>, vector<1x32xf32>
    %cst_227 = arith.constant dense<0.000000e+00> : vector<1x8xf32>
    %556 = tpu.matmul %555, %16, %cst_227 {dimension_numbers = #tpu.dot_dimension_numbers<[1], [0], [0], [1], [0, 0, 1, 1], [], []>} : vector<1x32xf32>, vector<32x8xf32>, vector<1x8xf32> -> vector<1x8xf32>
    %557 = arith.addf %556, %20 : vector<1x8xf32>
    %cst_228 = arith.constant dense<0.000000e+00> : vector<1x8xf32>
    %558 = tpu.matmul %555, %17, %cst_228 {dimension_numbers = #tpu.dot_dimension_numbers<[1], [0], [0], [1], [0, 0, 1, 1], [], []>} : vector<1x32xf32>, vector<32x8xf32>, vector<1x8xf32> -> vector<1x8xf32>
    %559 = arith.addf %558, %21 : vector<1x8xf32>
    %cst_229 = arith.constant 0.000000e+00 : f32
    %560 = vector.broadcast %cst_229 : f32 to vector<1x8xf32>
    %561 = arith.maximumf %559, %560 : vector<1x8xf32>
    %562 = math.absf %559 : vector<1x8xf32>
    %cst_230 = arith.constant 0.000000e+00 : f32
    %563 = vector.broadcast %cst_230 : f32 to vector<1x8xf32>
    %564 = arith.subf %563, %562 : vector<1x8xf32>
    %565 = math.exp %564 : vector<1x8xf32>
    %566 = math.log1p %565 : vector<1x8xf32>
    %567 = arith.addf %561, %566 : vector<1x8xf32>
    %cst_231 = arith.constant 1.000000e-01 : f32
    %568 = vector.broadcast %cst_231 : f32 to vector<1x8xf32>
    %569 = arith.addf %567, %568 : vector<1x8xf32>
    %570 = vector.extract_strided_slice %35 {offsets = [4, 0], sizes = [1, 8], strides = [1, 1]} : vector<8x8xf32> to vector<1x8xf32>
    %571 = arith.mulf %569, %570 : vector<1x8xf32>
    %572 = arith.addf %557, %571 : vector<1x8xf32>
    %573 = tpu.concatenate %523, %537, %544, %557, %569, %572, %511, %38 in 1 : vector<1x8xf32>, vector<1x8xf32>, vector<1x8xf32>, vector<1x8xf32>, vector<1x8xf32>, vector<1x8xf32>, vector<1x32xf32>, vector<1x48xf32> -> vector<1x128xf32>
    %574 = vector.extract_strided_slice %27 {offsets = [5, 0], sizes = [1, 32], strides = [1, 1]} : vector<8x32xf32> to vector<1x32xf32>
    %cst_232 = arith.constant dense<0.000000e+00> : vector<1x32xf32>
    %575 = tpu.matmul %572, %0, %cst_232 {dimension_numbers = #tpu.dot_dimension_numbers<[1], [0], [0], [1], [0, 0, 1, 1], [], []>} : vector<1x8xf32>, vector<8x32xf32>, vector<1x32xf32> -> vector<1x32xf32>
    %576 = arith.addf %574, %575 : vector<1x32xf32>
    %cst_233 = arith.constant 0.000000e+00 : f32
    %577 = vector.broadcast %cst_233 : f32 to vector<1x32xf32>
    %578 = arith.cmpf ogt, %576, %577 : vector<1x32xf32>
    %cst_234 = arith.constant 0.000000e+00 : f32
    %579 = vector.broadcast %cst_234 : f32 to vector<1x32xf32>
    %580 = arith.minimumf %576, %579 : vector<1x32xf32>
    %581 = math.exp %580 : vector<1x32xf32>
    %cst_235 = arith.constant 1.000000e+00 : f32
    %582 = vector.broadcast %cst_235 : f32 to vector<1x32xf32>
    %583 = arith.subf %581, %582 : vector<1x32xf32>
    %584 = arith.select %578, %576, %583 : vector<1x32xi1>, vector<1x32xf32>
    %cst_236 = arith.constant dense<0.000000e+00> : vector<1x32xf32>
    %585 = tpu.matmul %584, %1, %cst_236 {dimension_numbers = #tpu.dot_dimension_numbers<[1], [0], [0], [1], [0, 0, 1, 1], [], []>} : vector<1x32xf32>, vector<32x32xf32>, vector<1x32xf32> -> vector<1x32xf32>
    %cst_237 = arith.constant dense<0.000000e+00> : vector<1x32xf32>
    %586 = tpu.matmul %511, %4, %cst_237 {dimension_numbers = #tpu.dot_dimension_numbers<[1], [0], [0], [1], [0, 0, 1, 1], [], []>} : vector<1x32xf32>, vector<32x32xf32>, vector<1x32xf32> -> vector<1x32xf32>
    %587 = arith.addf %585, %586 : vector<1x32xf32>
    %588 = arith.addf %587, %7 : vector<1x32xf32>
    %cst_238 = arith.constant 0.000000e+00 : f32
    %589 = vector.broadcast %cst_238 : f32 to vector<1x32xf32>
    %590 = arith.subf %589, %588 : vector<1x32xf32>
    %591 = math.exp %590 : vector<1x32xf32>
    %cst_239 = arith.constant 1.000000e+00 : f32
    %592 = vector.broadcast %cst_239 : f32 to vector<1x32xf32>
    %593 = arith.addf %592, %591 : vector<1x32xf32>
    %cst_240 = arith.constant 1.000000e+00 : f32
    %594 = vector.broadcast %cst_240 : f32 to vector<1x32xf32>
    %595 = arith.divf %594, %593 : vector<1x32xf32>
    %cst_241 = arith.constant dense<0.000000e+00> : vector<1x32xf32>
    %596 = tpu.matmul %584, %2, %cst_241 {dimension_numbers = #tpu.dot_dimension_numbers<[1], [0], [0], [1], [0, 0, 1, 1], [], []>} : vector<1x32xf32>, vector<32x32xf32>, vector<1x32xf32> -> vector<1x32xf32>
    %cst_242 = arith.constant dense<0.000000e+00> : vector<1x32xf32>
    %597 = tpu.matmul %511, %5, %cst_242 {dimension_numbers = #tpu.dot_dimension_numbers<[1], [0], [0], [1], [0, 0, 1, 1], [], []>} : vector<1x32xf32>, vector<32x32xf32>, vector<1x32xf32> -> vector<1x32xf32>
    %598 = arith.addf %596, %597 : vector<1x32xf32>
    %599 = arith.addf %598, %8 : vector<1x32xf32>
    %cst_243 = arith.constant 0.000000e+00 : f32
    %600 = vector.broadcast %cst_243 : f32 to vector<1x32xf32>
    %601 = arith.subf %600, %599 : vector<1x32xf32>
    %602 = math.exp %601 : vector<1x32xf32>
    %cst_244 = arith.constant 1.000000e+00 : f32
    %603 = vector.broadcast %cst_244 : f32 to vector<1x32xf32>
    %604 = arith.addf %603, %602 : vector<1x32xf32>
    %cst_245 = arith.constant 1.000000e+00 : f32
    %605 = vector.broadcast %cst_245 : f32 to vector<1x32xf32>
    %606 = arith.divf %605, %604 : vector<1x32xf32>
    %cst_246 = arith.constant dense<0.000000e+00> : vector<1x32xf32>
    %607 = tpu.matmul %584, %3, %cst_246 {dimension_numbers = #tpu.dot_dimension_numbers<[1], [0], [0], [1], [0, 0, 1, 1], [], []>} : vector<1x32xf32>, vector<32x32xf32>, vector<1x32xf32> -> vector<1x32xf32>
    %608 = arith.addf %607, %9 : vector<1x32xf32>
    %cst_247 = arith.constant dense<0.000000e+00> : vector<1x32xf32>
    %609 = tpu.matmul %511, %6, %cst_247 {dimension_numbers = #tpu.dot_dimension_numbers<[1], [0], [0], [1], [0, 0, 1, 1], [], []>} : vector<1x32xf32>, vector<32x32xf32>, vector<1x32xf32> -> vector<1x32xf32>
    %610 = arith.addf %609, %10 : vector<1x32xf32>
    %611 = arith.mulf %595, %610 : vector<1x32xf32>
    %612 = arith.addf %608, %611 : vector<1x32xf32>
    %613 = math.tanh %612 : vector<1x32xf32>
    %cst_248 = arith.constant 1.000000e+00 : f32
    %614 = vector.broadcast %cst_248 : f32 to vector<1x32xf32>
    %615 = arith.subf %614, %606 : vector<1x32xf32>
    %616 = arith.mulf %615, %613 : vector<1x32xf32>
    %617 = arith.mulf %606, %511 : vector<1x32xf32>
    %618 = arith.addf %616, %617 : vector<1x32xf32>
    %cst_249 = arith.constant dense<0.000000e+00> : vector<1x32xf32>
    %619 = tpu.matmul %618, %11, %cst_249 {dimension_numbers = #tpu.dot_dimension_numbers<[1], [0], [0], [1], [0, 0, 1, 1], [], []>} : vector<1x32xf32>, vector<32x32xf32>, vector<1x32xf32> -> vector<1x32xf32>
    %620 = arith.addf %619, %12 : vector<1x32xf32>
    %cst_250 = arith.constant 0.000000e+00 : f32
    %621 = vector.broadcast %cst_250 : f32 to vector<1x32xf32>
    %622 = arith.cmpf ogt, %620, %621 : vector<1x32xf32>
    %cst_251 = arith.constant 0.000000e+00 : f32
    %623 = vector.broadcast %cst_251 : f32 to vector<1x32xf32>
    %624 = arith.minimumf %620, %623 : vector<1x32xf32>
    %625 = math.exp %624 : vector<1x32xf32>
    %cst_252 = arith.constant 1.000000e+00 : f32
    %626 = vector.broadcast %cst_252 : f32 to vector<1x32xf32>
    %627 = arith.subf %625, %626 : vector<1x32xf32>
    %628 = arith.select %622, %620, %627 : vector<1x32xi1>, vector<1x32xf32>
    %cst_253 = arith.constant dense<0.000000e+00> : vector<1x8xf32>
    %629 = tpu.matmul %628, %14, %cst_253 {dimension_numbers = #tpu.dot_dimension_numbers<[1], [0], [0], [1], [0, 0, 1, 1], [], []>} : vector<1x32xf32>, vector<32x8xf32>, vector<1x8xf32> -> vector<1x8xf32>
    %630 = arith.addf %629, %18 : vector<1x8xf32>
    %cst_254 = arith.constant dense<0.000000e+00> : vector<1x8xf32>
    %631 = tpu.matmul %628, %15, %cst_254 {dimension_numbers = #tpu.dot_dimension_numbers<[1], [0], [0], [1], [0, 0, 1, 1], [], []>} : vector<1x32xf32>, vector<32x8xf32>, vector<1x8xf32> -> vector<1x8xf32>
    %632 = arith.addf %631, %19 : vector<1x8xf32>
    %cst_255 = arith.constant 0.000000e+00 : f32
    %633 = vector.broadcast %cst_255 : f32 to vector<1x8xf32>
    %634 = arith.maximumf %632, %633 : vector<1x8xf32>
    %635 = math.absf %632 : vector<1x8xf32>
    %cst_256 = arith.constant 0.000000e+00 : f32
    %636 = vector.broadcast %cst_256 : f32 to vector<1x8xf32>
    %637 = arith.subf %636, %635 : vector<1x8xf32>
    %638 = math.exp %637 : vector<1x8xf32>
    %639 = math.log1p %638 : vector<1x8xf32>
    %640 = arith.addf %634, %639 : vector<1x8xf32>
    %cst_257 = arith.constant 1.000000e-01 : f32
    %641 = vector.broadcast %cst_257 : f32 to vector<1x8xf32>
    %642 = arith.addf %640, %641 : vector<1x8xf32>
    %cst_258 = arith.constant 1.000000e+06 : f32
    %643 = vector.broadcast %cst_258 : f32 to vector<1x8xf32>
    %644 = arith.addf %642, %643 : vector<1x8xf32>
    %cst_259 = arith.constant 1.000000e+06 : f32
    %645 = vector.broadcast %cst_259 : f32 to vector<1x8xf32>
    %646 = arith.addf %630, %645 : vector<1x8xf32>
    %647 = vector.extract_strided_slice %34 {offsets = [5, 0], sizes = [1, 8], strides = [1, 1]} : vector<8x8xf32> to vector<1x8xf32>
    %648 = arith.mulf %644, %647 : vector<1x8xf32>
    %649 = arith.addf %646, %648 : vector<1x8xf32>
    %cst_260 = arith.constant 1.000000e+06 : f32
    %650 = vector.broadcast %cst_260 : f32 to vector<1x8xf32>
    %651 = arith.addf %649, %650 : vector<1x8xf32>
    %652 = vector.extract_strided_slice %33 {offsets = [5, 0], sizes = [1, 32], strides = [1, 1]} : vector<8x32xf32> to vector<1x32xf32>
    %cst_261 = arith.constant dense<0.000000e+00> : vector<1x32xf32>
    %653 = tpu.matmul %618, %13, %cst_261 {dimension_numbers = #tpu.dot_dimension_numbers<[1], [0], [0], [1], [0, 0, 1, 1], [], []>} : vector<1x32xf32>, vector<32x32xf32>, vector<1x32xf32> -> vector<1x32xf32>
    %654 = arith.addf %652, %653 : vector<1x32xf32>
    %cst_262 = arith.constant 0.000000e+00 : f32
    %655 = vector.broadcast %cst_262 : f32 to vector<1x32xf32>
    %656 = arith.cmpf ogt, %654, %655 : vector<1x32xf32>
    %cst_263 = arith.constant 0.000000e+00 : f32
    %657 = vector.broadcast %cst_263 : f32 to vector<1x32xf32>
    %658 = arith.minimumf %654, %657 : vector<1x32xf32>
    %659 = math.exp %658 : vector<1x32xf32>
    %cst_264 = arith.constant 1.000000e+00 : f32
    %660 = vector.broadcast %cst_264 : f32 to vector<1x32xf32>
    %661 = arith.subf %659, %660 : vector<1x32xf32>
    %662 = arith.select %656, %654, %661 : vector<1x32xi1>, vector<1x32xf32>
    %cst_265 = arith.constant dense<0.000000e+00> : vector<1x8xf32>
    %663 = tpu.matmul %662, %16, %cst_265 {dimension_numbers = #tpu.dot_dimension_numbers<[1], [0], [0], [1], [0, 0, 1, 1], [], []>} : vector<1x32xf32>, vector<32x8xf32>, vector<1x8xf32> -> vector<1x8xf32>
    %664 = arith.addf %663, %20 : vector<1x8xf32>
    %cst_266 = arith.constant dense<0.000000e+00> : vector<1x8xf32>
    %665 = tpu.matmul %662, %17, %cst_266 {dimension_numbers = #tpu.dot_dimension_numbers<[1], [0], [0], [1], [0, 0, 1, 1], [], []>} : vector<1x32xf32>, vector<32x8xf32>, vector<1x8xf32> -> vector<1x8xf32>
    %666 = arith.addf %665, %21 : vector<1x8xf32>
    %cst_267 = arith.constant 0.000000e+00 : f32
    %667 = vector.broadcast %cst_267 : f32 to vector<1x8xf32>
    %668 = arith.maximumf %666, %667 : vector<1x8xf32>
    %669 = math.absf %666 : vector<1x8xf32>
    %cst_268 = arith.constant 0.000000e+00 : f32
    %670 = vector.broadcast %cst_268 : f32 to vector<1x8xf32>
    %671 = arith.subf %670, %669 : vector<1x8xf32>
    %672 = math.exp %671 : vector<1x8xf32>
    %673 = math.log1p %672 : vector<1x8xf32>
    %674 = arith.addf %668, %673 : vector<1x8xf32>
    %cst_269 = arith.constant 1.000000e-01 : f32
    %675 = vector.broadcast %cst_269 : f32 to vector<1x8xf32>
    %676 = arith.addf %674, %675 : vector<1x8xf32>
    %677 = vector.extract_strided_slice %35 {offsets = [5, 0], sizes = [1, 8], strides = [1, 1]} : vector<8x8xf32> to vector<1x8xf32>
    %678 = arith.mulf %676, %677 : vector<1x8xf32>
    %679 = arith.addf %664, %678 : vector<1x8xf32>
    %680 = tpu.concatenate %630, %644, %651, %664, %676, %679, %618, %38 in 1 : vector<1x8xf32>, vector<1x8xf32>, vector<1x8xf32>, vector<1x8xf32>, vector<1x8xf32>, vector<1x8xf32>, vector<1x32xf32>, vector<1x48xf32> -> vector<1x128xf32>
    %681 = vector.extract_strided_slice %27 {offsets = [6, 0], sizes = [1, 32], strides = [1, 1]} : vector<8x32xf32> to vector<1x32xf32>
    %cst_270 = arith.constant dense<0.000000e+00> : vector<1x32xf32>
    %682 = tpu.matmul %679, %0, %cst_270 {dimension_numbers = #tpu.dot_dimension_numbers<[1], [0], [0], [1], [0, 0, 1, 1], [], []>} : vector<1x8xf32>, vector<8x32xf32>, vector<1x32xf32> -> vector<1x32xf32>
    %683 = arith.addf %681, %682 : vector<1x32xf32>
    %cst_271 = arith.constant 0.000000e+00 : f32
    %684 = vector.broadcast %cst_271 : f32 to vector<1x32xf32>
    %685 = arith.cmpf ogt, %683, %684 : vector<1x32xf32>
    %cst_272 = arith.constant 0.000000e+00 : f32
    %686 = vector.broadcast %cst_272 : f32 to vector<1x32xf32>
    %687 = arith.minimumf %683, %686 : vector<1x32xf32>
    %688 = math.exp %687 : vector<1x32xf32>
    %cst_273 = arith.constant 1.000000e+00 : f32
    %689 = vector.broadcast %cst_273 : f32 to vector<1x32xf32>
    %690 = arith.subf %688, %689 : vector<1x32xf32>
    %691 = arith.select %685, %683, %690 : vector<1x32xi1>, vector<1x32xf32>
    %cst_274 = arith.constant dense<0.000000e+00> : vector<1x32xf32>
    %692 = tpu.matmul %691, %1, %cst_274 {dimension_numbers = #tpu.dot_dimension_numbers<[1], [0], [0], [1], [0, 0, 1, 1], [], []>} : vector<1x32xf32>, vector<32x32xf32>, vector<1x32xf32> -> vector<1x32xf32>
    %cst_275 = arith.constant dense<0.000000e+00> : vector<1x32xf32>
    %693 = tpu.matmul %618, %4, %cst_275 {dimension_numbers = #tpu.dot_dimension_numbers<[1], [0], [0], [1], [0, 0, 1, 1], [], []>} : vector<1x32xf32>, vector<32x32xf32>, vector<1x32xf32> -> vector<1x32xf32>
    %694 = arith.addf %692, %693 : vector<1x32xf32>
    %695 = arith.addf %694, %7 : vector<1x32xf32>
    %cst_276 = arith.constant 0.000000e+00 : f32
    %696 = vector.broadcast %cst_276 : f32 to vector<1x32xf32>
    %697 = arith.subf %696, %695 : vector<1x32xf32>
    %698 = math.exp %697 : vector<1x32xf32>
    %cst_277 = arith.constant 1.000000e+00 : f32
    %699 = vector.broadcast %cst_277 : f32 to vector<1x32xf32>
    %700 = arith.addf %699, %698 : vector<1x32xf32>
    %cst_278 = arith.constant 1.000000e+00 : f32
    %701 = vector.broadcast %cst_278 : f32 to vector<1x32xf32>
    %702 = arith.divf %701, %700 : vector<1x32xf32>
    %cst_279 = arith.constant dense<0.000000e+00> : vector<1x32xf32>
    %703 = tpu.matmul %691, %2, %cst_279 {dimension_numbers = #tpu.dot_dimension_numbers<[1], [0], [0], [1], [0, 0, 1, 1], [], []>} : vector<1x32xf32>, vector<32x32xf32>, vector<1x32xf32> -> vector<1x32xf32>
    %cst_280 = arith.constant dense<0.000000e+00> : vector<1x32xf32>
    %704 = tpu.matmul %618, %5, %cst_280 {dimension_numbers = #tpu.dot_dimension_numbers<[1], [0], [0], [1], [0, 0, 1, 1], [], []>} : vector<1x32xf32>, vector<32x32xf32>, vector<1x32xf32> -> vector<1x32xf32>
    %705 = arith.addf %703, %704 : vector<1x32xf32>
    %706 = arith.addf %705, %8 : vector<1x32xf32>
    %cst_281 = arith.constant 0.000000e+00 : f32
    %707 = vector.broadcast %cst_281 : f32 to vector<1x32xf32>
    %708 = arith.subf %707, %706 : vector<1x32xf32>
    %709 = math.exp %708 : vector<1x32xf32>
    %cst_282 = arith.constant 1.000000e+00 : f32
    %710 = vector.broadcast %cst_282 : f32 to vector<1x32xf32>
    %711 = arith.addf %710, %709 : vector<1x32xf32>
    %cst_283 = arith.constant 1.000000e+00 : f32
    %712 = vector.broadcast %cst_283 : f32 to vector<1x32xf32>
    %713 = arith.divf %712, %711 : vector<1x32xf32>
    %cst_284 = arith.constant dense<0.000000e+00> : vector<1x32xf32>
    %714 = tpu.matmul %691, %3, %cst_284 {dimension_numbers = #tpu.dot_dimension_numbers<[1], [0], [0], [1], [0, 0, 1, 1], [], []>} : vector<1x32xf32>, vector<32x32xf32>, vector<1x32xf32> -> vector<1x32xf32>
    %715 = arith.addf %714, %9 : vector<1x32xf32>
    %cst_285 = arith.constant dense<0.000000e+00> : vector<1x32xf32>
    %716 = tpu.matmul %618, %6, %cst_285 {dimension_numbers = #tpu.dot_dimension_numbers<[1], [0], [0], [1], [0, 0, 1, 1], [], []>} : vector<1x32xf32>, vector<32x32xf32>, vector<1x32xf32> -> vector<1x32xf32>
    %717 = arith.addf %716, %10 : vector<1x32xf32>
    %718 = arith.mulf %702, %717 : vector<1x32xf32>
    %719 = arith.addf %715, %718 : vector<1x32xf32>
    %720 = math.tanh %719 : vector<1x32xf32>
    %cst_286 = arith.constant 1.000000e+00 : f32
    %721 = vector.broadcast %cst_286 : f32 to vector<1x32xf32>
    %722 = arith.subf %721, %713 : vector<1x32xf32>
    %723 = arith.mulf %722, %720 : vector<1x32xf32>
    %724 = arith.mulf %713, %618 : vector<1x32xf32>
    %725 = arith.addf %723, %724 : vector<1x32xf32>
    %cst_287 = arith.constant dense<0.000000e+00> : vector<1x32xf32>
    %726 = tpu.matmul %725, %11, %cst_287 {dimension_numbers = #tpu.dot_dimension_numbers<[1], [0], [0], [1], [0, 0, 1, 1], [], []>} : vector<1x32xf32>, vector<32x32xf32>, vector<1x32xf32> -> vector<1x32xf32>
    %727 = arith.addf %726, %12 : vector<1x32xf32>
    %cst_288 = arith.constant 0.000000e+00 : f32
    %728 = vector.broadcast %cst_288 : f32 to vector<1x32xf32>
    %729 = arith.cmpf ogt, %727, %728 : vector<1x32xf32>
    %cst_289 = arith.constant 0.000000e+00 : f32
    %730 = vector.broadcast %cst_289 : f32 to vector<1x32xf32>
    %731 = arith.minimumf %727, %730 : vector<1x32xf32>
    %732 = math.exp %731 : vector<1x32xf32>
    %cst_290 = arith.constant 1.000000e+00 : f32
    %733 = vector.broadcast %cst_290 : f32 to vector<1x32xf32>
    %734 = arith.subf %732, %733 : vector<1x32xf32>
    %735 = arith.select %729, %727, %734 : vector<1x32xi1>, vector<1x32xf32>
    %cst_291 = arith.constant dense<0.000000e+00> : vector<1x8xf32>
    %736 = tpu.matmul %735, %14, %cst_291 {dimension_numbers = #tpu.dot_dimension_numbers<[1], [0], [0], [1], [0, 0, 1, 1], [], []>} : vector<1x32xf32>, vector<32x8xf32>, vector<1x8xf32> -> vector<1x8xf32>
    %737 = arith.addf %736, %18 : vector<1x8xf32>
    %cst_292 = arith.constant dense<0.000000e+00> : vector<1x8xf32>
    %738 = tpu.matmul %735, %15, %cst_292 {dimension_numbers = #tpu.dot_dimension_numbers<[1], [0], [0], [1], [0, 0, 1, 1], [], []>} : vector<1x32xf32>, vector<32x8xf32>, vector<1x8xf32> -> vector<1x8xf32>
    %739 = arith.addf %738, %19 : vector<1x8xf32>
    %cst_293 = arith.constant 0.000000e+00 : f32
    %740 = vector.broadcast %cst_293 : f32 to vector<1x8xf32>
    %741 = arith.maximumf %739, %740 : vector<1x8xf32>
    %742 = math.absf %739 : vector<1x8xf32>
    %cst_294 = arith.constant 0.000000e+00 : f32
    %743 = vector.broadcast %cst_294 : f32 to vector<1x8xf32>
    %744 = arith.subf %743, %742 : vector<1x8xf32>
    %745 = math.exp %744 : vector<1x8xf32>
    %746 = math.log1p %745 : vector<1x8xf32>
    %747 = arith.addf %741, %746 : vector<1x8xf32>
    %cst_295 = arith.constant 1.000000e-01 : f32
    %748 = vector.broadcast %cst_295 : f32 to vector<1x8xf32>
    %749 = arith.addf %747, %748 : vector<1x8xf32>
    %cst_296 = arith.constant 1.000000e+06 : f32
    %750 = vector.broadcast %cst_296 : f32 to vector<1x8xf32>
    %751 = arith.addf %749, %750 : vector<1x8xf32>
    %cst_297 = arith.constant 1.000000e+06 : f32
    %752 = vector.broadcast %cst_297 : f32 to vector<1x8xf32>
    %753 = arith.addf %737, %752 : vector<1x8xf32>
    %754 = vector.extract_strided_slice %34 {offsets = [6, 0], sizes = [1, 8], strides = [1, 1]} : vector<8x8xf32> to vector<1x8xf32>
    %755 = arith.mulf %751, %754 : vector<1x8xf32>
    %756 = arith.addf %753, %755 : vector<1x8xf32>
    %cst_298 = arith.constant 1.000000e+06 : f32
    %757 = vector.broadcast %cst_298 : f32 to vector<1x8xf32>
    %758 = arith.addf %756, %757 : vector<1x8xf32>
    %759 = vector.extract_strided_slice %33 {offsets = [6, 0], sizes = [1, 32], strides = [1, 1]} : vector<8x32xf32> to vector<1x32xf32>
    %cst_299 = arith.constant dense<0.000000e+00> : vector<1x32xf32>
    %760 = tpu.matmul %725, %13, %cst_299 {dimension_numbers = #tpu.dot_dimension_numbers<[1], [0], [0], [1], [0, 0, 1, 1], [], []>} : vector<1x32xf32>, vector<32x32xf32>, vector<1x32xf32> -> vector<1x32xf32>
    %761 = arith.addf %759, %760 : vector<1x32xf32>
    %cst_300 = arith.constant 0.000000e+00 : f32
    %762 = vector.broadcast %cst_300 : f32 to vector<1x32xf32>
    %763 = arith.cmpf ogt, %761, %762 : vector<1x32xf32>
    %cst_301 = arith.constant 0.000000e+00 : f32
    %764 = vector.broadcast %cst_301 : f32 to vector<1x32xf32>
    %765 = arith.minimumf %761, %764 : vector<1x32xf32>
    %766 = math.exp %765 : vector<1x32xf32>
    %cst_302 = arith.constant 1.000000e+00 : f32
    %767 = vector.broadcast %cst_302 : f32 to vector<1x32xf32>
    %768 = arith.subf %766, %767 : vector<1x32xf32>
    %769 = arith.select %763, %761, %768 : vector<1x32xi1>, vector<1x32xf32>
    %cst_303 = arith.constant dense<0.000000e+00> : vector<1x8xf32>
    %770 = tpu.matmul %769, %16, %cst_303 {dimension_numbers = #tpu.dot_dimension_numbers<[1], [0], [0], [1], [0, 0, 1, 1], [], []>} : vector<1x32xf32>, vector<32x8xf32>, vector<1x8xf32> -> vector<1x8xf32>
    %771 = arith.addf %770, %20 : vector<1x8xf32>
    %cst_304 = arith.constant dense<0.000000e+00> : vector<1x8xf32>
    %772 = tpu.matmul %769, %17, %cst_304 {dimension_numbers = #tpu.dot_dimension_numbers<[1], [0], [0], [1], [0, 0, 1, 1], [], []>} : vector<1x32xf32>, vector<32x8xf32>, vector<1x8xf32> -> vector<1x8xf32>
    %773 = arith.addf %772, %21 : vector<1x8xf32>
    %cst_305 = arith.constant 0.000000e+00 : f32
    %774 = vector.broadcast %cst_305 : f32 to vector<1x8xf32>
    %775 = arith.maximumf %773, %774 : vector<1x8xf32>
    %776 = math.absf %773 : vector<1x8xf32>
    %cst_306 = arith.constant 0.000000e+00 : f32
    %777 = vector.broadcast %cst_306 : f32 to vector<1x8xf32>
    %778 = arith.subf %777, %776 : vector<1x8xf32>
    %779 = math.exp %778 : vector<1x8xf32>
    %780 = math.log1p %779 : vector<1x8xf32>
    %781 = arith.addf %775, %780 : vector<1x8xf32>
    %cst_307 = arith.constant 1.000000e-01 : f32
    %782 = vector.broadcast %cst_307 : f32 to vector<1x8xf32>
    %783 = arith.addf %781, %782 : vector<1x8xf32>
    %784 = vector.extract_strided_slice %35 {offsets = [6, 0], sizes = [1, 8], strides = [1, 1]} : vector<8x8xf32> to vector<1x8xf32>
    %785 = arith.mulf %783, %784 : vector<1x8xf32>
    %786 = arith.addf %771, %785 : vector<1x8xf32>
    %787 = tpu.concatenate %737, %751, %758, %771, %783, %786, %725, %38 in 1 : vector<1x8xf32>, vector<1x8xf32>, vector<1x8xf32>, vector<1x8xf32>, vector<1x8xf32>, vector<1x8xf32>, vector<1x32xf32>, vector<1x48xf32> -> vector<1x128xf32>
    %788 = vector.extract_strided_slice %27 {offsets = [7, 0], sizes = [1, 32], strides = [1, 1]} : vector<8x32xf32> to vector<1x32xf32>
    %cst_308 = arith.constant dense<0.000000e+00> : vector<1x32xf32>
    %789 = tpu.matmul %786, %0, %cst_308 {dimension_numbers = #tpu.dot_dimension_numbers<[1], [0], [0], [1], [0, 0, 1, 1], [], []>} : vector<1x8xf32>, vector<8x32xf32>, vector<1x32xf32> -> vector<1x32xf32>
    %790 = arith.addf %788, %789 : vector<1x32xf32>
    %cst_309 = arith.constant 0.000000e+00 : f32
    %791 = vector.broadcast %cst_309 : f32 to vector<1x32xf32>
    %792 = arith.cmpf ogt, %790, %791 : vector<1x32xf32>
    %cst_310 = arith.constant 0.000000e+00 : f32
    %793 = vector.broadcast %cst_310 : f32 to vector<1x32xf32>
    %794 = arith.minimumf %790, %793 : vector<1x32xf32>
    %795 = math.exp %794 : vector<1x32xf32>
    %cst_311 = arith.constant 1.000000e+00 : f32
    %796 = vector.broadcast %cst_311 : f32 to vector<1x32xf32>
    %797 = arith.subf %795, %796 : vector<1x32xf32>
    %798 = arith.select %792, %790, %797 : vector<1x32xi1>, vector<1x32xf32>
    %cst_312 = arith.constant dense<0.000000e+00> : vector<1x32xf32>
    %799 = tpu.matmul %798, %1, %cst_312 {dimension_numbers = #tpu.dot_dimension_numbers<[1], [0], [0], [1], [0, 0, 1, 1], [], []>} : vector<1x32xf32>, vector<32x32xf32>, vector<1x32xf32> -> vector<1x32xf32>
    %cst_313 = arith.constant dense<0.000000e+00> : vector<1x32xf32>
    %800 = tpu.matmul %725, %4, %cst_313 {dimension_numbers = #tpu.dot_dimension_numbers<[1], [0], [0], [1], [0, 0, 1, 1], [], []>} : vector<1x32xf32>, vector<32x32xf32>, vector<1x32xf32> -> vector<1x32xf32>
    %801 = arith.addf %799, %800 : vector<1x32xf32>
    %802 = arith.addf %801, %7 : vector<1x32xf32>
    %cst_314 = arith.constant 0.000000e+00 : f32
    %803 = vector.broadcast %cst_314 : f32 to vector<1x32xf32>
    %804 = arith.subf %803, %802 : vector<1x32xf32>
    %805 = math.exp %804 : vector<1x32xf32>
    %cst_315 = arith.constant 1.000000e+00 : f32
    %806 = vector.broadcast %cst_315 : f32 to vector<1x32xf32>
    %807 = arith.addf %806, %805 : vector<1x32xf32>
    %cst_316 = arith.constant 1.000000e+00 : f32
    %808 = vector.broadcast %cst_316 : f32 to vector<1x32xf32>
    %809 = arith.divf %808, %807 : vector<1x32xf32>
    %cst_317 = arith.constant dense<0.000000e+00> : vector<1x32xf32>
    %810 = tpu.matmul %798, %2, %cst_317 {dimension_numbers = #tpu.dot_dimension_numbers<[1], [0], [0], [1], [0, 0, 1, 1], [], []>} : vector<1x32xf32>, vector<32x32xf32>, vector<1x32xf32> -> vector<1x32xf32>
    %cst_318 = arith.constant dense<0.000000e+00> : vector<1x32xf32>
    %811 = tpu.matmul %725, %5, %cst_318 {dimension_numbers = #tpu.dot_dimension_numbers<[1], [0], [0], [1], [0, 0, 1, 1], [], []>} : vector<1x32xf32>, vector<32x32xf32>, vector<1x32xf32> -> vector<1x32xf32>
    %812 = arith.addf %810, %811 : vector<1x32xf32>
    %813 = arith.addf %812, %8 : vector<1x32xf32>
    %cst_319 = arith.constant 0.000000e+00 : f32
    %814 = vector.broadcast %cst_319 : f32 to vector<1x32xf32>
    %815 = arith.subf %814, %813 : vector<1x32xf32>
    %816 = math.exp %815 : vector<1x32xf32>
    %cst_320 = arith.constant 1.000000e+00 : f32
    %817 = vector.broadcast %cst_320 : f32 to vector<1x32xf32>
    %818 = arith.addf %817, %816 : vector<1x32xf32>
    %cst_321 = arith.constant 1.000000e+00 : f32
    %819 = vector.broadcast %cst_321 : f32 to vector<1x32xf32>
    %820 = arith.divf %819, %818 : vector<1x32xf32>
    %cst_322 = arith.constant dense<0.000000e+00> : vector<1x32xf32>
    %821 = tpu.matmul %798, %3, %cst_322 {dimension_numbers = #tpu.dot_dimension_numbers<[1], [0], [0], [1], [0, 0, 1, 1], [], []>} : vector<1x32xf32>, vector<32x32xf32>, vector<1x32xf32> -> vector<1x32xf32>
    %822 = arith.addf %821, %9 : vector<1x32xf32>
    %cst_323 = arith.constant dense<0.000000e+00> : vector<1x32xf32>
    %823 = tpu.matmul %725, %6, %cst_323 {dimension_numbers = #tpu.dot_dimension_numbers<[1], [0], [0], [1], [0, 0, 1, 1], [], []>} : vector<1x32xf32>, vector<32x32xf32>, vector<1x32xf32> -> vector<1x32xf32>
    %824 = arith.addf %823, %10 : vector<1x32xf32>
    %825 = arith.mulf %809, %824 : vector<1x32xf32>
    %826 = arith.addf %822, %825 : vector<1x32xf32>
    %827 = math.tanh %826 : vector<1x32xf32>
    %cst_324 = arith.constant 1.000000e+00 : f32
    %828 = vector.broadcast %cst_324 : f32 to vector<1x32xf32>
    %829 = arith.subf %828, %820 : vector<1x32xf32>
    %830 = arith.mulf %829, %827 : vector<1x32xf32>
    %831 = arith.mulf %820, %725 : vector<1x32xf32>
    %832 = arith.addf %830, %831 : vector<1x32xf32>
    %cst_325 = arith.constant dense<0.000000e+00> : vector<1x32xf32>
    %833 = tpu.matmul %832, %11, %cst_325 {dimension_numbers = #tpu.dot_dimension_numbers<[1], [0], [0], [1], [0, 0, 1, 1], [], []>} : vector<1x32xf32>, vector<32x32xf32>, vector<1x32xf32> -> vector<1x32xf32>
    %834 = arith.addf %833, %12 : vector<1x32xf32>
    %cst_326 = arith.constant 0.000000e+00 : f32
    %835 = vector.broadcast %cst_326 : f32 to vector<1x32xf32>
    %836 = arith.cmpf ogt, %834, %835 : vector<1x32xf32>
    %cst_327 = arith.constant 0.000000e+00 : f32
    %837 = vector.broadcast %cst_327 : f32 to vector<1x32xf32>
    %838 = arith.minimumf %834, %837 : vector<1x32xf32>
    %839 = math.exp %838 : vector<1x32xf32>
    %cst_328 = arith.constant 1.000000e+00 : f32
    %840 = vector.broadcast %cst_328 : f32 to vector<1x32xf32>
    %841 = arith.subf %839, %840 : vector<1x32xf32>
    %842 = arith.select %836, %834, %841 : vector<1x32xi1>, vector<1x32xf32>
    %cst_329 = arith.constant dense<0.000000e+00> : vector<1x8xf32>
    %843 = tpu.matmul %842, %14, %cst_329 {dimension_numbers = #tpu.dot_dimension_numbers<[1], [0], [0], [1], [0, 0, 1, 1], [], []>} : vector<1x32xf32>, vector<32x8xf32>, vector<1x8xf32> -> vector<1x8xf32>
    %844 = arith.addf %843, %18 : vector<1x8xf32>
    %cst_330 = arith.constant dense<0.000000e+00> : vector<1x8xf32>
    %845 = tpu.matmul %842, %15, %cst_330 {dimension_numbers = #tpu.dot_dimension_numbers<[1], [0], [0], [1], [0, 0, 1, 1], [], []>} : vector<1x32xf32>, vector<32x8xf32>, vector<1x8xf32> -> vector<1x8xf32>
    %846 = arith.addf %845, %19 : vector<1x8xf32>
    %cst_331 = arith.constant 0.000000e+00 : f32
    %847 = vector.broadcast %cst_331 : f32 to vector<1x8xf32>
    %848 = arith.maximumf %846, %847 : vector<1x8xf32>
    %849 = math.absf %846 : vector<1x8xf32>
    %cst_332 = arith.constant 0.000000e+00 : f32
    %850 = vector.broadcast %cst_332 : f32 to vector<1x8xf32>
    %851 = arith.subf %850, %849 : vector<1x8xf32>
    %852 = math.exp %851 : vector<1x8xf32>
    %853 = math.log1p %852 : vector<1x8xf32>
    %854 = arith.addf %848, %853 : vector<1x8xf32>
    %cst_333 = arith.constant 1.000000e-01 : f32
    %855 = vector.broadcast %cst_333 : f32 to vector<1x8xf32>
    %856 = arith.addf %854, %855 : vector<1x8xf32>
    %cst_334 = arith.constant 1.000000e+06 : f32
    %857 = vector.broadcast %cst_334 : f32 to vector<1x8xf32>
    %858 = arith.addf %856, %857 : vector<1x8xf32>
    %cst_335 = arith.constant 1.000000e+06 : f32
    %859 = vector.broadcast %cst_335 : f32 to vector<1x8xf32>
    %860 = arith.addf %844, %859 : vector<1x8xf32>
    %861 = vector.extract_strided_slice %34 {offsets = [7, 0], sizes = [1, 8], strides = [1, 1]} : vector<8x8xf32> to vector<1x8xf32>
    %862 = arith.mulf %858, %861 : vector<1x8xf32>
    %863 = arith.addf %860, %862 : vector<1x8xf32>
    %cst_336 = arith.constant 1.000000e+06 : f32
    %864 = vector.broadcast %cst_336 : f32 to vector<1x8xf32>
    %865 = arith.addf %863, %864 : vector<1x8xf32>
    %866 = vector.extract_strided_slice %33 {offsets = [7, 0], sizes = [1, 32], strides = [1, 1]} : vector<8x32xf32> to vector<1x32xf32>
    %cst_337 = arith.constant dense<0.000000e+00> : vector<1x32xf32>
    %867 = tpu.matmul %832, %13, %cst_337 {dimension_numbers = #tpu.dot_dimension_numbers<[1], [0], [0], [1], [0, 0, 1, 1], [], []>} : vector<1x32xf32>, vector<32x32xf32>, vector<1x32xf32> -> vector<1x32xf32>
    %868 = arith.addf %866, %867 : vector<1x32xf32>
    %cst_338 = arith.constant 0.000000e+00 : f32
    %869 = vector.broadcast %cst_338 : f32 to vector<1x32xf32>
    %870 = arith.cmpf ogt, %868, %869 : vector<1x32xf32>
    %cst_339 = arith.constant 0.000000e+00 : f32
    %871 = vector.broadcast %cst_339 : f32 to vector<1x32xf32>
    %872 = arith.minimumf %868, %871 : vector<1x32xf32>
    %873 = math.exp %872 : vector<1x32xf32>
    %cst_340 = arith.constant 1.000000e+00 : f32
    %874 = vector.broadcast %cst_340 : f32 to vector<1x32xf32>
    %875 = arith.subf %873, %874 : vector<1x32xf32>
    %876 = arith.select %870, %868, %875 : vector<1x32xi1>, vector<1x32xf32>
    %cst_341 = arith.constant dense<0.000000e+00> : vector<1x8xf32>
    %877 = tpu.matmul %876, %16, %cst_341 {dimension_numbers = #tpu.dot_dimension_numbers<[1], [0], [0], [1], [0, 0, 1, 1], [], []>} : vector<1x32xf32>, vector<32x8xf32>, vector<1x8xf32> -> vector<1x8xf32>
    %878 = arith.addf %877, %20 : vector<1x8xf32>
    %cst_342 = arith.constant dense<0.000000e+00> : vector<1x8xf32>
    %879 = tpu.matmul %876, %17, %cst_342 {dimension_numbers = #tpu.dot_dimension_numbers<[1], [0], [0], [1], [0, 0, 1, 1], [], []>} : vector<1x32xf32>, vector<32x8xf32>, vector<1x8xf32> -> vector<1x8xf32>
    %880 = arith.addf %879, %21 : vector<1x8xf32>
    %cst_343 = arith.constant 0.000000e+00 : f32
    %881 = vector.broadcast %cst_343 : f32 to vector<1x8xf32>
    %882 = arith.maximumf %880, %881 : vector<1x8xf32>
    %883 = math.absf %880 : vector<1x8xf32>
    %cst_344 = arith.constant 0.000000e+00 : f32
    %884 = vector.broadcast %cst_344 : f32 to vector<1x8xf32>
    %885 = arith.subf %884, %883 : vector<1x8xf32>
    %886 = math.exp %885 : vector<1x8xf32>
    %887 = math.log1p %886 : vector<1x8xf32>
    %888 = arith.addf %882, %887 : vector<1x8xf32>
    %cst_345 = arith.constant 1.000000e-01 : f32
    %889 = vector.broadcast %cst_345 : f32 to vector<1x8xf32>
    %890 = arith.addf %888, %889 : vector<1x8xf32>
    %891 = vector.extract_strided_slice %35 {offsets = [7, 0], sizes = [1, 8], strides = [1, 1]} : vector<8x8xf32> to vector<1x8xf32>
    %892 = arith.mulf %890, %891 : vector<1x8xf32>
    %893 = arith.addf %878, %892 : vector<1x8xf32>
    %894 = tpu.concatenate %844, %858, %865, %878, %890, %893, %832, %38 in 1 : vector<1x8xf32>, vector<1x8xf32>, vector<1x8xf32>, vector<1x8xf32>, vector<1x8xf32>, vector<1x8xf32>, vector<1x32xf32>, vector<1x48xf32> -> vector<1x128xf32>
    %895 = tpu.concatenate %145, %252, %359, %466, %573, %680, %787, %894 in 0 : vector<1x128xf32>, vector<1x128xf32>, vector<1x128xf32>, vector<1x128xf32>, vector<1x128xf32>, vector<1x128xf32>, vector<1x128xf32>, vector<1x128xf32> -> vector<8x128xf32>
    %c0_346 = arith.constant 0 : index
    %c0_347 = arith.constant 0 : index
    %896 = vector.load %arg8[%c0_346, %c0_347] : memref<8x128xf32, #tpu.memory_space<vmem>>, vector<8x128xf32>
    tpu.vector_store %arg8[%c0_346, %c0_347], %895 {strides = array<i32>} : memref<8x128xf32, #tpu.memory_space<vmem>>, vector<8x128xf32>,
    return
  }
}

</mosaic_0001>

<llo_original>
// kernel: tpu_custom_call.1
$region0: #{tpu_custom_call.1}
  #allocation0 [shape = 'u32[]', space=smem, size = 0x4, offset = 0x4, fixed_abs, tag = 'smem constant byte address 0x4 - core index']
  #allocation1 [shape = 'u32[72,128]{1,0:T(1,128)}', space=vmem, size = 0x9000, scoped, tag = 'internal scratch']
  %s0 = inlined_call_operand.vmem [shape: f32[8,16], index: 0, kind: input, shape index: {}]
  %s1 = inlined_call_operand.vmem [shape: f32[8,4], index: 1, kind: input, shape index: {}]
  %s2 = inlined_call_operand.vmem [shape: f32[8,8], index: 2, kind: input, shape index: {}]
  %s3 = inlined_call_operand.vmem [shape: f32[8,8], index: 3, kind: input, shape index: {}]
  %s4 = inlined_call_operand.vmem [shape: f32[1,8], index: 4, kind: input, shape index: {}]
  %s5 = inlined_call_operand.vmem [shape: f32[1,32], index: 5, kind: input, shape index: {}]
  %s6 = inlined_call_operand.vmem [shape: f32[344,32], index: 6, kind: input, shape index: {}]
  %s7 = inlined_call_operand.vmem [shape: f32[160,8], index: 7, kind: input, shape index: {}]
  %s8 = inlined_call_operand.hbm [shape: f32[8,128], index: 8, kind: output, shape index: {}]
  %s9 = sld [smem:[#allocation0]]
  $region42: #{tpu_custom_call.1} parent=0
    _
  %s11 = ssub.s32 1, %s9
  %s12 = scalar_select 0, %s11, %s9
  $region1: #{tpu_custom_call.1} parent=0
    #allocation2 [shape = 'u8[4096]{0}', space=vmem, size = 0x1000, scoped, tag = 'output window, operand 0, single buffered']
    #allocation3 [shape = 's32[1]{0}', space=sflag, size = 0x4, scoped, tag = 'scoped memory for tpu_custom_call.1']
    %13 = vsyncpa [#allocation3], 0
    // Predicated region
    $region2: #{tpu_custom_call.1} parent=1 // pred_check
      _
    $region3: #{tpu_custom_call.1} parent=1 // pred_check_branch
      %15 = sbr.rel (0) target = $region5
    $region4: #{tpu_custom_call.1} parent=1 // pred_region
      _
    $region5: #{tpu_custom_call.1} parent=1 // pred_fallthru
      _
    // Predicated region
    $region6: #{tpu_custom_call.1} parent=1 // pred_check
      _
    $region7: #{tpu_custom_call.1} parent=1 // pred_check_branch
      %17 = sbr.rel (0) target = $region9
    $region8: #{tpu_custom_call.1} parent=1 // pred_region
      _
    $region9: #{tpu_custom_call.1} parent=1 // pred_fallthru
      _
    // Predicated region
    $region10: #{tpu_custom_call.1} parent=1 // pred_check
      _
    $region11: #{tpu_custom_call.1} parent=1 // pred_check_branch
      %19 = sbr.rel (0) target = $region13
    $region12: #{tpu_custom_call.1} parent=1 // pred_region
      _
    $region13: #{tpu_custom_call.1} parent=1 // pred_fallthru
      _
    // Predicated region
    $region14: #{tpu_custom_call.1} parent=1 // pred_check
      _
    $region15: #{tpu_custom_call.1} parent=1 // pred_check_branch
      %21 = sbr.rel (0) target = $region17
    $region16: #{tpu_custom_call.1} parent=1 // pred_region
      _
    $region17: #{tpu_custom_call.1} parent=1 // pred_fallthru
      _
    // Predicated region
    $region18: #{tpu_custom_call.1} parent=1 // pred_check
      _
    $region19: #{tpu_custom_call.1} parent=1 // pred_check_branch
      %23 = sbr.rel (0) target = $region21
    $region20: #{tpu_custom_call.1} parent=1 // pred_region
      _
    $region21: #{tpu_custom_call.1} parent=1 // pred_fallthru
      _
    // Predicated region
    $region22: #{tpu_custom_call.1} parent=1 // pred_check
      _
    $region23: #{tpu_custom_call.1} parent=1 // pred_check_branch
      %25 = sbr.rel (0) target = $region25
    $region24: #{tpu_custom_call.1} parent=1 // pred_region
      _
    $region25: #{tpu_custom_call.1} parent=1 // pred_fallthru
      _
    // Predicated region
    $region26: #{tpu_custom_call.1} parent=1 // pred_check
      _
    $region27: #{tpu_custom_call.1} parent=1 // pred_check_branch
      %27 = sbr.rel (0) target = $region29
    $region28: #{tpu_custom_call.1} parent=1 // pred_region
      _
    $region29: #{tpu_custom_call.1} parent=1 // pred_fallthru
      _
    // Predicated region
    $region30: #{tpu_custom_call.1} parent=1 // pred_check
      _
    $region31: #{tpu_custom_call.1} parent=1 // pred_check_branch
      %29 = sbr.rel (0) target = $region33
    $region32: #{tpu_custom_call.1} parent=1 // pred_region
      _
    $region33: #{tpu_custom_call.1} parent=1 // pred_fallthru
      _
    %v30 = vld [vmem:[%s6 + $0x8] sm:$0xff]
    %v31 = vld [vmem:[%s6 + $0x10] sm:$0xff]
    %v32 = vld [vmem:[%s6 + $0x18] sm:$0xff]
    %v33 = vld [vmem:[%s6 + $0x20] sm:$0xff]
    %v34 = vld [vmem:[%s6 + $0x28] sm:$0xff]
    %v35 = vld [vmem:[%s6 + $0x30] sm:$0xff]
    %v36 = vld [vmem:[%s6 + $0x38] sm:$0xff]
    %v37 = vld [vmem:[%s6 + $0x40] sm:$0xff]
    %v38 = vld [vmem:[%s6 + $0x48] sm:$0xff]
    %v39 = vld [vmem:[%s6 + $0x50] sm:$0xff]
    %v40 = vld [vmem:[%s6 + $0x58] sm:$0xff]
    %v41 = vld [vmem:[%s6 + $0x60] sm:$0xff]
    %v42 = vld [vmem:[%s6 + $0x68] sm:$0xff]
    %v43 = vld [vmem:[%s6 + $0x70] sm:$0xff]
    %v44 = vld [vmem:[%s6 + $0x78] sm:$0xff]
    %v45 = vld [vmem:[%s6 + $0x80] sm:$0xff]
    %v46 = vld [vmem:[%s6 + $0x88] sm:$0xff]
    %v47 = vld [vmem:[%s6 + $0x90] sm:$0xff]
    %v48 = vld [vmem:[%s6 + $0x98] sm:$0xff]
    %v49 = vld [vmem:[%s6 + $0xa0] sm:$0xff]
    %v50 = vld [vmem:[%s6 + $0xa8] sm:$0xff]
    %v51 = vld [vmem:[%s6 + $0xb0] sm:$0xff]
    %v52 = vld [vmem:[%s6 + $0xb8] sm:$0xff]
    %v53 = vld [vmem:[%s6 + $0xc0] sm:$0xff]
    %v54 = vld [vmem:[%s6 + $0xc8] sm:$0xff]
    %v55 = vld [vmem:[%s6 + $0x128] sm:$0x1]
    %v56 = vld [vmem:[%s6 + $0x130] sm:$0x1]
    %v57 = vld [vmem:[%s6 + $0x138] sm:$0x1]
    %v58 = vld [vmem:[%s6 + $0x140] sm:$0x1]
    %v59 = vld [vmem:[%s6 + $0xd0] sm:$0xff]
    %v60 = vld [vmem:[%s6 + $0xd8] sm:$0xff]
    %v61 = vld [vmem:[%s6 + $0xe0] sm:$0xff]
    %v62 = vld [vmem:[%s6 + $0xe8] sm:$0xff]
    %v63 = vld [vmem:[%s6 + $0x148] sm:$0x1]
    %v64 = vld [vmem:[%s6 + $0xf0] sm:$0xff]
    %v65 = vld [vmem:[%s6 + $0xf8] sm:$0xff]
    %v66 = vld [vmem:[%s6 + $0x100] sm:$0xff]
    %v67 = vld [vmem:[%s6 + $0x108] sm:$0xff]
    %v68 = vld [vmem:[%s7] sm:$0xff]
    %v69 = vld [vmem:[%s7 + $0x8] sm:$0xff]
    %v70 = vld [vmem:[%s7 + $0x10] sm:$0xff]
    %v71 = vld [vmem:[%s7 + $0x18] sm:$0xff]
    %v72 = vld [vmem:[%s7 + $0x20] sm:$0xff]
    %v73 = vld [vmem:[%s7 + $0x28] sm:$0xff]
    %v74 = vld [vmem:[%s7 + $0x30] sm:$0xff]
    %v75 = vld [vmem:[%s7 + $0x38] sm:$0xff]
    %v76 = vld [vmem:[%s7 + $0x40] sm:$0xff]
    %v77 = vld [vmem:[%s7 + $0x48] sm:$0xff]
    %v78 = vld [vmem:[%s7 + $0x50] sm:$0xff]
    %v79 = vld [vmem:[%s7 + $0x58] sm:$0xff]
    %v80 = vld [vmem:[%s7 + $0x60] sm:$0xff]
    %v81 = vld [vmem:[%s7 + $0x68] sm:$0xff]
    %v82 = vld [vmem:[%s7 + $0x70] sm:$0xff]
    %v83 = vld [vmem:[%s7 + $0x78] sm:$0xff]
    %v84 = vld [vmem:[%s7 + $0x80] sm:$0x1]
    %v85 = vld [vmem:[%s7 + $0x88] sm:$0x1]
    %v86 = vld [vmem:[%s7 + $0x90] sm:$0x1]
    %v87 = vld [vmem:[%s7 + $0x98] sm:$0x1]
    %v88 = vld [vmem:[%s1] sm:$0xff]
    %v89 = vld [vmem:[%s6] sm:$0xf]
    %v90 = vld [vmem:[%s6 + $0x120] sm:$0x1]
    %v91 = vperm.slane %v90, 0
    %vm92 = vcmask 31744
    %v94 = vsel %vm92, %v88, 0
    %vm96 = vcmask 1043456
    %v98 = vsel %vm96, %v89, 0
    %100 = vmatpush.msra.mxu0 0.0
    %101 = vmatpush.msra.mxu0 0.0
    %102 = vmatpush.msra.mxu0 0.0
    %103 = vmatpush.msra.mxu0 0.0
    %104 = vmatpush.msra.mxu0 0.0
    %105 = vmatpush.msra.mxu0 0.0
    %106 = vmatpush.msra.mxu0 0.0
    %107 = vmatpush.msra.mxu0 0.0
    %108 = vmatpush.msra.mxu0 0.0
    %109 = vmatpush.msra.mxu0 0.0
    %110 = vmatpush.msra.mxu0 0.0
    %111 = vmatpush.msra.mxu0 0.0
    %112 = vmatpush.msra.mxu0 0.0
    %113 = vmatpush.msra.mxu0 0.0
    %114 = vmatpush.msra.mxu0 0.0
    %115 = vmatpush.msra.mxu0 %v98
    %116 = vmatmul.f32.gmra.mxu0 %v94
    %v117 = vpop.f32.mrf.mxu0
    %v118 = vadd.f32 %v91, %v117
    %119 = vdwg.mxu0
    %v120 = vld [vmem:[%s0] sm:$0xff]
    %v121 = vld [vmem:[%s6 + $0x110] sm:$0xff]
    %v122 = vld [vmem:[%s6 + $0x118] sm:$0xff]
    %v123 = vld [vmem:[%s6 + $0x150] sm:$0x1]
    %v124 = vperm.slane %v123, 0
    %vm125 = vcmask 130048
    %v127 = vsel %vm125, %v120, 0
    %129 = vmatpush.msra.mxu0 0.0
    %130 = vmatpush.msra.mxu0 0.0
    %131 = vmatpush.msra.mxu0 0.0
    %132 = vmatpush.msra.mxu0 0.0
    %133 = vmatpush.msra.mxu0 0.0
    %134 = vmatpush.msra.mxu0 0.0
    %135 = vmatpush.msra.mxu0 0.0
    %136 = vmatpush.msra.mxu0 0.0
    %137 = vmatpush.msra.mxu0 0.0
    %138 = vmatpush.msra.mxu0 0.0
    %139 = vmatpush.msra.mxu0 0.0
    %140 = vmatpush.msra.mxu0 0.0
    %141 = vmatpush.msra.mxu0 0.0
    %142 = vmatpush.msra.mxu0 0.0
    %143 = vmatpush.msra.mxu0 %v122
    %144 = vmatpush.msra.mxu0 %v121
    %145 = vmatmul.f32.gmra.mxu0 %v127
    %v146 = vpop.f32.mrf.mxu0
    %v147 = vadd.f32 %v124, %v146
    %148 = vdwg.mxu0
    %v149 = vld [vmem:[%s2] sm:$0xff]
    %v150 = vld [vmem:[%s3] sm:$0xff]
    %v151 = vld [vmem:[%s4] sm:$0x1]
    %v152 = vld [vmem:[%s5] sm:$0x1]
    %vm153 = vcmask 64512
    %v155 = vsel %vm153, %v151, 0
    %157 = vmatpush.msra.mxu0 0.0
    %158 = vmatpush.msra.mxu0 0.0
    %159 = vmatpush.msra.mxu0 0.0
    %160 = vmatpush.msra.mxu0 0.0
    %161 = vmatpush.msra.mxu0 0.0
    %162 = vmatpush.msra.mxu0 0.0
    %163 = vmatpush.msra.mxu0 0.0
    %164 = vmatpush.msra.mxu0 0.0
    %165 = vmatpush.msra.mxu0 0.0
    %166 = vmatpush.msra.mxu0 0.0
    %167 = vmatpush.msra.mxu0 0.0
    %168 = vmatpush.msra.mxu0 0.0
    %169 = vmatpush.msra.mxu0 0.0
    %170 = vmatpush.msra.mxu0 0.0
    %171 = vmatpush.msra.mxu0 0.0
    %172 = vmatpush.msra.mxu0 %v30
    %173 = vmatmul.f32.gmra.mxu0 %v155
    %v174 = vpop.f32.mrf.mxu0
    %v175 = vadd.f32 0.0, %v174
    %176 = vdwg.mxu0
    %v177 = vadd.f32 %v118, %v175
    %vm178 = vcmp.gt.f32.partialorder %v177, 0.0
    %v179 = vmin.f32 %v177, 0.0
    %v180 = vmul.f32 %v179, 1.442695
    %v181 = vpow.pop %v180
    %v182 = vsub.f32 %v181, 1.0
    %v183 = vsel %vm178, %v177, %v182
    %vm184 = vcmask 261120
    %v186 = vsel %vm184, %v152, 0
    %188 = vmatpush.msra.mxu0 0.0
    %189 = vmatpush.msra.mxu0 0.0
    %190 = vmatpush.msra.mxu0 0.0
    %191 = vmatpush.msra.mxu0 0.0
    %192 = vmatpush.msra.mxu0 0.0
    %193 = vmatpush.msra.mxu0 0.0
    %194 = vmatpush.msra.mxu0 0.0
    %195 = vmatpush.msra.mxu0 0.0
    %196 = vmatpush.msra.mxu0 0.0
    %197 = vmatpush.msra.mxu0 0.0
    %198 = vmatpush.msra.mxu0 0.0
    %199 = vmatpush.msra.mxu0 0.0
    %200 = vmatpush.msra.mxu0 %v46
    %201 = vmatpush.msra.mxu0 %v45
    %202 = vmatpush.msra.mxu0 %v44
    %203 = vmatpush.msra.mxu0 %v43
    %204 = vmatmul.f32.gmra.mxu0 %v186
    %v205 = vpop.f32.mrf.mxu0
    %v206 = vadd.f32 0.0, %v205
    %207 = vdwg.mxu0
    %v209 = vsel %vm184, %v183, 0
    %211 = vmatpush.msra.mxu0 0.0
    %212 = vmatpush.msra.mxu0 0.0
    %213 = vmatpush.msra.mxu0 0.0
    %214 = vmatpush.msra.mxu0 0.0
    %215 = vmatpush.msra.mxu0 0.0
    %216 = vmatpush.msra.mxu0 0.0
    %217 = vmatpush.msra.mxu0 0.0
    %218 = vmatpush.msra.mxu0 0.0
    %219 = vmatpush.msra.mxu0 0.0
    %220 = vmatpush.msra.mxu0 0.0
    %221 = vmatpush.msra.mxu0 0.0
    %222 = vmatpush.msra.mxu0 0.0
    %223 = vmatpush.msra.mxu0 %v34
    %224 = vmatpush.msra.mxu0 %v33
    %225 = vmatpush.msra.mxu0 %v32
    %226 = vmatpush.msra.mxu0 %v31
    %227 = vmatmul.f32.gmra.mxu0 %v209
    %v228 = vpop.f32.mrf.mxu0
    %v229 = vadd.f32 %v206, %v228
    %230 = vdwg.mxu0
    %v231 = vadd.f32 %v229, %v55
    %v232 = vsub.f32 0.0, %v231
    %v233 = vmul.f32 %v232, 1.442695
    %v234 = vpow.pop %v233
    %v235 = vadd.f32 %v234, 1.0
    %v236 = vrcp.pop %v235
    %v237 = vmul.f32 %v235, %v236
    %v238 = vsub.f32 1.0, %v237
    %v239 = vmul.f32 %v236, %v238
    %v240 = vadd.f32 %v236, %v239
    %vm241 = vweird.f32 %v235
    %vm242 = vweird.f32 %v236
    %vm243 = vmor %vm241, %vm242
    %v244 = vsel %vm243, %v236, %v240
    %v245 = vand.u32 2147483647, %v235
    %vm246 = vcmp.eq.f32.partialorder %v245, 8.507059e+37
    %v247 = vand.u32 %v235, 2147483648
    %v248 = vor.u32 1.1754944e-38, %v247
    %v249 = vsel %vm246, %v248, %v244
    %v250 = vmul.f32 1.0, %v249
    %251 = vmatpush.msra.mxu0 0.0
    %252 = vmatpush.msra.mxu0 0.0
    %253 = vmatpush.msra.mxu0 0.0
    %254 = vmatpush.msra.mxu0 0.0
    %255 = vmatpush.msra.mxu0 0.0
    %256 = vmatpush.msra.mxu0 0.0
    %257 = vmatpush.msra.mxu0 0.0
    %258 = vmatpush.msra.mxu0 0.0
    %259 = vmatpush.msra.mxu0 0.0
    %260 = vmatpush.msra.mxu0 0.0
    %261 = vmatpush.msra.mxu0 0.0
    %262 = vmatpush.msra.mxu0 0.0
    %263 = vmatpush.msra.mxu0 %v50
    %264 = vmatpush.msra.mxu0 %v49
    %265 = vmatpush.msra.mxu0 %v48
    %266 = vmatpush.msra.mxu0 %v47
    %267 = vmatmul.f32.gmra.mxu0 %v186
    %v268 = vpop.f32.mrf.mxu0
    %v269 = vadd.f32 0.0, %v268
    %270 = vdwg.mxu0
    %271 = vmatpush.msra.mxu0 0.0
    %272 = vmatpush.msra.mxu0 0.0
    %273 = vmatpush.msra.mxu0 0.0
    %274 = vmatpush.msra.mxu0 0.0
    %275 = vmatpush.msra.mxu0 0.0
    %276 = vmatpush.msra.mxu0 0.0
    %277 = vmatpush.msra.mxu0 0.0
    %278 = vmatpush.msra.mxu0 0.0
    %279 = vmatpush.msra.mxu0 0.0
    %280 = vmatpush.msra.mxu0 0.0
    %281 = vmatpush.msra.mxu0 0.0
    %282 = vmatpush.msra.mxu0 0.0
    %283 = vmatpush.msra.mxu0 %v38
    %284 = vmatpush.msra.mxu0 %v37
    %285 = vmatpush.msra.mxu0 %v36
    %286 = vmatpush.msra.mxu0 %v35
    %287 = vmatmul.f32.gmra.mxu0 %v209
    %v288 = vpop.f32.mrf.mxu0
    %v289 = vadd.f32 %v269, %v288
    %290 = vdwg.mxu0
    %v291 = vadd.f32 %v289, %v56
    %v292 = vsub.f32 0.0, %v291
    %v293 = vmul.f32 %v292, 1.442695
    %v294 = vpow.pop %v293
    %v295 = vadd.f32 %v294, 1.0
    %v296 = vrcp.pop %v295
    %v297 = vmul.f32 %v295, %v296
    %v298 = vsub.f32 1.0, %v297
    %v299 = vmul.f32 %v296, %v298
    %v300 = vadd.f32 %v296, %v299
    %vm301 = vweird.f32 %v295
    %vm302 = vweird.f32 %v296
    %vm303 = vmor %vm301, %vm302
    %v304 = vsel %vm303, %v296, %v300
    %v305 = vand.u32 2147483647, %v295
    %vm306 = vcmp.eq.f32.partialorder %v305, 8.507059e+37
    %v307 = vand.u32 %v295, 2147483648
    %v308 = vor.u32 1.1754944e-38, %v307
    %v309 = vsel %vm306, %v308, %v304
    %v310 = vmul.f32 1.0, %v309
    %311 = vmatpush.msra.mxu0 0.0
    %312 = vmatpush.msra.mxu0 0.0
    %313 = vmatpush.msra.mxu0 0.0
    %314 = vmatpush.msra.mxu0 0.0
    %315 = vmatpush.msra.mxu0 0.0
    %316 = vmatpush.msra.mxu0 0.0
    %317 = vmatpush.msra.mxu0 0.0
    %318 = vmatpush.msra.mxu0 0.0
    %319 = vmatpush.msra.mxu0 0.0
    %320 = vmatpush.msra.mxu0 0.0
    %321 = vmatpush.msra.mxu0 0.0
    %322 = vmatpush.msra.mxu0 0.0
    %323 = vmatpush.msra.mxu0 %v42
    %324 = vmatpush.msra.mxu0 %v41
    %325 = vmatpush.msra.mxu0 %v40
    %326 = vmatpush.msra.mxu0 %v39
    %327 = vmatmul.f32.gmra.mxu0 %v209
    %v328 = vpop.f32.mrf.mxu0
    %v329 = vadd.f32 %v57, %v328
    %330 = vdwg.mxu0
    %331 = vmatpush.msra.mxu0 0.0
    %332 = vmatpush.msra.mxu0 0.0
    %333 = vmatpush.msra.mxu0 0.0
    %334 = vmatpush.msra.mxu0 0.0
    %335 = vmatpush.msra.mxu0 0.0
    %336 = vmatpush.msra.mxu0 0.0
    %337 = vmatpush.msra.mxu0 0.0
    %338 = vmatpush.msra.mxu0 0.0
    %339 = vmatpush.msra.mxu0 0.0
    %340 = vmatpush.msra.mxu0 0.0
    %341 = vmatpush.msra.mxu0 0.0
    %342 = vmatpush.msra.mxu0 0.0
    %343 = vmatpush.msra.mxu0 %v54
    %344 = vmatpush.msra.mxu0 %v53
    %345 = vmatpush.msra.mxu0 %v52
    %346 = vmatpush.msra.mxu0 %v51
    %347 = vmatmul.f32.gmra.mxu0 %v186
    %v348 = vpop.f32.mrf.mxu0
    %v349 = vadd.f32 %v58, %v348
    %350 = vdwg.mxu0
    %v351 = vmul.f32 %v250, %v349
    %v352 = vadd.f32 %v329, %v351
    %v353 = vtanh.pop %v352
    %v354 = vsub.f32 1.0, %v310
    %v355 = vmul.f32 %v354, %v353
    %v356 = vmul.f32 %v310, %v152
    %v357 = vadd.f32 %v355, %v356
    %v359 = vsel %vm184, %v357, 0
    %361 = vmatpush.msra.mxu0 0.0
    %362 = vmatpush.msra.mxu0 0.0
    %363 = vmatpush.msra.mxu0 0.0
    %364 = vmatpush.msra.mxu0 0.0
    %365 = vmatpush.msra.mxu0 0.0
    %366 = vmatpush.msra.mxu0 0.0
    %367 = vmatpush.msra.mxu0 0.0
    %368 = vmatpush.msra.mxu0 0.0
    %369 = vmatpush.msra.mxu0 0.0
    %370 = vmatpush.msra.mxu0 0.0
    %371 = vmatpush.msra.mxu0 0.0
    %372 = vmatpush.msra.mxu0 0.0
    %373 = vmatpush.msra.mxu0 %v62
    %374 = vmatpush.msra.mxu0 %v61
    %375 = vmatpush.msra.mxu0 %v60
    %376 = vmatpush.msra.mxu0 %v59
    %377 = vmatmul.f32.gmra.mxu0 %v359
    %v378 = vpop.f32.mrf.mxu0
    %v379 = vadd.f32 %v63, %v378
    %380 = vdwg.mxu0
    %vm381 = vcmp.gt.f32.partialorder %v379, 0.0
    %v382 = vmin.f32 %v379, 0.0
    %v383 = vmul.f32 %v382, 1.442695
    %v384 = vpow.pop %v383
    %v385 = vsub.f32 %v384, 1.0
    %v386 = vsel %vm381, %v379, %v385
    %v388 = vsel %vm184, %v386, 0
    %390 = vmatpush.msra.mxu0 0.0
    %391 = vmatpush.msra.mxu0 0.0
    %392 = vmatpush.msra.mxu0 0.0
    %393 = vmatpush.msra.mxu0 0.0
    %394 = vmatpush.msra.mxu0 0.0
    %395 = vmatpush.msra.mxu0 0.0
    %396 = vmatpush.msra.mxu0 0.0
    %397 = vmatpush.msra.mxu0 0.0
    %398 = vmatpush.msra.mxu0 0.0
    %399 = vmatpush.msra.mxu0 0.0
    %400 = vmatpush.msra.mxu0 0.0
    %401 = vmatpush.msra.mxu0 0.0
    %402 = vmatpush.msra.mxu0 %v71
    %403 = vmatpush.msra.mxu0 %v70
    %404 = vmatpush.msra.mxu0 %v69
    %405 = vmatpush.msra.mxu0 %v68
    %406 = vmatmul.f32.gmra.mxu0 %v388
    %v407 = vpop.f32.mrf.mxu0
    %v408 = vadd.f32 %v84, %v407
    %409 = vdwg.mxu0
    %410 = vmatpush.msra.mxu0 0.0
    %411 = vmatpush.msra.mxu0 0.0
    %412 = vmatpush.msra.mxu0 0.0
    %413 = vmatpush.msra.mxu0 0.0
    %414 = vmatpush.msra.mxu0 0.0
    %415 = vmatpush.msra.mxu0 0.0
    %416 = vmatpush.msra.mxu0 0.0
    %417 = vmatpush.msra.mxu0 0.0
    %418 = vmatpush.msra.mxu0 0.0
    %419 = vmatpush.msra.mxu0 0.0
    %420 = vmatpush.msra.mxu0 0.0
    %421 = vmatpush.msra.mxu0 0.0
    %422 = vmatpush.msra.mxu0 %v75
    %423 = vmatpush.msra.mxu0 %v74
    %424 = vmatpush.msra.mxu0 %v73
    %425 = vmatpush.msra.mxu0 %v72
    %426 = vmatmul.f32.gmra.mxu0 %v388
    %v427 = vpop.f32.mrf.mxu0
    %v428 = vadd.f32 %v85, %v427
    %429 = vdwg.mxu0
    %v430 = vmax.f32 %v428, 0.0
    %v431 = vand.u32 2147483647, %v428
    %v432 = vsub.f32 0.0, %v431
    %v433 = vmul.f32 %v432, 1.442695
    %v434 = vpow.pop %v433
    %v435 = vadd.f32 %v434, 1.0
    %v436 = vlog2.pop %v435
    %v437 = vmul.f32 %v436, 0.6931472
    %v438 = vmul.f32 -0.5, %v434
    %v439 = vadd.f32 %v438, 1.0
    %v440 = vmul.f32 %v439, %v434
    %v441 = vand.u32 2147483647, %v434
    %vm442 = vcmp.lt.f32.partialorder %v441, 0.0004427343
    %v443 = vsel %vm442, %v440, %v437
    %v444 = vadd.f32 %v430, %v443
    %v445 = vadd.f32 %v444, 0.1
    %v446 = vadd.f32 %v445, 1000000.0
    %v447 = vadd.f32 %v408, 1000000.0
    %v448 = vmul.f32 %v446, %v149
    %v449 = vadd.f32 %v447, %v448
    %v450 = vadd.f32 %v449, 1000000.0
    %451 = vmatpush.msra.mxu0 0.0
    %452 = vmatpush.msra.mxu0 0.0
    %453 = vmatpush.msra.mxu0 0.0
    %454 = vmatpush.msra.mxu0 0.0
    %455 = vmatpush.msra.mxu0 0.0
    %456 = vmatpush.msra.mxu0 0.0
    %457 = vmatpush.msra.mxu0 0.0
    %458 = vmatpush.msra.mxu0 0.0
    %459 = vmatpush.msra.mxu0 0.0
    %460 = vmatpush.msra.mxu0 0.0
    %461 = vmatpush.msra.mxu0 0.0
    %462 = vmatpush.msra.mxu0 0.0
    %463 = vmatpush.msra.mxu0 %v67
    %464 = vmatpush.msra.mxu0 %v66
    %465 = vmatpush.msra.mxu0 %v65
    %466 = vmatpush.msra.mxu0 %v64
    %467 = vmatmul.f32.gmra.mxu0 %v359
    %v468 = vpop.f32.mrf.mxu0
    %v469 = vadd.f32 0.0, %v468
    %470 = vdwg.mxu0
    %v471 = vadd.f32 %v147, %v469
    %vm472 = vcmp.gt.f32.partialorder %v471, 0.0
    %v473 = vmin.f32 %v471, 0.0
    %v474 = vmul.f32 %v473, 1.442695
    %v475 = vpow.pop %v474
    %v476 = vsub.f32 %v475, 1.0
    %v477 = vsel %vm472, %v471, %v476
    %v479 = vsel %vm184, %v477, 0
    %481 = vmatpush.msra.mxu0 0.0
    %482 = vmatpush.msra.mxu0 0.0
    %483 = vmatpush.msra.mxu0 0.0
    %484 = vmatpush.msra.mxu0 0.0
    %485 = vmatpush.msra.mxu0 0.0
    %486 = vmatpush.msra.mxu0 0.0
    %487 = vmatpush.msra.mxu0 0.0
    %488 = vmatpush.msra.mxu0 0.0
    %489 = vmatpush.msra.mxu0 0.0
    %490 = vmatpush.msra.mxu0 0.0
    %491 = vmatpush.msra.mxu0 0.0
    %492 = vmatpush.msra.mxu0 0.0
    %493 = vmatpush.msra.mxu0 %v79
    %494 = vmatpush.msra.mxu0 %v78
    %495 = vmatpush.msra.mxu0 %v77
    %496 = vmatpush.msra.mxu0 %v76
    %497 = vmatmul.f32.gmra.mxu0 %v479
    %v498 = vpop.f32.mrf.mxu0
    %v499 = vadd.f32 %v86, %v498
    %500 = vdwg.mxu0
    %501 = vmatpush.msra.mxu0 0.0
    %502 = vmatpush.msra.mxu0 0.0
    %503 = vmatpush.msra.mxu0 0.0
    %504 = vmatpush.msra.mxu0 0.0
    %505 = vmatpush.msra.mxu0 0.0
    %506 = vmatpush.msra.mxu0 0.0
    %507 = vmatpush.msra.mxu0 0.0
    %508 = vmatpush.msra.mxu0 0.0
    %509 = vmatpush.msra.mxu0 0.0
    %510 = vmatpush.msra.mxu0 0.0
    %511 = vmatpush.msra.mxu0 0.0
    %512 = vmatpush.msra.mxu0 0.0
    %513 = vmatpush.msra.mxu0 %v83
    %514 = vmatpush.msra.mxu0 %v82
    %515 = vmatpush.msra.mxu0 %v81
    %516 = vmatpush.msra.mxu0 %v80
    %517 = vmatmul.f32.gmra.mxu0 %v479
    %v518 = vpop.f32.mrf.mxu0
    %v519 = vadd.f32 %v87, %v518
    %520 = vdwg.mxu0
    %v521 = vmax.f32 %v519, 0.0
    %v522 = vand.u32 2147483647, %v519
    %v523 = vsub.f32 0.0, %v522
    %v524 = vmul.f32 %v523, 1.442695
    %v525 = vpow.pop %v524
    %v526 = vadd.f32 %v525, 1.0
    %v527 = vlog2.pop %v526
    %v528 = vmul.f32 %v527, 0.6931472
    %v529 = vmul.f32 -0.5, %v525
    %v530 = vadd.f32 %v529, 1.0
    %v531 = vmul.f32 %v530, %v525
    %v532 = vand.u32 2147483647, %v525
    %vm533 = vcmp.lt.f32.partialorder %v532, 0.0004427343
    %v534 = vsel %vm533, %v531, %v528
    %v535 = vadd.f32 %v521, %v534
    %v536 = vadd.f32 %v535, 0.1
    %v537 = vmul.f32 %v536, %v150
    %v538 = vadd.f32 %v499, %v537
    %540 = vrot.lane.b32.xlu0 %v446, 8
    %v541 = vpop.permute.xlu0 %540
    %544 = vrot.lane.b32.xlu0 %v450, 16
    %v545 = vpop.permute.xlu0 %544
    %548 = vrot.lane.b32.xlu0 %v499, 24
    %v549 = vpop.permute.xlu0 %548
    %552 = vrot.lane.b32.xlu0 %v536, 32
    %v553 = vpop.permute.xlu0 %552
    %556 = vrot.lane.b32.xlu0 %v538, 40
    %v557 = vpop.permute.xlu0 %556
    %559 = vrot.lane.b32.xlu0 %v357, 48
    %v560 = vpop.permute.xlu0 %559
    %v562 = vsel %vm153, %v408, %v541
    %v563 = vsel %vm125, %v562, %v545
    %vm564 = vcmask 195584
    %v565 = vsel %vm564, %v563, %v549
    %v566 = vsel %vm184, %v565, %v553
    %vm567 = vcmask 326656
    %v568 = vsel %vm567, %v566, %v557
    %vm569 = vcmask 392192
    %v570 = vsel %vm569, %v568, %v560
    %vm571 = vcmask 654336
    %v572 = vsel %vm571, %v570, 0.0
    %v573 = vsel %vm153, %v538, 0
    %575 = vmatpush.msra.mxu0 0.0
    %576 = vmatpush.msra.mxu0 0.0
    %577 = vmatpush.msra.mxu0 0.0
    %578 = vmatpush.msra.mxu0 0.0
    %579 = vmatpush.msra.mxu0 0.0
    %580 = vmatpush.msra.mxu0 0.0
    %581 = vmatpush.msra.mxu0 0.0
    %582 = vmatpush.msra.mxu0 0.0
    %583 = vmatpush.msra.mxu0 0.0
    %584 = vmatpush.msra.mxu0 0.0
    %585 = vmatpush.msra.mxu0 0.0
    %586 = vmatpush.msra.mxu0 0.0
    %587 = vmatpush.msra.mxu0 0.0
    %588 = vmatpush.msra.mxu0 0.0
    %589 = vmatpush.msra.mxu0 0.0
    %590 = vmatpush.msra.mxu0 %v30
    %591 = vmatmul.f32.gmra.mxu0 %v573
    %v592 = vpop.f32.mrf.mxu0
    %v593 = vadd.f32 0.0, %v592
    %594 = vdwg.mxu0
    %v596 = vrot.slane %v593, 7
    %v598 = vadd.f32 %v118, %v596
    %vm599 = vcmp.gt.f32.partialorder %v598, 0.0
    %v600 = vmin.f32 %v598, 0.0
    %v601 = vmul.f32 %v600, 1.442695
    %v602 = vpow.pop %v601
    %v603 = vsub.f32 %v602, 1.0
    %v604 = vsel %vm599, %v598, %v603
    %605 = vmatpush.msra.mxu0 0.0
    %606 = vmatpush.msra.mxu0 0.0
    %607 = vmatpush.msra.mxu0 0.0
    %608 = vmatpush.msra.mxu0 0.0
    %609 = vmatpush.msra.mxu0 0.0
    %610 = vmatpush.msra.mxu0 0.0
    %611 = vmatpush.msra.mxu0 0.0
    %612 = vmatpush.msra.mxu0 0.0
    %613 = vmatpush.msra.mxu0 0.0
    %614 = vmatpush.msra.mxu0 0.0
    %615 = vmatpush.msra.mxu0 0.0
    %616 = vmatpush.msra.mxu0 0.0
    %617 = vmatpush.msra.mxu0 %v46
    %618 = vmatpush.msra.mxu0 %v45
    %619 = vmatpush.msra.mxu0 %v44
    %620 = vmatpush.msra.mxu0 %v43
    %621 = vmatmul.f32.gmra.mxu0 %v359
    %v622 = vpop.f32.mrf.mxu0
    %v623 = vadd.f32 0.0, %v622
    %624 = vdwg.mxu0
    %v626 = vrot.slane %v604, 1
    %v627 = vsel %vm184, %v626, 0
    %629 = vmatpush.msra.mxu0 0.0
    %630 = vmatpush.msra.mxu0 0.0
    %631 = vmatpush.msra.mxu0 0.0
    %632 = vmatpush.msra.mxu0 0.0
    %633 = vmatpush.msra.mxu0 0.0
    %634 = vmatpush.msra.mxu0 0.0
    %635 = vmatpush.msra.mxu0 0.0
    %636 = vmatpush.msra.mxu0 0.0
    %637 = vmatpush.msra.mxu0 0.0
    %638 = vmatpush.msra.mxu0 0.0
    %639 = vmatpush.msra.mxu0 0.0
    %640 = vmatpush.msra.mxu0 0.0
    %641 = vmatpush.msra.mxu0 %v34
    %642 = vmatpush.msra.mxu0 %v33
    %643 = vmatpush.msra.mxu0 %v32
    %644 = vmatpush.msra.mxu0 %v31
    %645 = vmatmul.f32.gmra.mxu0 %v627
    %v646 = vpop.f32.mrf.mxu0
    %v647 = vadd.f32 %v623, %v646
    %648 = vdwg.mxu0
    %v649 = vadd.f32 %v647, %v55
    %v650 = vsub.f32 0.0, %v649
    %v651 = vmul.f32 %v650, 1.442695
    %v652 = vpow.pop %v651
    %v653 = vadd.f32 %v652, 1.0
    %v654 = vrcp.pop %v653
    %v655 = vmul.f32 %v653, %v654
    %v656 = vsub.f32 1.0, %v655
    %v657 = vmul.f32 %v654, %v656
    %v658 = vadd.f32 %v654, %v657
    %vm659 = vweird.f32 %v653
    %vm660 = vweird.f32 %v654
    %vm661 = vmor %vm659, %vm660
    %v662 = vsel %vm661, %v654, %v658
    %v663 = vand.u32 2147483647, %v653
    %vm664 = vcmp.eq.f32.partialorder %v663, 8.507059e+37
    %v665 = vand.u32 %v653, 2147483648
    %v666 = vor.u32 1.1754944e-38, %v665
    %v667 = vsel %vm664, %v666, %v662
    %v668 = vmul.f32 1.0, %v667
    %669 = vmatpush.msra.mxu0 0.0
    %670 = vmatpush.msra.mxu0 0.0
    %671 = vmatpush.msra.mxu0 0.0
    %672 = vmatpush.msra.mxu0 0.0
    %673 = vmatpush.msra.mxu0 0.0
    %674 = vmatpush.msra.mxu0 0.0
    %675 = vmatpush.msra.mxu0 0.0
    %676 = vmatpush.msra.mxu0 0.0
    %677 = vmatpush.msra.mxu0 0.0
    %678 = vmatpush.msra.mxu0 0.0
    %679 = vmatpush.msra.mxu0 0.0
    %680 = vmatpush.msra.mxu0 0.0
    %681 = vmatpush.msra.mxu0 %v50
    %682 = vmatpush.msra.mxu0 %v49
    %683 = vmatpush.msra.mxu0 %v48
    %684 = vmatpush.msra.mxu0 %v47
    %685 = vmatmul.f32.gmra.mxu0 %v359
    %v686 = vpop.f32.mrf.mxu0
    %v687 = vadd.f32 0.0, %v686
    %688 = vdwg.mxu0
    %689 = vmatpush.msra.mxu0 0.0
    %690 = vmatpush.msra.mxu0 0.0
    %691 = vmatpush.msra.mxu0 0.0
    %692 = vmatpush.msra.mxu0 0.0
    %693 = vmatpush.msra.mxu0 0.0
    %694 = vmatpush.msra.mxu0 0.0
    %695 = vmatpush.msra.mxu0 0.0
    %696 = vmatpush.msra.mxu0 0.0
    %697 = vmatpush.msra.mxu0 0.0
    %698 = vmatpush.msra.mxu0 0.0
    %699 = vmatpush.msra.mxu0 0.0
    %700 = vmatpush.msra.mxu0 0.0
    %701 = vmatpush.msra.mxu0 %v38
    %702 = vmatpush.msra.mxu0 %v37
    %703 = vmatpush.msra.mxu0 %v36
    %704 = vmatpush.msra.mxu0 %v35
    %705 = vmatmul.f32.gmra.mxu0 %v627
    %v706 = vpop.f32.mrf.mxu0
    %v707 = vadd.f32 %v687, %v706
    %708 = vdwg.mxu0
    %v709 = vadd.f32 %v707, %v56
    %v710 = vsub.f32 0.0, %v709
    %v711 = vmul.f32 %v710, 1.442695
    %v712 = vpow.pop %v711
    %v713 = vadd.f32 %v712, 1.0
    %v714 = vrcp.pop %v713
    %v715 = vmul.f32 %v713, %v714
    %v716 = vsub.f32 1.0, %v715
    %v717 = vmul.f32 %v714, %v716
    %v718 = vadd.f32 %v714, %v717
    %vm719 = vweird.f32 %v713
    %vm720 = vweird.f32 %v714
    %vm721 = vmor %vm719, %vm720
    %v722 = vsel %vm721, %v714, %v718
    %v723 = vand.u32 2147483647, %v713
    %vm724 = vcmp.eq.f32.partialorder %v723, 8.507059e+37
    %v725 = vand.u32 %v713, 2147483648
    %v726 = vor.u32 1.1754944e-38, %v725
    %v727 = vsel %vm724, %v726, %v722
    %v728 = vmul.f32 1.0, %v727
    %729 = vmatpush.msra.mxu0 0.0
    %730 = vmatpush.msra.mxu0 0.0
    %731 = vmatpush.msra.mxu0 0.0
    %732 = vmatpush.msra.mxu0 0.0
    %733 = vmatpush.msra.mxu0 0.0
    %734 = vmatpush.msra.mxu0 0.0
    %735 = vmatpush.msra.mxu0 0.0
    %736 = vmatpush.msra.mxu0 0.0
    %737 = vmatpush.msra.mxu0 0.0
    %738 = vmatpush.msra.mxu0 0.0
    %739 = vmatpush.msra.mxu0 0.0
    %740 = vmatpush.msra.mxu0 0.0
    %741 = vmatpush.msra.mxu0 %v42
    %742 = vmatpush.msra.mxu0 %v41
    %743 = vmatpush.msra.mxu0 %v40
    %744 = vmatpush.msra.mxu0 %v39
    %745 = vmatmul.f32.gmra.mxu0 %v627
    %v746 = vpop.f32.mrf.mxu0
    %v747 = vadd.f32 %v57, %v746
    %748 = vdwg.mxu0
    %749 = vmatpush.msra.mxu0 0.0
    %750 = vmatpush.msra.mxu0 0.0
    %751 = vmatpush.msra.mxu0 0.0
    %752 = vmatpush.msra.mxu0 0.0
    %753 = vmatpush.msra.mxu0 0.0
    %754 = vmatpush.msra.mxu0 0.0
    %755 = vmatpush.msra.mxu0 0.0
    %756 = vmatpush.msra.mxu0 0.0
    %757 = vmatpush.msra.mxu0 0.0
    %758 = vmatpush.msra.mxu0 0.0
    %759 = vmatpush.msra.mxu0 0.0
    %760 = vmatpush.msra.mxu0 0.0
    %761 = vmatpush.msra.mxu0 %v54
    %762 = vmatpush.msra.mxu0 %v53
    %763 = vmatpush.msra.mxu0 %v52
    %764 = vmatpush.msra.mxu0 %v51
    %765 = vmatmul.f32.gmra.mxu0 %v359
    %v766 = vpop.f32.mrf.mxu0
    %v767 = vadd.f32 %v58, %v766
    %768 = vdwg.mxu0
    %v769 = vmul.f32 %v668, %v767
    %v770 = vadd.f32 %v747, %v769
    %v771 = vtanh.pop %v770
    %v772 = vsub.f32 1.0, %v728
    %v773 = vmul.f32 %v772, %v771
    %v774 = vmul.f32 %v728, %v357
    %v775 = vadd.f32 %v773, %v774
    %v777 = vsel %vm184, %v775, 0
    %779 = vmatpush.msra.mxu0 0.0
    %780 = vmatpush.msra.mxu0 0.0
    %781 = vmatpush.msra.mxu0 0.0
    %782 = vmatpush.msra.mxu0 0.0
    %783 = vmatpush.msra.mxu0 0.0
    %784 = vmatpush.msra.mxu0 0.0
    %785 = vmatpush.msra.mxu0 0.0
    %786 = vmatpush.msra.mxu0 0.0
    %787 = vmatpush.msra.mxu0 0.0
    %788 = vmatpush.msra.mxu0 0.0
    %789 = vmatpush.msra.mxu0 0.0
    %790 = vmatpush.msra.mxu0 0.0
    %791 = vmatpush.msra.mxu0 %v62
    %792 = vmatpush.msra.mxu0 %v61
    %793 = vmatpush.msra.mxu0 %v60
    %794 = vmatpush.msra.mxu0 %v59
    %795 = vmatmul.f32.gmra.mxu0 %v777
    %v796 = vpop.f32.mrf.mxu0
    %v797 = vadd.f32 %v63, %v796
    %798 = vdwg.mxu0
    %vm799 = vcmp.gt.f32.partialorder %v797, 0.0
    %v800 = vmin.f32 %v797, 0.0
    %v801 = vmul.f32 %v800, 1.442695
    %v802 = vpow.pop %v801
    %v803 = vsub.f32 %v802, 1.0
    %v804 = vsel %vm799, %v797, %v803
    %v806 = vsel %vm184, %v804, 0
    %808 = vmatpush.msra.mxu0 0.0
    %809 = vmatpush.msra.mxu0 0.0
    %810 = vmatpush.msra.mxu0 0.0
    %811 = vmatpush.msra.mxu0 0.0
    %812 = vmatpush.msra.mxu0 0.0
    %813 = vmatpush.msra.mxu0 0.0
    %814 = vmatpush.msra.mxu0 0.0
    %815 = vmatpush.msra.mxu0 0.0
    %816 = vmatpush.msra.mxu0 0.0
    %817 = vmatpush.msra.mxu0 0.0
    %818 = vmatpush.msra.mxu0 0.0
    %819 = vmatpush.msra.mxu0 0.0
    %820 = vmatpush.msra.mxu0 %v71
    %821 = vmatpush.msra.mxu0 %v70
    %822 = vmatpush.msra.mxu0 %v69
    %823 = vmatpush.msra.mxu0 %v68
    %824 = vmatmul.f32.gmra.mxu0 %v806
    %v825 = vpop.f32.mrf.mxu0
    %v826 = vadd.f32 %v84, %v825
    %827 = vdwg.mxu0
    %828 = vmatpush.msra.mxu0 0.0
    %829 = vmatpush.msra.mxu0 0.0
    %830 = vmatpush.msra.mxu0 0.0
    %831 = vmatpush.msra.mxu0 0.0
    %832 = vmatpush.msra.mxu0 0.0
    %833 = vmatpush.msra.mxu0 0.0
    %834 = vmatpush.msra.mxu0 0.0
    %835 = vmatpush.msra.mxu0 0.0
    %836 = vmatpush.msra.mxu0 0.0
    %837 = vmatpush.msra.mxu0 0.0
    %838 = vmatpush.msra.mxu0 0.0
    %839 = vmatpush.msra.mxu0 0.0
    %840 = vmatpush.msra.mxu0 %v75
    %841 = vmatpush.msra.mxu0 %v74
    %842 = vmatpush.msra.mxu0 %v73
    %843 = vmatpush.msra.mxu0 %v72
    %844 = vmatmul.f32.gmra.mxu0 %v806
    %v845 = vpop.f32.mrf.mxu0
    %v846 = vadd.f32 %v85, %v845
    %847 = vdwg.mxu0
    %v848 = vmax.f32 %v846, 0.0
    %v849 = vand.u32 2147483647, %v846
    %v850 = vsub.f32 0.0, %v849
    %v851 = vmul.f32 %v850, 1.442695
    %v852 = vpow.pop %v851
    %v853 = vadd.f32 %v852, 1.0
    %v854 = vlog2.pop %v853
    %v855 = vmul.f32 %v854, 0.6931472
    %v856 = vmul.f32 -0.5, %v852
    %v857 = vadd.f32 %v856, 1.0
    %v858 = vmul.f32 %v857, %v852
    %v859 = vand.u32 2147483647, %v852
    %vm860 = vcmp.lt.f32.partialorder %v859, 0.0004427343
    %v861 = vsel %vm860, %v858, %v855
    %v862 = vadd.f32 %v848, %v861
    %v863 = vadd.f32 %v862, 0.1
    %v864 = vadd.f32 %v863, 1000000.0
    %v865 = vadd.f32 %v826, 1000000.0
    %v867 = vrot.slane %v149, 1
    %v869 = vmul.f32 %v864, %v867
    %v870 = vadd.f32 %v865, %v869
    %v871 = vadd.f32 %v870, 1000000.0
    %872 = vmatpush.msra.mxu0 0.0
    %873 = vmatpush.msra.mxu0 0.0
    %874 = vmatpush.msra.mxu0 0.0
    %875 = vmatpush.msra.mxu0 0.0
    %876 = vmatpush.msra.mxu0 0.0
    %877 = vmatpush.msra.mxu0 0.0
    %878 = vmatpush.msra.mxu0 0.0
    %879 = vmatpush.msra.mxu0 0.0
    %880 = vmatpush.msra.mxu0 0.0
    %881 = vmatpush.msra.mxu0 0.0
    %882 = vmatpush.msra.mxu0 0.0
    %883 = vmatpush.msra.mxu0 0.0
    %884 = vmatpush.msra.mxu0 %v67
    %885 = vmatpush.msra.mxu0 %v66
    %886 = vmatpush.msra.mxu0 %v65
    %887 = vmatpush.msra.mxu0 %v64
    %888 = vmatmul.f32.gmra.mxu0 %v777
    %v889 = vpop.f32.mrf.mxu0
    %v890 = vadd.f32 0.0, %v889
    %891 = vdwg.mxu0
    %v893 = vrot.slane %v890, 7
    %v895 = vadd.f32 %v147, %v893
    %vm896 = vcmp.gt.f32.partialorder %v895, 0.0
    %v897 = vmin.f32 %v895, 0.0
    %v898 = vmul.f32 %v897, 1.442695
    %v899 = vpow.pop %v898
    %v900 = vsub.f32 %v899, 1.0
    %v901 = vsel %vm896, %v895, %v900
    %v903 = vrot.slane %v901, 1
    %v904 = vsel %vm184, %v903, 0
    %906 = vmatpush.msra.mxu0 0.0
    %907 = vmatpush.msra.mxu0 0.0
    %908 = vmatpush.msra.mxu0 0.0
    %909 = vmatpush.msra.mxu0 0.0
    %910 = vmatpush.msra.mxu0 0.0
    %911 = vmatpush.msra.mxu0 0.0
    %912 = vmatpush.msra.mxu0 0.0
    %913 = vmatpush.msra.mxu0 0.0
    %914 = vmatpush.msra.mxu0 0.0
    %915 = vmatpush.msra.mxu0 0.0
    %916 = vmatpush.msra.mxu0 0.0
    %917 = vmatpush.msra.mxu0 0.0
    %918 = vmatpush.msra.mxu0 %v79
    %919 = vmatpush.msra.mxu0 %v78
    %920 = vmatpush.msra.mxu0 %v77
    %921 = vmatpush.msra.mxu0 %v76
    %922 = vmatmul.f32.gmra.mxu0 %v904
    %v923 = vpop.f32.mrf.mxu0
    %v924 = vadd.f32 %v86, %v923
    %925 = vdwg.mxu0
    %926 = vmatpush.msra.mxu0 0.0
    %927 = vmatpush.msra.mxu0 0.0
    %928 = vmatpush.msra.mxu0 0.0
    %929 = vmatpush.msra.mxu0 0.0
    %930 = vmatpush.msra.mxu0 0.0
    %931 = vmatpush.msra.mxu0 0.0
    %932 = vmatpush.msra.mxu0 0.0
    %933 = vmatpush.msra.mxu0 0.0
    %934 = vmatpush.msra.mxu0 0.0
    %935 = vmatpush.msra.mxu0 0.0
    %936 = vmatpush.msra.mxu0 0.0
    %937 = vmatpush.msra.mxu0 0.0
    %938 = vmatpush.msra.mxu0 %v83
    %939 = vmatpush.msra.mxu0 %v82
    %940 = vmatpush.msra.mxu0 %v81
    %941 = vmatpush.msra.mxu0 %v80
    %942 = vmatmul.f32.gmra.mxu0 %v904
    %v943 = vpop.f32.mrf.mxu0
    %v944 = vadd.f32 %v87, %v943
    %945 = vdwg.mxu0
    %v946 = vmax.f32 %v944, 0.0
    %v947 = vand.u32 2147483647, %v944
    %v948 = vsub.f32 0.0, %v947
    %v949 = vmul.f32 %v948, 1.442695
    %v950 = vpow.pop %v949
    %v951 = vadd.f32 %v950, 1.0
    %v952 = vlog2.pop %v951
    %v953 = vmul.f32 %v952, 0.6931472
    %v954 = vmul.f32 -0.5, %v950
    %v955 = vadd.f32 %v954, 1.0
    %v956 = vmul.f32 %v955, %v950
    %v957 = vand.u32 2147483647, %v950
    %vm958 = vcmp.lt.f32.partialorder %v957, 0.0004427343
    %v959 = vsel %vm958, %v956, %v953
    %v960 = vadd.f32 %v946, %v959
    %v961 = vadd.f32 %v960, 0.1
    %v963 = vrot.slane %v150, 1
    %v965 = vmul.f32 %v961, %v963
    %v966 = vadd.f32 %v924, %v965
    %968 = vrot.lane.b32.xlu0 %v864, 8
    %v969 = vpop.permute.xlu0 %968
    %972 = vrot.lane.b32.xlu0 %v871, 16
    %v973 = vpop.permute.xlu0 %972
    %976 = vrot.lane.b32.xlu0 %v924, 24
    %v977 = vpop.permute.xlu0 %976
    %980 = vrot.lane.b32.xlu0 %v961, 32
    %v981 = vpop.permute.xlu0 %980
    %984 = vrot.lane.b32.xlu0 %v966, 40
    %v985 = vpop.permute.xlu0 %984
    %987 = vrot.lane.b32.xlu0 %v775, 48
    %v988 = vpop.permute.xlu0 %987
    %v990 = vsel %vm153, %v826, %v969
    %v991 = vsel %vm125, %v990, %v973
    %v992 = vsel %vm564, %v991, %v977
    %v993 = vsel %vm184, %v992, %v981
    %v994 = vsel %vm567, %v993, %v985
    %v995 = vsel %vm569, %v994, %v988
    %v996 = vsel %vm571, %v995, 0.0
    %v997 = vsel %vm153, %v966, 0
    %999 = vmatpush.msra.mxu0 0.0
    %1000 = vmatpush.msra.mxu0 0.0
    %1001 = vmatpush.msra.mxu0 0.0
    %1002 = vmatpush.msra.mxu0 0.0
    %1003 = vmatpush.msra.mxu0 0.0
    %1004 = vmatpush.msra.mxu0 0.0
    %1005 = vmatpush.msra.mxu0 0.0
    %1006 = vmatpush.msra.mxu0 0.0
    %1007 = vmatpush.msra.mxu0 0.0
    %1008 = vmatpush.msra.mxu0 0.0
    %1009 = vmatpush.msra.mxu0 0.0
    %1010 = vmatpush.msra.mxu0 0.0
    %1011 = vmatpush.msra.mxu0 0.0
    %1012 = vmatpush.msra.mxu0 0.0
    %1013 = vmatpush.msra.mxu0 0.0
    %1014 = vmatpush.msra.mxu0 %v30
    %1015 = vmatmul.f32.gmra.mxu0 %v997
    %v1016 = vpop.f32.mrf.mxu0
    %v1017 = vadd.f32 0.0, %v1016
    %1018 = vdwg.mxu0
    %v1020 = vrot.slane %v1017, 6
    %v1022 = vadd.f32 %v118, %v1020
    %vm1023 = vcmp.gt.f32.partialorder %v1022, 0.0
    %v1024 = vmin.f32 %v1022, 0.0
    %v1025 = vmul.f32 %v1024, 1.442695
    %v1026 = vpow.pop %v1025
    %v1027 = vsub.f32 %v1026, 1.0
    %v1028 = vsel %vm1023, %v1022, %v1027
    %1029 = vmatpush.msra.mxu0 0.0
    %1030 = vmatpush.msra.mxu0 0.0
    %1031 = vmatpush.msra.mxu0 0.0
    %1032 = vmatpush.msra.mxu0 0.0
    %1033 = vmatpush.msra.mxu0 0.0
    %1034 = vmatpush.msra.mxu0 0.0
    %1035 = vmatpush.msra.mxu0 0.0
    %1036 = vmatpush.msra.mxu0 0.0
    %1037 = vmatpush.msra.mxu0 0.0
    %1038 = vmatpush.msra.mxu0 0.0
    %1039 = vmatpush.msra.mxu0 0.0
    %1040 = vmatpush.msra.mxu0 0.0
    %1041 = vmatpush.msra.mxu0 %v46
    %1042 = vmatpush.msra.mxu0 %v45
    %1043 = vmatpush.msra.mxu0 %v44
    %1044 = vmatpush.msra.mxu0 %v43
    %1045 = vmatmul.f32.gmra.mxu0 %v777
    %v1046 = vpop.f32.mrf.mxu0
    %v1047 = vadd.f32 0.0, %v1046
    %1048 = vdwg.mxu0
    %v1050 = vrot.slane %v1028, 2
    %v1051 = vsel %vm184, %v1050, 0
    %1053 = vmatpush.msra.mxu0 0.0
    %1054 = vmatpush.msra.mxu0 0.0
    %1055 = vmatpush.msra.mxu0 0.0
    %1056 = vmatpush.msra.mxu0 0.0
    %1057 = vmatpush.msra.mxu0 0.0
    %1058 = vmatpush.msra.mxu0 0.0
    %1059 = vmatpush.msra.mxu0 0.0
    %1060 = vmatpush.msra.mxu0 0.0
    %1061 = vmatpush.msra.mxu0 0.0
    %1062 = vmatpush.msra.mxu0 0.0
    %1063 = vmatpush.msra.mxu0 0.0
    %1064 = vmatpush.msra.mxu0 0.0
    %1065 = vmatpush.msra.mxu0 %v34
    %1066 = vmatpush.msra.mxu0 %v33
    %1067 = vmatpush.msra.mxu0 %v32
    %1068 = vmatpush.msra.mxu0 %v31
    %1069 = vmatmul.f32.gmra.mxu0 %v1051
    %v1070 = vpop.f32.mrf.mxu0
    %v1071 = vadd.f32 %v1047, %v1070
    %1072 = vdwg.mxu0
    %v1073 = vadd.f32 %v1071, %v55
    %v1074 = vsub.f32 0.0, %v1073
    %v1075 = vmul.f32 %v1074, 1.442695
    %v1076 = vpow.pop %v1075
    %v1077 = vadd.f32 %v1076, 1.0
    %v1078 = vrcp.pop %v1077
    %v1079 = vmul.f32 %v1077, %v1078
    %v1080 = vsub.f32 1.0, %v1079
    %v1081 = vmul.f32 %v1078, %v1080
    %v1082 = vadd.f32 %v1078, %v1081
    %vm1083 = vweird.f32 %v1077
    %vm1084 = vweird.f32 %v1078
    %vm1085 = vmor %vm1083, %vm1084
    %v1086 = vsel %vm1085, %v1078, %v1082
    %v1087 = vand.u32 2147483647, %v1077
    %vm1088 = vcmp.eq.f32.partialorder %v1087, 8.507059e+37
    %v1089 = vand.u32 %v1077, 2147483648
    %v1090 = vor.u32 1.1754944e-38, %v1089
    %v1091 = vsel %vm1088, %v1090, %v1086
    %v1092 = vmul.f32 1.0, %v1091
    %1093 = vmatpush.msra.mxu0 0.0
    %1094 = vmatpush.msra.mxu0 0.0
    %1095 = vmatpush.msra.mxu0 0.0
    %1096 = vmatpush.msra.mxu0 0.0
    %1097 = vmatpush.msra.mxu0 0.0
    %1098 = vmatpush.msra.mxu0 0.0
    %1099 = vmatpush.msra.mxu0 0.0
    %1100 = vmatpush.msra.mxu0 0.0
    %1101 = vmatpush.msra.mxu0 0.0
    %1102 = vmatpush.msra.mxu0 0.0
    %1103 = vmatpush.msra.mxu0 0.0
    %1104 = vmatpush.msra.mxu0 0.0
    %1105 = vmatpush.msra.mxu0 %v50
    %1106 = vmatpush.msra.mxu0 %v49
    %1107 = vmatpush.msra.mxu0 %v48
    %1108 = vmatpush.msra.mxu0 %v47
    %1109 = vmatmul.f32.gmra.mxu0 %v777
    %v1110 = vpop.f32.mrf.mxu0
    %v1111 = vadd.f32 0.0, %v1110
    %1112 = vdwg.mxu0
    %1113 = vmatpush.msra.mxu0 0.0
    %1114 = vmatpush.msra.mxu0 0.0
    %1115 = vmatpush.msra.mxu0 0.0
    %1116 = vmatpush.msra.mxu0 0.0
    %1117 = vmatpush.msra.mxu0 0.0
    %1118 = vmatpush.msra.mxu0 0.0
    %1119 = vmatpush.msra.mxu0 0.0
    %1120 = vmatpush.msra.mxu0 0.0
    %1121 = vmatpush.msra.mxu0 0.0
    %1122 = vmatpush.msra.mxu0 0.0
    %1123 = vmatpush.msra.mxu0 0.0
    %1124 = vmatpush.msra.mxu0 0.0
    %1125 = vmatpush.msra.mxu0 %v38
    %1126 = vmatpush.msra.mxu0 %v37
    %1127 = vmatpush.msra.mxu0 %v36
    %1128 = vmatpush.msra.mxu0 %v35
    %1129 = vmatmul.f32.gmra.mxu0 %v1051
    %v1130 = vpop.f32.mrf.mxu0
    %v1131 = vadd.f32 %v1111, %v1130
    %1132 = vdwg.mxu0
    %v1133 = vadd.f32 %v1131, %v56
    %v1134 = vsub.f32 0.0, %v1133
    %v1135 = vmul.f32 %v1134, 1.442695
    %v1136 = vpow.pop %v1135
    %v1137 = vadd.f32 %v1136, 1.0
    %v1138 = vrcp.pop %v1137
    %v1139 = vmul.f32 %v1137, %v1138
    %v1140 = vsub.f32 1.0, %v1139
    %v1141 = vmul.f32 %v1138, %v1140
    %v1142 = vadd.f32 %v1138, %v1141
    %vm1143 = vweird.f32 %v1137
    %vm1144 = vweird.f32 %v1138
    %vm1145 = vmor %vm1143, %vm1144
    %v1146 = vsel %vm1145, %v1138, %v1142
    %v1147 = vand.u32 2147483647, %v1137
    %vm1148 = vcmp.eq.f32.partialorder %v1147, 8.507059e+37
    %v1149 = vand.u32 %v1137, 2147483648
    %v1150 = vor.u32 1.1754944e-38, %v1149
    %v1151 = vsel %vm1148, %v1150, %v1146
    %v1152 = vmul.f32 1.0, %v1151
    %1153 = vmatpush.msra.mxu0 0.0
    %1154 = vmatpush.msra.mxu0 0.0
    %1155 = vmatpush.msra.mxu0 0.0
    %1156 = vmatpush.msra.mxu0 0.0
    %1157 = vmatpush.msra.mxu0 0.0
    %1158 = vmatpush.msra.mxu0 0.0
    %1159 = vmatpush.msra.mxu0 0.0
    %1160 = vmatpush.msra.mxu0 0.0
    %1161 = vmatpush.msra.mxu0 0.0
    %1162 = vmatpush.msra.mxu0 0.0
    %1163 = vmatpush.msra.mxu0 0.0
    %1164 = vmatpush.msra.mxu0 0.0
    %1165 = vmatpush.msra.mxu0 %v42
    %1166 = vmatpush.msra.mxu0 %v41
    %1167 = vmatpush.msra.mxu0 %v40
    %1168 = vmatpush.msra.mxu0 %v39
    %1169 = vmatmul.f32.gmra.mxu0 %v1051
    %v1170 = vpop.f32.mrf.mxu0
    %v1171 = vadd.f32 %v57, %v1170
    %1172 = vdwg.mxu0
    %1173 = vmatpush.msra.mxu0 0.0
    %1174 = vmatpush.msra.mxu0 0.0
    %1175 = vmatpush.msra.mxu0 0.0
    %1176 = vmatpush.msra.mxu0 0.0
    %1177 = vmatpush.msra.mxu0 0.0
    %1178 = vmatpush.msra.mxu0 0.0
    %1179 = vmatpush.msra.mxu0 0.0
    %1180 = vmatpush.msra.mxu0 0.0
    %1181 = vmatpush.msra.mxu0 0.0
    %1182 = vmatpush.msra.mxu0 0.0
    %1183 = vmatpush.msra.mxu0 0.0
    %1184 = vmatpush.msra.mxu0 0.0
    %1185 = vmatpush.msra.mxu0 %v54
    %1186 = vmatpush.msra.mxu0 %v53
    %1187 = vmatpush.msra.mxu0 %v52
    %1188 = vmatpush.msra.mxu0 %v51
    %1189 = vmatmul.f32.gmra.mxu0 %v777
    %v1190 = vpop.f32.mrf.mxu0
    %v1191 = vadd.f32 %v58, %v1190
    %1192 = vdwg.mxu0
    %v1193 = vmul.f32 %v1092, %v1191
    %v1194 = vadd.f32 %v1171, %v1193
    %v1195 = vtanh.pop %v1194
    %v1196 = vsub.f32 1.0, %v1152
    %v1197 = vmul.f32 %v1196, %v1195
    %v1198 = vmul.f32 %v1152, %v775
    %v1199 = vadd.f32 %v1197, %v1198
    %v1201 = vsel %vm184, %v1199, 0
    %1203 = vmatpush.msra.mxu0 0.0
    %1204 = vmatpush.msra.mxu0 0.0
    %1205 = vmatpush.msra.mxu0 0.0
    %1206 = vmatpush.msra.mxu0 0.0
    %1207 = vmatpush.msra.mxu0 0.0
    %1208 = vmatpush.msra.mxu0 0.0
    %1209 = vmatpush.msra.mxu0 0.0
    %1210 = vmatpush.msra.mxu0 0.0
    %1211 = vmatpush.msra.mxu0 0.0
    %1212 = vmatpush.msra.mxu0 0.0
    %1213 = vmatpush.msra.mxu0 0.0
    %1214 = vmatpush.msra.mxu0 0.0
    %1215 = vmatpush.msra.mxu0 %v62
    %1216 = vmatpush.msra.mxu0 %v61
    %1217 = vmatpush.msra.mxu0 %v60
    %1218 = vmatpush.msra.mxu0 %v59
    %1219 = vmatmul.f32.gmra.mxu0 %v1201
    %v1220 = vpop.f32.mrf.mxu0
    %v1221 = vadd.f32 %v63, %v1220
    %1222 = vdwg.mxu0
    %vm1223 = vcmp.gt.f32.partialorder %v1221, 0.0
    %v1224 = vmin.f32 %v1221, 0.0
    %v1225 = vmul.f32 %v1224, 1.442695
    %v1226 = vpow.pop %v1225
    %v1227 = vsub.f32 %v1226, 1.0
    %v1228 = vsel %vm1223, %v1221, %v1227
    %v1230 = vsel %vm184, %v1228, 0
    %1232 = vmatpush.msra.mxu0 0.0
    %1233 = vmatpush.msra.mxu0 0.0
    %1234 = vmatpush.msra.mxu0 0.0
    %1235 = vmatpush.msra.mxu0 0.0
    %1236 = vmatpush.msra.mxu0 0.0
    %1237 = vmatpush.msra.mxu0 0.0
    %1238 = vmatpush.msra.mxu0 0.0
    %1239 = vmatpush.msra.mxu0 0.0
    %1240 = vmatpush.msra.mxu0 0.0
    %1241 = vmatpush.msra.mxu0 0.0
    %1242 = vmatpush.msra.mxu0 0.0
    %1243 = vmatpush.msra.mxu0 0.0
    %1244 = vmatpush.msra.mxu0 %v71
    %1245 = vmatpush.msra.mxu0 %v70
    %1246 = vmatpush.msra.mxu0 %v69
    %1247 = vmatpush.msra.mxu0 %v68
    %1248 = vmatmul.f32.gmra.mxu0 %v1230
    %v1249 = vpop.f32.mrf.mxu0
    %v1250 = vadd.f32 %v84, %v1249
    %1251 = vdwg.mxu0
    %1252 = vmatpush.msra.mxu0 0.0
    %1253 = vmatpush.msra.mxu0 0.0
    %1254 = vmatpush.msra.mxu0 0.0
    %1255 = vmatpush.msra.mxu0 0.0
    %1256 = vmatpush.msra.mxu0 0.0
    %1257 = vmatpush.msra.mxu0 0.0
    %1258 = vmatpush.msra.mxu0 0.0
    %1259 = vmatpush.msra.mxu0 0.0
    %1260 = vmatpush.msra.mxu0 0.0
    %1261 = vmatpush.msra.mxu0 0.0
    %1262 = vmatpush.msra.mxu0 0.0
    %1263 = vmatpush.msra.mxu0 0.0
    %1264 = vmatpush.msra.mxu0 %v75
    %1265 = vmatpush.msra.mxu0 %v74
    %1266 = vmatpush.msra.mxu0 %v73
    %1267 = vmatpush.msra.mxu0 %v72
    %1268 = vmatmul.f32.gmra.mxu0 %v1230
    %v1269 = vpop.f32.mrf.mxu0
    %v1270 = vadd.f32 %v85, %v1269
    %1271 = vdwg.mxu0
    %v1272 = vmax.f32 %v1270, 0.0
    %v1273 = vand.u32 2147483647, %v1270
    %v1274 = vsub.f32 0.0, %v1273
    %v1275 = vmul.f32 %v1274, 1.442695
    %v1276 = vpow.pop %v1275
    %v1277 = vadd.f32 %v1276, 1.0
    %v1278 = vlog2.pop %v1277
    %v1279 = vmul.f32 %v1278, 0.6931472
    %v1280 = vmul.f32 -0.5, %v1276
    %v1281 = vadd.f32 %v1280, 1.0
    %v1282 = vmul.f32 %v1281, %v1276
    %v1283 = vand.u32 2147483647, %v1276
    %vm1284 = vcmp.lt.f32.partialorder %v1283, 0.0004427343
    %v1285 = vsel %vm1284, %v1282, %v1279
    %v1286 = vadd.f32 %v1272, %v1285
    %v1287 = vadd.f32 %v1286, 0.1
    %v1288 = vadd.f32 %v1287, 1000000.0
    %v1289 = vadd.f32 %v1250, 1000000.0
    %v1290 = vrot.slane %v149, 2
    %v1292 = vmul.f32 %v1288, %v1290
    %v1293 = vadd.f32 %v1289, %v1292
    %v1294 = vadd.f32 %v1293, 1000000.0
    %1295 = vmatpush.msra.mxu0 0.0
    %1296 = vmatpush.msra.mxu0 0.0
    %1297 = vmatpush.msra.mxu0 0.0
    %1298 = vmatpush.msra.mxu0 0.0
    %1299 = vmatpush.msra.mxu0 0.0
    %1300 = vmatpush.msra.mxu0 0.0
    %1301 = vmatpush.msra.mxu0 0.0
    %1302 = vmatpush.msra.mxu0 0.0
    %1303 = vmatpush.msra.mxu0 0.0
    %1304 = vmatpush.msra.mxu0 0.0
    %1305 = vmatpush.msra.mxu0 0.0
    %1306 = vmatpush.msra.mxu0 0.0
    %1307 = vmatpush.msra.mxu0 %v67
    %1308 = vmatpush.msra.mxu0 %v66
    %1309 = vmatpush.msra.mxu0 %v65
    %1310 = vmatpush.msra.mxu0 %v64
    %1311 = vmatmul.f32.gmra.mxu0 %v1201
    %v1312 = vpop.f32.mrf.mxu0
    %v1313 = vadd.f32 0.0, %v1312
    %1314 = vdwg.mxu0
    %v1316 = vrot.slane %v1313, 6
    %v1318 = vadd.f32 %v147, %v1316
    %vm1319 = vcmp.gt.f32.partialorder %v1318, 0.0
    %v1320 = vmin.f32 %v1318, 0.0
    %v1321 = vmul.f32 %v1320, 1.442695
    %v1322 = vpow.pop %v1321
    %v1323 = vsub.f32 %v1322, 1.0
    %v1324 = vsel %vm1319, %v1318, %v1323
    %v1326 = vrot.slane %v1324, 2
    %v1327 = vsel %vm184, %v1326, 0
    %1329 = vmatpush.msra.mxu0 0.0
    %1330 = vmatpush.msra.mxu0 0.0
    %1331 = vmatpush.msra.mxu0 0.0
    %1332 = vmatpush.msra.mxu0 0.0
    %1333 = vmatpush.msra.mxu0 0.0
    %1334 = vmatpush.msra.mxu0 0.0
    %1335 = vmatpush.msra.mxu0 0.0
    %1336 = vmatpush.msra.mxu0 0.0
    %1337 = vmatpush.msra.mxu0 0.0
    %1338 = vmatpush.msra.mxu0 0.0
    %1339 = vmatpush.msra.mxu0 0.0
    %1340 = vmatpush.msra.mxu0 0.0
    %1341 = vmatpush.msra.mxu0 %v79
    %1342 = vmatpush.msra.mxu0 %v78
    %1343 = vmatpush.msra.mxu0 %v77
    %1344 = vmatpush.msra.mxu0 %v76
    %1345 = vmatmul.f32.gmra.mxu0 %v1327
    %v1346 = vpop.f32.mrf.mxu0
    %v1347 = vadd.f32 %v86, %v1346
    %1348 = vdwg.mxu0
    %1349 = vmatpush.msra.mxu0 0.0
    %1350 = vmatpush.msra.mxu0 0.0
    %1351 = vmatpush.msra.mxu0 0.0
    %1352 = vmatpush.msra.mxu0 0.0
    %1353 = vmatpush.msra.mxu0 0.0
    %1354 = vmatpush.msra.mxu0 0.0
    %1355 = vmatpush.msra.mxu0 0.0
    %1356 = vmatpush.msra.mxu0 0.0
    %1357 = vmatpush.msra.mxu0 0.0
    %1358 = vmatpush.msra.mxu0 0.0
    %1359 = vmatpush.msra.mxu0 0.0
    %1360 = vmatpush.msra.mxu0 0.0
    %1361 = vmatpush.msra.mxu0 %v83
    %1362 = vmatpush.msra.mxu0 %v82
    %1363 = vmatpush.msra.mxu0 %v81
    %1364 = vmatpush.msra.mxu0 %v80
    %1365 = vmatmul.f32.gmra.mxu0 %v1327
    %v1366 = vpop.f32.mrf.mxu0
    %v1367 = vadd.f32 %v87, %v1366
    %1368 = vdwg.mxu0
    %v1369 = vmax.f32 %v1367, 0.0
    %v1370 = vand.u32 2147483647, %v1367
    %v1371 = vsub.f32 0.0, %v1370
    %v1372 = vmul.f32 %v1371, 1.442695
    %v1373 = vpow.pop %v1372
    %v1374 = vadd.f32 %v1373, 1.0
    %v1375 = vlog2.pop %v1374
    %v1376 = vmul.f32 %v1375, 0.6931472
    %v1377 = vmul.f32 -0.5, %v1373
    %v1378 = vadd.f32 %v1377, 1.0
    %v1379 = vmul.f32 %v1378, %v1373
    %v1380 = vand.u32 2147483647, %v1373
    %vm1381 = vcmp.lt.f32.partialorder %v1380, 0.0004427343
    %v1382 = vsel %vm1381, %v1379, %v1376
    %v1383 = vadd.f32 %v1369, %v1382
    %v1384 = vadd.f32 %v1383, 0.1
    %v1385 = vrot.slane %v150, 2
    %v1387 = vmul.f32 %v1384, %v1385
    %v1388 = vadd.f32 %v1347, %v1387
    %1390 = vrot.lane.b32.xlu0 %v1288, 8
    %v1391 = vpop.permute.xlu0 %1390
    %1394 = vrot.lane.b32.xlu0 %v1294, 16
    %v1395 = vpop.permute.xlu0 %1394
    %1398 = vrot.lane.b32.xlu0 %v1347, 24
    %v1399 = vpop.permute.xlu0 %1398
    %1402 = vrot.lane.b32.xlu0 %v1384, 32
    %v1403 = vpop.permute.xlu0 %1402
    %1406 = vrot.lane.b32.xlu0 %v1388, 40
    %v1407 = vpop.permute.xlu0 %1406
    %1409 = vrot.lane.b32.xlu0 %v1199, 48
    %v1410 = vpop.permute.xlu0 %1409
    %v1412 = vsel %vm153, %v1250, %v1391
    %v1413 = vsel %vm125, %v1412, %v1395
    %v1414 = vsel %vm564, %v1413, %v1399
    %v1415 = vsel %vm184, %v1414, %v1403
    %v1416 = vsel %vm567, %v1415, %v1407
    %v1417 = vsel %vm569, %v1416, %v1410
    %v1418 = vsel %vm571, %v1417, 0.0
    %v1419 = vsel %vm153, %v1388, 0
    %1421 = vmatpush.msra.mxu0 0.0
    %1422 = vmatpush.msra.mxu0 0.0
    %1423 = vmatpush.msra.mxu0 0.0
    %1424 = vmatpush.msra.mxu0 0.0
    %1425 = vmatpush.msra.mxu0 0.0
    %1426 = vmatpush.msra.mxu0 0.0
    %1427 = vmatpush.msra.mxu0 0.0
    %1428 = vmatpush.msra.mxu0 0.0
    %1429 = vmatpush.msra.mxu0 0.0
    %1430 = vmatpush.msra.mxu0 0.0
    %1431 = vmatpush.msra.mxu0 0.0
    %1432 = vmatpush.msra.mxu0 0.0
    %1433 = vmatpush.msra.mxu0 0.0
    %1434 = vmatpush.msra.mxu0 0.0
    %1435 = vmatpush.msra.mxu0 0.0
    %1436 = vmatpush.msra.mxu0 %v30
    %1437 = vmatmul.f32.gmra.mxu0 %v1419
    %v1438 = vpop.f32.mrf.mxu0
    %v1439 = vadd.f32 0.0, %v1438
    %1440 = vdwg.mxu0
    %v1442 = vrot.slane %v1439, 5
    %v1444 = vadd.f32 %v118, %v1442
    %vm1445 = vcmp.gt.f32.partialorder %v1444, 0.0
    %v1446 = vmin.f32 %v1444, 0.0
    %v1447 = vmul.f32 %v1446, 1.442695
    %v1448 = vpow.pop %v1447
    %v1449 = vsub.f32 %v1448, 1.0
    %v1450 = vsel %vm1445, %v1444, %v1449
    %1451 = vmatpush.msra.mxu0 0.0
    %1452 = vmatpush.msra.mxu0 0.0
    %1453 = vmatpush.msra.mxu0 0.0
    %1454 = vmatpush.msra.mxu0 0.0
    %1455 = vmatpush.msra.mxu0 0.0
    %1456 = vmatpush.msra.mxu0 0.0
    %1457 = vmatpush.msra.mxu0 0.0
    %1458 = vmatpush.msra.mxu0 0.0
    %1459 = vmatpush.msra.mxu0 0.0
    %1460 = vmatpush.msra.mxu0 0.0
    %1461 = vmatpush.msra.mxu0 0.0
    %1462 = vmatpush.msra.mxu0 0.0
    %1463 = vmatpush.msra.mxu0 %v46
    %1464 = vmatpush.msra.mxu0 %v45
    %1465 = vmatpush.msra.mxu0 %v44
    %1466 = vmatpush.msra.mxu0 %v43
    %1467 = vmatmul.f32.gmra.mxu0 %v1201
    %v1468 = vpop.f32.mrf.mxu0
    %v1469 = vadd.f32 0.0, %v1468
    %1470 = vdwg.mxu0
    %v1472 = vrot.slane %v1450, 3
    %v1473 = vsel %vm184, %v1472, 0
    %1475 = vmatpush.msra.mxu0 0.0
    %1476 = vmatpush.msra.mxu0 0.0
    %1477 = vmatpush.msra.mxu0 0.0
    %1478 = vmatpush.msra.mxu0 0.0
    %1479 = vmatpush.msra.mxu0 0.0
    %1480 = vmatpush.msra.mxu0 0.0
    %1481 = vmatpush.msra.mxu0 0.0
    %1482 = vmatpush.msra.mxu0 0.0
    %1483 = vmatpush.msra.mxu0 0.0
    %1484 = vmatpush.msra.mxu0 0.0
    %1485 = vmatpush.msra.mxu0 0.0
    %1486 = vmatpush.msra.mxu0 0.0
    %1487 = vmatpush.msra.mxu0 %v34
    %1488 = vmatpush.msra.mxu0 %v33
    %1489 = vmatpush.msra.mxu0 %v32
    %1490 = vmatpush.msra.mxu0 %v31
    %1491 = vmatmul.f32.gmra.mxu0 %v1473
    %v1492 = vpop.f32.mrf.mxu0
    %v1493 = vadd.f32 %v1469, %v1492
    %1494 = vdwg.mxu0
    %v1495 = vadd.f32 %v1493, %v55
    %v1496 = vsub.f32 0.0, %v1495
    %v1497 = vmul.f32 %v1496, 1.442695
    %v1498 = vpow.pop %v1497
    %v1499 = vadd.f32 %v1498, 1.0
    %v1500 = vrcp.pop %v1499
    %v1501 = vmul.f32 %v1499, %v1500
    %v1502 = vsub.f32 1.0, %v1501
    %v1503 = vmul.f32 %v1500, %v1502
    %v1504 = vadd.f32 %v1500, %v1503
    %vm1505 = vweird.f32 %v1499
    %vm1506 = vweird.f32 %v1500
    %vm1507 = vmor %vm1505, %vm1506
    %v1508 = vsel %vm1507, %v1500, %v1504
    %v1509 = vand.u32 2147483647, %v1499
    %vm1510 = vcmp.eq.f32.partialorder %v1509, 8.507059e+37
    %v1511 = vand.u32 %v1499, 2147483648
    %v1512 = vor.u32 1.1754944e-38, %v1511
    %v1513 = vsel %vm1510, %v1512, %v1508
    %v1514 = vmul.f32 1.0, %v1513
    %1515 = vmatpush.msra.mxu0 0.0
    %1516 = vmatpush.msra.mxu0 0.0
    %1517 = vmatpush.msra.mxu0 0.0
    %1518 = vmatpush.msra.mxu0 0.0
    %1519 = vmatpush.msra.mxu0 0.0
    %1520 = vmatpush.msra.mxu0 0.0
    %1521 = vmatpush.msra.mxu0 0.0
    %1522 = vmatpush.msra.mxu0 0.0
    %1523 = vmatpush.msra.mxu0 0.0
    %1524 = vmatpush.msra.mxu0 0.0
    %1525 = vmatpush.msra.mxu0 0.0
    %1526 = vmatpush.msra.mxu0 0.0
    %1527 = vmatpush.msra.mxu0 %v50
    %1528 = vmatpush.msra.mxu0 %v49
    %1529 = vmatpush.msra.mxu0 %v48
    %1530 = vmatpush.msra.mxu0 %v47
    %1531 = vmatmul.f32.gmra.mxu0 %v1201
    %v1532 = vpop.f32.mrf.mxu0
    %v1533 = vadd.f32 0.0, %v1532
    %1534 = vdwg.mxu0
    %1535 = vmatpush.msra.mxu0 0.0
    %1536 = vmatpush.msra.mxu0 0.0
    %1537 = vmatpush.msra.mxu0 0.0
    %1538 = vmatpush.msra.mxu0 0.0
    %1539 = vmatpush.msra.mxu0 0.0
    %1540 = vmatpush.msra.mxu0 0.0
    %1541 = vmatpush.msra.mxu0 0.0
    %1542 = vmatpush.msra.mxu0 0.0
    %1543 = vmatpush.msra.mxu0 0.0
    %1544 = vmatpush.msra.mxu0 0.0
    %1545 = vmatpush.msra.mxu0 0.0
    %1546 = vmatpush.msra.mxu0 0.0
    %1547 = vmatpush.msra.mxu0 %v38
    %1548 = vmatpush.msra.mxu0 %v37
    %1549 = vmatpush.msra.mxu0 %v36
    %1550 = vmatpush.msra.mxu0 %v35
    %1551 = vmatmul.f32.gmra.mxu0 %v1473
    %v1552 = vpop.f32.mrf.mxu0
    %v1553 = vadd.f32 %v1533, %v1552
    %1554 = vdwg.mxu0
    %v1555 = vadd.f32 %v1553, %v56
    %v1556 = vsub.f32 0.0, %v1555
    %v1557 = vmul.f32 %v1556, 1.442695
    %v1558 = vpow.pop %v1557
    %v1559 = vadd.f32 %v1558, 1.0
    %v1560 = vrcp.pop %v1559
    %v1561 = vmul.f32 %v1559, %v1560
    %v1562 = vsub.f32 1.0, %v1561
    %v1563 = vmul.f32 %v1560, %v1562
    %v1564 = vadd.f32 %v1560, %v1563
    %vm1565 = vweird.f32 %v1559
    %vm1566 = vweird.f32 %v1560
    %vm1567 = vmor %vm1565, %vm1566
    %v1568 = vsel %vm1567, %v1560, %v1564
    %v1569 = vand.u32 2147483647, %v1559
    %vm1570 = vcmp.eq.f32.partialorder %v1569, 8.507059e+37
    %v1571 = vand.u32 %v1559, 2147483648
    %v1572 = vor.u32 1.1754944e-38, %v1571
    %v1573 = vsel %vm1570, %v1572, %v1568
    %v1574 = vmul.f32 1.0, %v1573
    %1575 = vmatpush.msra.mxu0 0.0
    %1576 = vmatpush.msra.mxu0 0.0
    %1577 = vmatpush.msra.mxu0 0.0
    %1578 = vmatpush.msra.mxu0 0.0
    %1579 = vmatpush.msra.mxu0 0.0
    %1580 = vmatpush.msra.mxu0 0.0
    %1581 = vmatpush.msra.mxu0 0.0
    %1582 = vmatpush.msra.mxu0 0.0
    %1583 = vmatpush.msra.mxu0 0.0
    %1584 = vmatpush.msra.mxu0 0.0
    %1585 = vmatpush.msra.mxu0 0.0
    %1586 = vmatpush.msra.mxu0 0.0
    %1587 = vmatpush.msra.mxu0 %v42
    %1588 = vmatpush.msra.mxu0 %v41
    %1589 = vmatpush.msra.mxu0 %v40
    %1590 = vmatpush.msra.mxu0 %v39
    %1591 = vmatmul.f32.gmra.mxu0 %v1473
    %v1592 = vpop.f32.mrf.mxu0
    %v1593 = vadd.f32 %v57, %v1592
    %1594 = vdwg.mxu0
    %1595 = vmatpush.msra.mxu0 0.0
    %1596 = vmatpush.msra.mxu0 0.0
    %1597 = vmatpush.msra.mxu0 0.0
    %1598 = vmatpush.msra.mxu0 0.0
    %1599 = vmatpush.msra.mxu0 0.0
    %1600 = vmatpush.msra.mxu0 0.0
    %1601 = vmatpush.msra.mxu0 0.0
    %1602 = vmatpush.msra.mxu0 0.0
    %1603 = vmatpush.msra.mxu0 0.0
    %1604 = vmatpush.msra.mxu0 0.0
    %1605 = vmatpush.msra.mxu0 0.0
    %1606 = vmatpush.msra.mxu0 0.0
    %1607 = vmatpush.msra.mxu0 %v54
    %1608 = vmatpush.msra.mxu0 %v53
    %1609 = vmatpush.msra.mxu0 %v52
    %1610 = vmatpush.msra.mxu0 %v51
    %1611 = vmatmul.f32.gmra.mxu0 %v1201
    %v1612 = vpop.f32.mrf.mxu0
    %v1613 = vadd.f32 %v58, %v1612
    %1614 = vdwg.mxu0
    %v1615 = vmul.f32 %v1514, %v1613
    %v1616 = vadd.f32 %v1593, %v1615
    %v1617 = vtanh.pop %v1616
    %v1618 = vsub.f32 1.0, %v1574
    %v1619 = vmul.f32 %v1618, %v1617
    %v1620 = vmul.f32 %v1574, %v1199
    %v1621 = vadd.f32 %v1619, %v1620
    %v1623 = vsel %vm184, %v1621, 0
    %1625 = vmatpush.msra.mxu0 0.0
    %1626 = vmatpush.msra.mxu0 0.0
    %1627 = vmatpush.msra.mxu0 0.0
    %1628 = vmatpush.msra.mxu0 0.0
    %1629 = vmatpush.msra.mxu0 0.0
    %1630 = vmatpush.msra.mxu0 0.0
    %1631 = vmatpush.msra.mxu0 0.0
    %1632 = vmatpush.msra.mxu0 0.0
    %1633 = vmatpush.msra.mxu0 0.0
    %1634 = vmatpush.msra.mxu0 0.0
    %1635 = vmatpush.msra.mxu0 0.0
    %1636 = vmatpush.msra.mxu0 0.0
    %1637 = vmatpush.msra.mxu0 %v62
    %1638 = vmatpush.msra.mxu0 %v61
    %1639 = vmatpush.msra.mxu0 %v60
    %1640 = vmatpush.msra.mxu0 %v59
    %1641 = vmatmul.f32.gmra.mxu0 %v1623
    %v1642 = vpop.f32.mrf.mxu0
    %v1643 = vadd.f32 %v63, %v1642
    %1644 = vdwg.mxu0
    %vm1645 = vcmp.gt.f32.partialorder %v1643, 0.0
    %v1646 = vmin.f32 %v1643, 0.0
    %v1647 = vmul.f32 %v1646, 1.442695
    %v1648 = vpow.pop %v1647
    %v1649 = vsub.f32 %v1648, 1.0
    %v1650 = vsel %vm1645, %v1643, %v1649
    %v1652 = vsel %vm184, %v1650, 0
    %1654 = vmatpush.msra.mxu0 0.0
    %1655 = vmatpush.msra.mxu0 0.0
    %1656 = vmatpush.msra.mxu0 0.0
    %1657 = vmatpush.msra.mxu0 0.0
    %1658 = vmatpush.msra.mxu0 0.0
    %1659 = vmatpush.msra.mxu0 0.0
    %1660 = vmatpush.msra.mxu0 0.0
    %1661 = vmatpush.msra.mxu0 0.0
    %1662 = vmatpush.msra.mxu0 0.0
    %1663 = vmatpush.msra.mxu0 0.0
    %1664 = vmatpush.msra.mxu0 0.0
    %1665 = vmatpush.msra.mxu0 0.0
    %1666 = vmatpush.msra.mxu0 %v71
    %1667 = vmatpush.msra.mxu0 %v70
    %1668 = vmatpush.msra.mxu0 %v69
    %1669 = vmatpush.msra.mxu0 %v68
    %1670 = vmatmul.f32.gmra.mxu0 %v1652
    %v1671 = vpop.f32.mrf.mxu0
    %v1672 = vadd.f32 %v84, %v1671
    %1673 = vdwg.mxu0
    %1674 = vmatpush.msra.mxu0 0.0
    %1675 = vmatpush.msra.mxu0 0.0
    %1676 = vmatpush.msra.mxu0 0.0
    %1677 = vmatpush.msra.mxu0 0.0
    %1678 = vmatpush.msra.mxu0 0.0
    %1679 = vmatpush.msra.mxu0 0.0
    %1680 = vmatpush.msra.mxu0 0.0
    %1681 = vmatpush.msra.mxu0 0.0
    %1682 = vmatpush.msra.mxu0 0.0
    %1683 = vmatpush.msra.mxu0 0.0
    %1684 = vmatpush.msra.mxu0 0.0
    %1685 = vmatpush.msra.mxu0 0.0
    %1686 = vmatpush.msra.mxu0 %v75
    %1687 = vmatpush.msra.mxu0 %v74
    %1688 = vmatpush.msra.mxu0 %v73
    %1689 = vmatpush.msra.mxu0 %v72
    %1690 = vmatmul.f32.gmra.mxu0 %v1652
    %v1691 = vpop.f32.mrf.mxu0
    %v1692 = vadd.f32 %v85, %v1691
    %1693 = vdwg.mxu0
    %v1694 = vmax.f32 %v1692, 0.0
    %v1695 = vand.u32 2147483647, %v1692
    %v1696 = vsub.f32 0.0, %v1695
    %v1697 = vmul.f32 %v1696, 1.442695
    %v1698 = vpow.pop %v1697
    %v1699 = vadd.f32 %v1698, 1.0
    %v1700 = vlog2.pop %v1699
    %v1701 = vmul.f32 %v1700, 0.6931472
    %v1702 = vmul.f32 -0.5, %v1698
    %v1703 = vadd.f32 %v1702, 1.0
    %v1704 = vmul.f32 %v1703, %v1698
    %v1705 = vand.u32 2147483647, %v1698
    %vm1706 = vcmp.lt.f32.partialorder %v1705, 0.0004427343
    %v1707 = vsel %vm1706, %v1704, %v1701
    %v1708 = vadd.f32 %v1694, %v1707
    %v1709 = vadd.f32 %v1708, 0.1
    %v1710 = vadd.f32 %v1709, 1000000.0
    %v1711 = vadd.f32 %v1672, 1000000.0
    %v1712 = vrot.slane %v149, 3
    %v1714 = vmul.f32 %v1710, %v1712
    %v1715 = vadd.f32 %v1711, %v1714
    %v1716 = vadd.f32 %v1715, 1000000.0
    %1717 = vmatpush.msra.mxu0 0.0
    %1718 = vmatpush.msra.mxu0 0.0
    %1719 = vmatpush.msra.mxu0 0.0
    %1720 = vmatpush.msra.mxu0 0.0
    %1721 = vmatpush.msra.mxu0 0.0
    %1722 = vmatpush.msra.mxu0 0.0
    %1723 = vmatpush.msra.mxu0 0.0
    %1724 = vmatpush.msra.mxu0 0.0
    %1725 = vmatpush.msra.mxu0 0.0
    %1726 = vmatpush.msra.mxu0 0.0
    %1727 = vmatpush.msra.mxu0 0.0
    %1728 = vmatpush.msra.mxu0 0.0
    %1729 = vmatpush.msra.mxu0 %v67
    %1730 = vmatpush.msra.mxu0 %v66
    %1731 = vmatpush.msra.mxu0 %v65
    %1732 = vmatpush.msra.mxu0 %v64
    %1733 = vmatmul.f32.gmra.mxu0 %v1623
    %v1734 = vpop.f32.mrf.mxu0
    %v1735 = vadd.f32 0.0, %v1734
    %1736 = vdwg.mxu0
    %v1738 = vrot.slane %v1735, 5
    %v1740 = vadd.f32 %v147, %v1738
    %vm1741 = vcmp.gt.f32.partialorder %v1740, 0.0
    %v1742 = vmin.f32 %v1740, 0.0
    %v1743 = vmul.f32 %v1742, 1.442695
    %v1744 = vpow.pop %v1743
    %v1745 = vsub.f32 %v1744, 1.0
    %v1746 = vsel %vm1741, %v1740, %v1745
    %v1748 = vrot.slane %v1746, 3
    %v1749 = vsel %vm184, %v1748, 0
    %1751 = vmatpush.msra.mxu0 0.0
    %1752 = vmatpush.msra.mxu0 0.0
    %1753 = vmatpush.msra.mxu0 0.0
    %1754 = vmatpush.msra.mxu0 0.0
    %1755 = vmatpush.msra.mxu0 0.0
    %1756 = vmatpush.msra.mxu0 0.0
    %1757 = vmatpush.msra.mxu0 0.0
    %1758 = vmatpush.msra.mxu0 0.0
    %1759 = vmatpush.msra.mxu0 0.0
    %1760 = vmatpush.msra.mxu0 0.0
    %1761 = vmatpush.msra.mxu0 0.0
    %1762 = vmatpush.msra.mxu0 0.0
    %1763 = vmatpush.msra.mxu0 %v79
    %1764 = vmatpush.msra.mxu0 %v78
    %1765 = vmatpush.msra.mxu0 %v77
    %1766 = vmatpush.msra.mxu0 %v76
    %1767 = vmatmul.f32.gmra.mxu0 %v1749
    %v1768 = vpop.f32.mrf.mxu0
    %v1769 = vadd.f32 %v86, %v1768
    %1770 = vdwg.mxu0
    %1771 = vmatpush.msra.mxu0 0.0
    %1772 = vmatpush.msra.mxu0 0.0
    %1773 = vmatpush.msra.mxu0 0.0
    %1774 = vmatpush.msra.mxu0 0.0
    %1775 = vmatpush.msra.mxu0 0.0
    %1776 = vmatpush.msra.mxu0 0.0
    %1777 = vmatpush.msra.mxu0 0.0
    %1778 = vmatpush.msra.mxu0 0.0
    %1779 = vmatpush.msra.mxu0 0.0
    %1780 = vmatpush.msra.mxu0 0.0
    %1781 = vmatpush.msra.mxu0 0.0
    %1782 = vmatpush.msra.mxu0 0.0
    %1783 = vmatpush.msra.mxu0 %v83
    %1784 = vmatpush.msra.mxu0 %v82
    %1785 = vmatpush.msra.mxu0 %v81
    %1786 = vmatpush.msra.mxu0 %v80
    %1787 = vmatmul.f32.gmra.mxu0 %v1749
    %v1788 = vpop.f32.mrf.mxu0
    %v1789 = vadd.f32 %v87, %v1788
    %1790 = vdwg.mxu0
    %v1791 = vmax.f32 %v1789, 0.0
    %v1792 = vand.u32 2147483647, %v1789
    %v1793 = vsub.f32 0.0, %v1792
    %v1794 = vmul.f32 %v1793, 1.442695
    %v1795 = vpow.pop %v1794
    %v1796 = vadd.f32 %v1795, 1.0
    %v1797 = vlog2.pop %v1796
    %v1798 = vmul.f32 %v1797, 0.6931472
    %v1799 = vmul.f32 -0.5, %v1795
    %v1800 = vadd.f32 %v1799, 1.0
    %v1801 = vmul.f32 %v1800, %v1795
    %v1802 = vand.u32 2147483647, %v1795
    %vm1803 = vcmp.lt.f32.partialorder %v1802, 0.0004427343
    %v1804 = vsel %vm1803, %v1801, %v1798
    %v1805 = vadd.f32 %v1791, %v1804
    %v1806 = vadd.f32 %v1805, 0.1
    %v1807 = vrot.slane %v150, 3
    %v1809 = vmul.f32 %v1806, %v1807
    %v1810 = vadd.f32 %v1769, %v1809
    %1812 = vrot.lane.b32.xlu0 %v1710, 8
    %v1813 = vpop.permute.xlu0 %1812
    %1816 = vrot.lane.b32.xlu0 %v1716, 16
    %v1817 = vpop.permute.xlu0 %1816
    %1820 = vrot.lane.b32.xlu0 %v1769, 24
    %v1821 = vpop.permute.xlu0 %1820
    %1824 = vrot.lane.b32.xlu0 %v1806, 32
    %v1825 = vpop.permute.xlu0 %1824
    %1828 = vrot.lane.b32.xlu0 %v1810, 40
    %v1829 = vpop.permute.xlu0 %1828
    %1831 = vrot.lane.b32.xlu0 %v1621, 48
    %v1832 = vpop.permute.xlu0 %1831
    %v1834 = vsel %vm153, %v1672, %v1813
    %v1835 = vsel %vm125, %v1834, %v1817
    %v1836 = vsel %vm564, %v1835, %v1821
    %v1837 = vsel %vm184, %v1836, %v1825
    %v1838 = vsel %vm567, %v1837, %v1829
    %v1839 = vsel %vm569, %v1838, %v1832
    %v1840 = vsel %vm571, %v1839, 0.0
    %v1841 = vsel %vm153, %v1810, 0
    %1843 = vmatpush.msra.mxu0 0.0
    %1844 = vmatpush.msra.mxu0 0.0
    %1845 = vmatpush.msra.mxu0 0.0
    %1846 = vmatpush.msra.mxu0 0.0
    %1847 = vmatpush.msra.mxu0 0.0
    %1848 = vmatpush.msra.mxu0 0.0
    %1849 = vmatpush.msra.mxu0 0.0
    %1850 = vmatpush.msra.mxu0 0.0
    %1851 = vmatpush.msra.mxu0 0.0
    %1852 = vmatpush.msra.mxu0 0.0
    %1853 = vmatpush.msra.mxu0 0.0
    %1854 = vmatpush.msra.mxu0 0.0
    %1855 = vmatpush.msra.mxu0 0.0
    %1856 = vmatpush.msra.mxu0 0.0
    %1857 = vmatpush.msra.mxu0 0.0
    %1858 = vmatpush.msra.mxu0 %v30
    %1859 = vmatmul.f32.gmra.mxu0 %v1841
    %v1860 = vpop.f32.mrf.mxu0
    %v1861 = vadd.f32 0.0, %v1860
    %1862 = vdwg.mxu0
    %v1864 = vrot.slane %v1861, 4
    %v1866 = vadd.f32 %v118, %v1864
    %vm1867 = vcmp.gt.f32.partialorder %v1866, 0.0
    %v1868 = vmin.f32 %v1866, 0.0
    %v1869 = vmul.f32 %v1868, 1.442695
    %v1870 = vpow.pop %v1869
    %v1871 = vsub.f32 %v1870, 1.0
    %v1872 = vsel %vm1867, %v1866, %v1871
    %1873 = vmatpush.msra.mxu0 0.0
    %1874 = vmatpush.msra.mxu0 0.0
    %1875 = vmatpush.msra.mxu0 0.0
    %1876 = vmatpush.msra.mxu0 0.0
    %1877 = vmatpush.msra.mxu0 0.0
    %1878 = vmatpush.msra.mxu0 0.0
    %1879 = vmatpush.msra.mxu0 0.0
    %1880 = vmatpush.msra.mxu0 0.0
    %1881 = vmatpush.msra.mxu0 0.0
    %1882 = vmatpush.msra.mxu0 0.0
    %1883 = vmatpush.msra.mxu0 0.0
    %1884 = vmatpush.msra.mxu0 0.0
    %1885 = vmatpush.msra.mxu0 %v46
    %1886 = vmatpush.msra.mxu0 %v45
    %1887 = vmatpush.msra.mxu0 %v44
    %1888 = vmatpush.msra.mxu0 %v43
    %1889 = vmatmul.f32.gmra.mxu0 %v1623
    %v1890 = vpop.f32.mrf.mxu0
    %v1891 = vadd.f32 0.0, %v1890
    %1892 = vdwg.mxu0
    %v1894 = vrot.slane %v1872, 4
    %v1895 = vsel %vm184, %v1894, 0
    %1897 = vmatpush.msra.mxu0 0.0
    %1898 = vmatpush.msra.mxu0 0.0
    %1899 = vmatpush.msra.mxu0 0.0
    %1900 = vmatpush.msra.mxu0 0.0
    %1901 = vmatpush.msra.mxu0 0.0
    %1902 = vmatpush.msra.mxu0 0.0
    %1903 = vmatpush.msra.mxu0 0.0
    %1904 = vmatpush.msra.mxu0 0.0
    %1905 = vmatpush.msra.mxu0 0.0
    %1906 = vmatpush.msra.mxu0 0.0
    %1907 = vmatpush.msra.mxu0 0.0
    %1908 = vmatpush.msra.mxu0 0.0
    %1909 = vmatpush.msra.mxu0 %v34
    %1910 = vmatpush.msra.mxu0 %v33
    %1911 = vmatpush.msra.mxu0 %v32
    %1912 = vmatpush.msra.mxu0 %v31
    %1913 = vmatmul.f32.gmra.mxu0 %v1895
    %v1914 = vpop.f32.mrf.mxu0
    %v1915 = vadd.f32 %v1891, %v1914
    %1916 = vdwg.mxu0
    %v1917 = vadd.f32 %v1915, %v55
    %v1918 = vsub.f32 0.0, %v1917
    %v1919 = vmul.f32 %v1918, 1.442695
    %v1920 = vpow.pop %v1919
    %v1921 = vadd.f32 %v1920, 1.0
    %v1922 = vrcp.pop %v1921
    %v1923 = vmul.f32 %v1921, %v1922
    %v1924 = vsub.f32 1.0, %v1923
    %v1925 = vmul.f32 %v1922, %v1924
    %v1926 = vadd.f32 %v1922, %v1925
    %vm1927 = vweird.f32 %v1921
    %vm1928 = vweird.f32 %v1922
    %vm1929 = vmor %vm1927, %vm1928
    %v1930 = vsel %vm1929, %v1922, %v1926
    %v1931 = vand.u32 2147483647, %v1921
    %vm1932 = vcmp.eq.f32.partialorder %v1931, 8.507059e+37
    %v1933 = vand.u32 %v1921, 2147483648
    %v1934 = vor.u32 1.1754944e-38, %v1933
    %v1935 = vsel %vm1932, %v1934, %v1930
    %v1936 = vmul.f32 1.0, %v1935
    %1937 = vmatpush.msra.mxu0 0.0
    %1938 = vmatpush.msra.mxu0 0.0
    %1939 = vmatpush.msra.mxu0 0.0
    %1940 = vmatpush.msra.mxu0 0.0
    %1941 = vmatpush.msra.mxu0 0.0
    %1942 = vmatpush.msra.mxu0 0.0
    %1943 = vmatpush.msra.mxu0 0.0
    %1944 = vmatpush.msra.mxu0 0.0
    %1945 = vmatpush.msra.mxu0 0.0
    %1946 = vmatpush.msra.mxu0 0.0
    %1947 = vmatpush.msra.mxu0 0.0
    %1948 = vmatpush.msra.mxu0 0.0
    %1949 = vmatpush.msra.mxu0 %v50
    %1950 = vmatpush.msra.mxu0 %v49
    %1951 = vmatpush.msra.mxu0 %v48
    %1952 = vmatpush.msra.mxu0 %v47
    %1953 = vmatmul.f32.gmra.mxu0 %v1623
    %v1954 = vpop.f32.mrf.mxu0
    %v1955 = vadd.f32 0.0, %v1954
    %1956 = vdwg.mxu0
    %1957 = vmatpush.msra.mxu0 0.0
    %1958 = vmatpush.msra.mxu0 0.0
    %1959 = vmatpush.msra.mxu0 0.0
    %1960 = vmatpush.msra.mxu0 0.0
    %1961 = vmatpush.msra.mxu0 0.0
    %1962 = vmatpush.msra.mxu0 0.0
    %1963 = vmatpush.msra.mxu0 0.0
    %1964 = vmatpush.msra.mxu0 0.0
    %1965 = vmatpush.msra.mxu0 0.0
    %1966 = vmatpush.msra.mxu0 0.0
    %1967 = vmatpush.msra.mxu0 0.0
    %1968 = vmatpush.msra.mxu0 0.0
    %1969 = vmatpush.msra.mxu0 %v38
    %1970 = vmatpush.msra.mxu0 %v37
    %1971 = vmatpush.msra.mxu0 %v36
    %1972 = vmatpush.msra.mxu0 %v35
    %1973 = vmatmul.f32.gmra.mxu0 %v1895
    %v1974 = vpop.f32.mrf.mxu0
    %v1975 = vadd.f32 %v1955, %v1974
    %1976 = vdwg.mxu0
    %v1977 = vadd.f32 %v1975, %v56
    %v1978 = vsub.f32 0.0, %v1977
    %v1979 = vmul.f32 %v1978, 1.442695
    %v1980 = vpow.pop %v1979
    %v1981 = vadd.f32 %v1980, 1.0
    %v1982 = vrcp.pop %v1981
    %v1983 = vmul.f32 %v1981, %v1982
    %v1984 = vsub.f32 1.0, %v1983
    %v1985 = vmul.f32 %v1982, %v1984
    %v1986 = vadd.f32 %v1982, %v1985
    %vm1987 = vweird.f32 %v1981
    %vm1988 = vweird.f32 %v1982
    %vm1989 = vmor %vm1987, %vm1988
    %v1990 = vsel %vm1989, %v1982, %v1986
    %v1991 = vand.u32 2147483647, %v1981
    %vm1992 = vcmp.eq.f32.partialorder %v1991, 8.507059e+37
    %v1993 = vand.u32 %v1981, 2147483648
    %v1994 = vor.u32 1.1754944e-38, %v1993
    %v1995 = vsel %vm1992, %v1994, %v1990
    %v1996 = vmul.f32 1.0, %v1995
    %1997 = vmatpush.msra.mxu0 0.0
    %1998 = vmatpush.msra.mxu0 0.0
    %1999 = vmatpush.msra.mxu0 0.0
    %2000 = vmatpush.msra.mxu0 0.0
    %2001 = vmatpush.msra.mxu0 0.0
    %2002 = vmatpush.msra.mxu0 0.0
    %2003 = vmatpush.msra.mxu0 0.0
    %2004 = vmatpush.msra.mxu0 0.0
    %2005 = vmatpush.msra.mxu0 0.0
    %2006 = vmatpush.msra.mxu0 0.0
    %2007 = vmatpush.msra.mxu0 0.0
    %2008 = vmatpush.msra.mxu0 0.0
    %2009 = vmatpush.msra.mxu0 %v42
    %2010 = vmatpush.msra.mxu0 %v41
    %2011 = vmatpush.msra.mxu0 %v40
    %2012 = vmatpush.msra.mxu0 %v39
    %2013 = vmatmul.f32.gmra.mxu0 %v1895
    %v2014 = vpop.f32.mrf.mxu0
    %v2015 = vadd.f32 %v57, %v2014
    %2016 = vdwg.mxu0
    %2017 = vmatpush.msra.mxu0 0.0
    %2018 = vmatpush.msra.mxu0 0.0
    %2019 = vmatpush.msra.mxu0 0.0
    %2020 = vmatpush.msra.mxu0 0.0
    %2021 = vmatpush.msra.mxu0 0.0
    %2022 = vmatpush.msra.mxu0 0.0
    %2023 = vmatpush.msra.mxu0 0.0
    %2024 = vmatpush.msra.mxu0 0.0
    %2025 = vmatpush.msra.mxu0 0.0
    %2026 = vmatpush.msra.mxu0 0.0
    %2027 = vmatpush.msra.mxu0 0.0
    %2028 = vmatpush.msra.mxu0 0.0
    %2029 = vmatpush.msra.mxu0 %v54
    %2030 = vmatpush.msra.mxu0 %v53
    %2031 = vmatpush.msra.mxu0 %v52
    %2032 = vmatpush.msra.mxu0 %v51
    %2033 = vmatmul.f32.gmra.mxu0 %v1623
    %v2034 = vpop.f32.mrf.mxu0
    %v2035 = vadd.f32 %v58, %v2034
    %2036 = vdwg.mxu0
    %v2037 = vmul.f32 %v1936, %v2035
    %v2038 = vadd.f32 %v2015, %v2037
    %v2039 = vtanh.pop %v2038
    %v2040 = vsub.f32 1.0, %v1996
    %v2041 = vmul.f32 %v2040, %v2039
    %v2042 = vmul.f32 %v1996, %v1621
    %v2043 = vadd.f32 %v2041, %v2042
    %v2045 = vsel %vm184, %v2043, 0
    %2047 = vmatpush.msra.mxu0 0.0
    %2048 = vmatpush.msra.mxu0 0.0
    %2049 = vmatpush.msra.mxu0 0.0
    %2050 = vmatpush.msra.mxu0 0.0
    %2051 = vmatpush.msra.mxu0 0.0
    %2052 = vmatpush.msra.mxu0 0.0
    %2053 = vmatpush.msra.mxu0 0.0
    %2054 = vmatpush.msra.mxu0 0.0
    %2055 = vmatpush.msra.mxu0 0.0
    %2056 = vmatpush.msra.mxu0 0.0
    %2057 = vmatpush.msra.mxu0 0.0
    %2058 = vmatpush.msra.mxu0 0.0
    %2059 = vmatpush.msra.mxu0 %v62
    %2060 = vmatpush.msra.mxu0 %v61
    %2061 = vmatpush.msra.mxu0 %v60
    %2062 = vmatpush.msra.mxu0 %v59
    %2063 = vmatmul.f32.gmra.mxu0 %v2045
    %v2064 = vpop.f32.mrf.mxu0
    %v2065 = vadd.f32 %v63, %v2064
    %2066 = vdwg.mxu0
    %vm2067 = vcmp.gt.f32.partialorder %v2065, 0.0
    %v2068 = vmin.f32 %v2065, 0.0
    %v2069 = vmul.f32 %v2068, 1.442695
    %v2070 = vpow.pop %v2069
    %v2071 = vsub.f32 %v2070, 1.0
    %v2072 = vsel %vm2067, %v2065, %v2071
    %v2074 = vsel %vm184, %v2072, 0
    %2076 = vmatpush.msra.mxu0 0.0
    %2077 = vmatpush.msra.mxu0 0.0
    %2078 = vmatpush.msra.mxu0 0.0
    %2079 = vmatpush.msra.mxu0 0.0
    %2080 = vmatpush.msra.mxu0 0.0
    %2081 = vmatpush.msra.mxu0 0.0
    %2082 = vmatpush.msra.mxu0 0.0
    %2083 = vmatpush.msra.mxu0 0.0
    %2084 = vmatpush.msra.mxu0 0.0
    %2085 = vmatpush.msra.mxu0 0.0
    %2086 = vmatpush.msra.mxu0 0.0
    %2087 = vmatpush.msra.mxu0 0.0
    %2088 = vmatpush.msra.mxu0 %v71
    %2089 = vmatpush.msra.mxu0 %v70
    %2090 = vmatpush.msra.mxu0 %v69
    %2091 = vmatpush.msra.mxu0 %v68
    %2092 = vmatmul.f32.gmra.mxu0 %v2074
    %v2093 = vpop.f32.mrf.mxu0
    %v2094 = vadd.f32 %v84, %v2093
    %2095 = vdwg.mxu0
    %2096 = vmatpush.msra.mxu0 0.0
    %2097 = vmatpush.msra.mxu0 0.0
    %2098 = vmatpush.msra.mxu0 0.0
    %2099 = vmatpush.msra.mxu0 0.0
    %2100 = vmatpush.msra.mxu0 0.0
    %2101 = vmatpush.msra.mxu0 0.0
    %2102 = vmatpush.msra.mxu0 0.0
    %2103 = vmatpush.msra.mxu0 0.0
    %2104 = vmatpush.msra.mxu0 0.0
    %2105 = vmatpush.msra.mxu0 0.0
    %2106 = vmatpush.msra.mxu0 0.0
    %2107 = vmatpush.msra.mxu0 0.0
    %2108 = vmatpush.msra.mxu0 %v75
    %2109 = vmatpush.msra.mxu0 %v74
    %2110 = vmatpush.msra.mxu0 %v73
    %2111 = vmatpush.msra.mxu0 %v72
    %2112 = vmatmul.f32.gmra.mxu0 %v2074
    %v2113 = vpop.f32.mrf.mxu0
    %v2114 = vadd.f32 %v85, %v2113
    %2115 = vdwg.mxu0
    %v2116 = vmax.f32 %v2114, 0.0
    %v2117 = vand.u32 2147483647, %v2114
    %v2118 = vsub.f32 0.0, %v2117
    %v2119 = vmul.f32 %v2118, 1.442695
    %v2120 = vpow.pop %v2119
    %v2121 = vadd.f32 %v2120, 1.0
    %v2122 = vlog2.pop %v2121
    %v2123 = vmul.f32 %v2122, 0.6931472
    %v2124 = vmul.f32 -0.5, %v2120
    %v2125 = vadd.f32 %v2124, 1.0
    %v2126 = vmul.f32 %v2125, %v2120
    %v2127 = vand.u32 2147483647, %v2120
    %vm2128 = vcmp.lt.f32.partialorder %v2127, 0.0004427343
    %v2129 = vsel %vm2128, %v2126, %v2123
    %v2130 = vadd.f32 %v2116, %v2129
    %v2131 = vadd.f32 %v2130, 0.1
    %v2132 = vadd.f32 %v2131, 1000000.0
    %v2133 = vadd.f32 %v2094, 1000000.0
    %v2134 = vrot.slane %v149, 4
    %v2136 = vmul.f32 %v2132, %v2134
    %v2137 = vadd.f32 %v2133, %v2136
    %v2138 = vadd.f32 %v2137, 1000000.0
    %2139 = vmatpush.msra.mxu0 0.0
    %2140 = vmatpush.msra.mxu0 0.0
    %2141 = vmatpush.msra.mxu0 0.0
    %2142 = vmatpush.msra.mxu0 0.0
    %2143 = vmatpush.msra.mxu0 0.0
    %2144 = vmatpush.msra.mxu0 0.0
    %2145 = vmatpush.msra.mxu0 0.0
    %2146 = vmatpush.msra.mxu0 0.0
    %2147 = vmatpush.msra.mxu0 0.0
    %2148 = vmatpush.msra.mxu0 0.0
    %2149 = vmatpush.msra.mxu0 0.0
    %2150 = vmatpush.msra.mxu0 0.0
    %2151 = vmatpush.msra.mxu0 %v67
    %2152 = vmatpush.msra.mxu0 %v66
    %2153 = vmatpush.msra.mxu0 %v65
    %2154 = vmatpush.msra.mxu0 %v64
    %2155 = vmatmul.f32.gmra.mxu0 %v2045
    %v2156 = vpop.f32.mrf.mxu0
    %v2157 = vadd.f32 0.0, %v2156
    %2158 = vdwg.mxu0
    %v2160 = vrot.slane %v2157, 4
    %v2162 = vadd.f32 %v147, %v2160
    %vm2163 = vcmp.gt.f32.partialorder %v2162, 0.0
    %v2164 = vmin.f32 %v2162, 0.0
    %v2165 = vmul.f32 %v2164, 1.442695
    %v2166 = vpow.pop %v2165
    %v2167 = vsub.f32 %v2166, 1.0
    %v2168 = vsel %vm2163, %v2162, %v2167
    %v2170 = vrot.slane %v2168, 4
    %v2171 = vsel %vm184, %v2170, 0
    %2173 = vmatpush.msra.mxu0 0.0
    %2174 = vmatpush.msra.mxu0 0.0
    %2175 = vmatpush.msra.mxu0 0.0
    %2176 = vmatpush.msra.mxu0 0.0
    %2177 = vmatpush.msra.mxu0 0.0
    %2178 = vmatpush.msra.mxu0 0.0
    %2179 = vmatpush.msra.mxu0 0.0
    %2180 = vmatpush.msra.mxu0 0.0
    %2181 = vmatpush.msra.mxu0 0.0
    %2182 = vmatpush.msra.mxu0 0.0
    %2183 = vmatpush.msra.mxu0 0.0
    %2184 = vmatpush.msra.mxu0 0.0
    %2185 = vmatpush.msra.mxu0 %v79
    %2186 = vmatpush.msra.mxu0 %v78
    %2187 = vmatpush.msra.mxu0 %v77
    %2188 = vmatpush.msra.mxu0 %v76
    %2189 = vmatmul.f32.gmra.mxu0 %v2171
    %v2190 = vpop.f32.mrf.mxu0
    %v2191 = vadd.f32 %v86, %v2190
    %2192 = vdwg.mxu0
    %2193 = vmatpush.msra.mxu0 0.0
    %2194 = vmatpush.msra.mxu0 0.0
    %2195 = vmatpush.msra.mxu0 0.0
    %2196 = vmatpush.msra.mxu0 0.0
    %2197 = vmatpush.msra.mxu0 0.0
    %2198 = vmatpush.msra.mxu0 0.0
    %2199 = vmatpush.msra.mxu0 0.0
    %2200 = vmatpush.msra.mxu0 0.0
    %2201 = vmatpush.msra.mxu0 0.0
    %2202 = vmatpush.msra.mxu0 0.0
    %2203 = vmatpush.msra.mxu0 0.0
    %2204 = vmatpush.msra.mxu0 0.0
    %2205 = vmatpush.msra.mxu0 %v83
    %2206 = vmatpush.msra.mxu0 %v82
    %2207 = vmatpush.msra.mxu0 %v81
    %2208 = vmatpush.msra.mxu0 %v80
    %2209 = vmatmul.f32.gmra.mxu0 %v2171
    %v2210 = vpop.f32.mrf.mxu0
    %v2211 = vadd.f32 %v87, %v2210
    %2212 = vdwg.mxu0
    %v2213 = vmax.f32 %v2211, 0.0
    %v2214 = vand.u32 2147483647, %v2211
    %v2215 = vsub.f32 0.0, %v2214
    %v2216 = vmul.f32 %v2215, 1.442695
    %v2217 = vpow.pop %v2216
    %v2218 = vadd.f32 %v2217, 1.0
    %v2219 = vlog2.pop %v2218
    %v2220 = vmul.f32 %v2219, 0.6931472
    %v2221 = vmul.f32 -0.5, %v2217
    %v2222 = vadd.f32 %v2221, 1.0
    %v2223 = vmul.f32 %v2222, %v2217
    %v2224 = vand.u32 2147483647, %v2217
    %vm2225 = vcmp.lt.f32.partialorder %v2224, 0.0004427343
    %v2226 = vsel %vm2225, %v2223, %v2220
    %v2227 = vadd.f32 %v2213, %v2226
    %v2228 = vadd.f32 %v2227, 0.1
    %v2229 = vrot.slane %v150, 4
    %v2231 = vmul.f32 %v2228, %v2229
    %v2232 = vadd.f32 %v2191, %v2231
    %2234 = vrot.lane.b32.xlu0 %v2132, 8
    %v2235 = vpop.permute.xlu0 %2234
    %2238 = vrot.lane.b32.xlu0 %v2138, 16
    %v2239 = vpop.permute.xlu0 %2238
    %2242 = vrot.lane.b32.xlu0 %v2191, 24
    %v2243 = vpop.permute.xlu0 %2242
    %2246 = vrot.lane.b32.xlu0 %v2228, 32
    %v2247 = vpop.permute.xlu0 %2246
    %2250 = vrot.lane.b32.xlu0 %v2232, 40
    %v2251 = vpop.permute.xlu0 %2250
    %2253 = vrot.lane.b32.xlu0 %v2043, 48
    %v2254 = vpop.permute.xlu0 %2253
    %v2256 = vsel %vm153, %v2094, %v2235
    %v2257 = vsel %vm125, %v2256, %v2239
    %v2258 = vsel %vm564, %v2257, %v2243
    %v2259 = vsel %vm184, %v2258, %v2247
    %v2260 = vsel %vm567, %v2259, %v2251
    %v2261 = vsel %vm569, %v2260, %v2254
    %v2262 = vsel %vm571, %v2261, 0.0
    %v2263 = vsel %vm153, %v2232, 0
    %2265 = vmatpush.msra.mxu0 0.0
    %2266 = vmatpush.msra.mxu0 0.0
    %2267 = vmatpush.msra.mxu0 0.0
    %2268 = vmatpush.msra.mxu0 0.0
    %2269 = vmatpush.msra.mxu0 0.0
    %2270 = vmatpush.msra.mxu0 0.0
    %2271 = vmatpush.msra.mxu0 0.0
    %2272 = vmatpush.msra.mxu0 0.0
    %2273 = vmatpush.msra.mxu0 0.0
    %2274 = vmatpush.msra.mxu0 0.0
    %2275 = vmatpush.msra.mxu0 0.0
    %2276 = vmatpush.msra.mxu0 0.0
    %2277 = vmatpush.msra.mxu0 0.0
    %2278 = vmatpush.msra.mxu0 0.0
    %2279 = vmatpush.msra.mxu0 0.0
    %2280 = vmatpush.msra.mxu0 %v30
    %2281 = vmatmul.f32.gmra.mxu0 %v2263
    %v2282 = vpop.f32.mrf.mxu0
    %v2283 = vadd.f32 0.0, %v2282
    %2284 = vdwg.mxu0
    %v2286 = vrot.slane %v2283, 3
    %v2288 = vadd.f32 %v118, %v2286
    %vm2289 = vcmp.gt.f32.partialorder %v2288, 0.0
    %v2290 = vmin.f32 %v2288, 0.0
    %v2291 = vmul.f32 %v2290, 1.442695
    %v2292 = vpow.pop %v2291
    %v2293 = vsub.f32 %v2292, 1.0
    %v2294 = vsel %vm2289, %v2288, %v2293
    %2295 = vmatpush.msra.mxu0 0.0
    %2296 = vmatpush.msra.mxu0 0.0
    %2297 = vmatpush.msra.mxu0 0.0
    %2298 = vmatpush.msra.mxu0 0.0
    %2299 = vmatpush.msra.mxu0 0.0
    %2300 = vmatpush.msra.mxu0 0.0
    %2301 = vmatpush.msra.mxu0 0.0
    %2302 = vmatpush.msra.mxu0 0.0
    %2303 = vmatpush.msra.mxu0 0.0
    %2304 = vmatpush.msra.mxu0 0.0
    %2305 = vmatpush.msra.mxu0 0.0
    %2306 = vmatpush.msra.mxu0 0.0
    %2307 = vmatpush.msra.mxu0 %v46
    %2308 = vmatpush.msra.mxu0 %v45
    %2309 = vmatpush.msra.mxu0 %v44
    %2310 = vmatpush.msra.mxu0 %v43
    %2311 = vmatmul.f32.gmra.mxu0 %v2045
    %v2312 = vpop.f32.mrf.mxu0
    %v2313 = vadd.f32 0.0, %v2312
    %2314 = vdwg.mxu0
    %v2316 = vrot.slane %v2294, 5
    %v2317 = vsel %vm184, %v2316, 0
    %2319 = vmatpush.msra.mxu0 0.0
    %2320 = vmatpush.msra.mxu0 0.0
    %2321 = vmatpush.msra.mxu0 0.0
    %2322 = vmatpush.msra.mxu0 0.0
    %2323 = vmatpush.msra.mxu0 0.0
    %2324 = vmatpush.msra.mxu0 0.0
    %2325 = vmatpush.msra.mxu0 0.0
    %2326 = vmatpush.msra.mxu0 0.0
    %2327 = vmatpush.msra.mxu0 0.0
    %2328 = vmatpush.msra.mxu0 0.0
    %2329 = vmatpush.msra.mxu0 0.0
    %2330 = vmatpush.msra.mxu0 0.0
    %2331 = vmatpush.msra.mxu0 %v34
    %2332 = vmatpush.msra.mxu0 %v33
    %2333 = vmatpush.msra.mxu0 %v32
    %2334 = vmatpush.msra.mxu0 %v31
    %2335 = vmatmul.f32.gmra.mxu0 %v2317
    %v2336 = vpop.f32.mrf.mxu0
    %v2337 = vadd.f32 %v2313, %v2336
    %2338 = vdwg.mxu0
    %v2339 = vadd.f32 %v2337, %v55
    %v2340 = vsub.f32 0.0, %v2339
    %v2341 = vmul.f32 %v2340, 1.442695
    %v2342 = vpow.pop %v2341
    %v2343 = vadd.f32 %v2342, 1.0
    %v2344 = vrcp.pop %v2343
    %v2345 = vmul.f32 %v2343, %v2344
    %v2346 = vsub.f32 1.0, %v2345
    %v2347 = vmul.f32 %v2344, %v2346
    %v2348 = vadd.f32 %v2344, %v2347
    %vm2349 = vweird.f32 %v2343
    %vm2350 = vweird.f32 %v2344
    %vm2351 = vmor %vm2349, %vm2350
    %v2352 = vsel %vm2351, %v2344, %v2348
    %v2353 = vand.u32 2147483647, %v2343
    %vm2354 = vcmp.eq.f32.partialorder %v2353, 8.507059e+37
    %v2355 = vand.u32 %v2343, 2147483648
    %v2356 = vor.u32 1.1754944e-38, %v2355
    %v2357 = vsel %vm2354, %v2356, %v2352
    %v2358 = vmul.f32 1.0, %v2357
    %2359 = vmatpush.msra.mxu0 0.0
    %2360 = vmatpush.msra.mxu0 0.0
    %2361 = vmatpush.msra.mxu0 0.0
    %2362 = vmatpush.msra.mxu0 0.0
    %2363 = vmatpush.msra.mxu0 0.0
    %2364 = vmatpush.msra.mxu0 0.0
    %2365 = vmatpush.msra.mxu0 0.0
    %2366 = vmatpush.msra.mxu0 0.0
    %2367 = vmatpush.msra.mxu0 0.0
    %2368 = vmatpush.msra.mxu0 0.0
    %2369 = vmatpush.msra.mxu0 0.0
    %2370 = vmatpush.msra.mxu0 0.0
    %2371 = vmatpush.msra.mxu0 %v50
    %2372 = vmatpush.msra.mxu0 %v49
    %2373 = vmatpush.msra.mxu0 %v48
    %2374 = vmatpush.msra.mxu0 %v47
    %2375 = vmatmul.f32.gmra.mxu0 %v2045
    %v2376 = vpop.f32.mrf.mxu0
    %v2377 = vadd.f32 0.0, %v2376
    %2378 = vdwg.mxu0
    %2379 = vmatpush.msra.mxu0 0.0
    %2380 = vmatpush.msra.mxu0 0.0
    %2381 = vmatpush.msra.mxu0 0.0
    %2382 = vmatpush.msra.mxu0 0.0
    %2383 = vmatpush.msra.mxu0 0.0
    %2384 = vmatpush.msra.mxu0 0.0
    %2385 = vmatpush.msra.mxu0 0.0
    %2386 = vmatpush.msra.mxu0 0.0
    %2387 = vmatpush.msra.mxu0 0.0
    %2388 = vmatpush.msra.mxu0 0.0
    %2389 = vmatpush.msra.mxu0 0.0
    %2390 = vmatpush.msra.mxu0 0.0
    %2391 = vmatpush.msra.mxu0 %v38
    %2392 = vmatpush.msra.mxu0 %v37
    %2393 = vmatpush.msra.mxu0 %v36
    %2394 = vmatpush.msra.mxu0 %v35
    %2395 = vmatmul.f32.gmra.mxu0 %v2317
    %v2396 = vpop.f32.mrf.mxu0
    %v2397 = vadd.f32 %v2377, %v2396
    %2398 = vdwg.mxu0
    %v2399 = vadd.f32 %v2397, %v56
    %v2400 = vsub.f32 0.0, %v2399
    %v2401 = vmul.f32 %v2400, 1.442695
    %v2402 = vpow.pop %v2401
    %v2403 = vadd.f32 %v2402, 1.0
    %v2404 = vrcp.pop %v2403
    %v2405 = vmul.f32 %v2403, %v2404
    %v2406 = vsub.f32 1.0, %v2405
    %v2407 = vmul.f32 %v2404, %v2406
    %v2408 = vadd.f32 %v2404, %v2407
    %vm2409 = vweird.f32 %v2403
    %vm2410 = vweird.f32 %v2404
    %vm2411 = vmor %vm2409, %vm2410
    %v2412 = vsel %vm2411, %v2404, %v2408
    %v2413 = vand.u32 2147483647, %v2403
    %vm2414 = vcmp.eq.f32.partialorder %v2413, 8.507059e+37
    %v2415 = vand.u32 %v2403, 2147483648
    %v2416 = vor.u32 1.1754944e-38, %v2415
    %v2417 = vsel %vm2414, %v2416, %v2412
    %v2418 = vmul.f32 1.0, %v2417
    %2419 = vmatpush.msra.mxu0 0.0
    %2420 = vmatpush.msra.mxu0 0.0
    %2421 = vmatpush.msra.mxu0 0.0
    %2422 = vmatpush.msra.mxu0 0.0
    %2423 = vmatpush.msra.mxu0 0.0
    %2424 = vmatpush.msra.mxu0 0.0
    %2425 = vmatpush.msra.mxu0 0.0
    %2426 = vmatpush.msra.mxu0 0.0
    %2427 = vmatpush.msra.mxu0 0.0
    %2428 = vmatpush.msra.mxu0 0.0
    %2429 = vmatpush.msra.mxu0 0.0
    %2430 = vmatpush.msra.mxu0 0.0
    %2431 = vmatpush.msra.mxu0 %v42
    %2432 = vmatpush.msra.mxu0 %v41
    %2433 = vmatpush.msra.mxu0 %v40
    %2434 = vmatpush.msra.mxu0 %v39
    %2435 = vmatmul.f32.gmra.mxu0 %v2317
    %v2436 = vpop.f32.mrf.mxu0
    %v2437 = vadd.f32 %v57, %v2436
    %2438 = vdwg.mxu0
    %2439 = vmatpush.msra.mxu0 0.0
    %2440 = vmatpush.msra.mxu0 0.0
    %2441 = vmatpush.msra.mxu0 0.0
    %2442 = vmatpush.msra.mxu0 0.0
    %2443 = vmatpush.msra.mxu0 0.0
    %2444 = vmatpush.msra.mxu0 0.0
    %2445 = vmatpush.msra.mxu0 0.0
    %2446 = vmatpush.msra.mxu0 0.0
    %2447 = vmatpush.msra.mxu0 0.0
    %2448 = vmatpush.msra.mxu0 0.0
    %2449 = vmatpush.msra.mxu0 0.0
    %2450 = vmatpush.msra.mxu0 0.0
    %2451 = vmatpush.msra.mxu0 %v54
    %2452 = vmatpush.msra.mxu0 %v53
    %2453 = vmatpush.msra.mxu0 %v52
    %2454 = vmatpush.msra.mxu0 %v51
    %2455 = vmatmul.f32.gmra.mxu0 %v2045
    %v2456 = vpop.f32.mrf.mxu0
    %v2457 = vadd.f32 %v58, %v2456
    %2458 = vdwg.mxu0
    %v2459 = vmul.f32 %v2358, %v2457
    %v2460 = vadd.f32 %v2437, %v2459
    %v2461 = vtanh.pop %v2460
    %v2462 = vsub.f32 1.0, %v2418
    %v2463 = vmul.f32 %v2462, %v2461
    %v2464 = vmul.f32 %v2418, %v2043
    %v2465 = vadd.f32 %v2463, %v2464
    %v2467 = vsel %vm184, %v2465, 0
    %2469 = vmatpush.msra.mxu0 0.0
    %2470 = vmatpush.msra.mxu0 0.0
    %2471 = vmatpush.msra.mxu0 0.0
    %2472 = vmatpush.msra.mxu0 0.0
    %2473 = vmatpush.msra.mxu0 0.0
    %2474 = vmatpush.msra.mxu0 0.0
    %2475 = vmatpush.msra.mxu0 0.0
    %2476 = vmatpush.msra.mxu0 0.0
    %2477 = vmatpush.msra.mxu0 0.0
    %2478 = vmatpush.msra.mxu0 0.0
    %2479 = vmatpush.msra.mxu0 0.0
    %2480 = vmatpush.msra.mxu0 0.0
    %2481 = vmatpush.msra.mxu0 %v62
    %2482 = vmatpush.msra.mxu0 %v61
    %2483 = vmatpush.msra.mxu0 %v60
    %2484 = vmatpush.msra.mxu0 %v59
    %2485 = vmatmul.f32.gmra.mxu0 %v2467
    %v2486 = vpop.f32.mrf.mxu0
    %v2487 = vadd.f32 %v63, %v2486
    %2488 = vdwg.mxu0
    %vm2489 = vcmp.gt.f32.partialorder %v2487, 0.0
    %v2490 = vmin.f32 %v2487, 0.0
    %v2491 = vmul.f32 %v2490, 1.442695
    %v2492 = vpow.pop %v2491
    %v2493 = vsub.f32 %v2492, 1.0
    %v2494 = vsel %vm2489, %v2487, %v2493
    %v2496 = vsel %vm184, %v2494, 0
    %2498 = vmatpush.msra.mxu0 0.0
    %2499 = vmatpush.msra.mxu0 0.0
    %2500 = vmatpush.msra.mxu0 0.0
    %2501 = vmatpush.msra.mxu0 0.0
    %2502 = vmatpush.msra.mxu0 0.0
    %2503 = vmatpush.msra.mxu0 0.0
    %2504 = vmatpush.msra.mxu0 0.0
    %2505 = vmatpush.msra.mxu0 0.0
    %2506 = vmatpush.msra.mxu0 0.0
    %2507 = vmatpush.msra.mxu0 0.0
    %2508 = vmatpush.msra.mxu0 0.0
    %2509 = vmatpush.msra.mxu0 0.0
    %2510 = vmatpush.msra.mxu0 %v71
    %2511 = vmatpush.msra.mxu0 %v70
    %2512 = vmatpush.msra.mxu0 %v69
    %2513 = vmatpush.msra.mxu0 %v68
    %2514 = vmatmul.f32.gmra.mxu0 %v2496
    %v2515 = vpop.f32.mrf.mxu0
    %v2516 = vadd.f32 %v84, %v2515
    %2517 = vdwg.mxu0
    %2518 = vmatpush.msra.mxu0 0.0
    %2519 = vmatpush.msra.mxu0 0.0
    %2520 = vmatpush.msra.mxu0 0.0
    %2521 = vmatpush.msra.mxu0 0.0
    %2522 = vmatpush.msra.mxu0 0.0
    %2523 = vmatpush.msra.mxu0 0.0
    %2524 = vmatpush.msra.mxu0 0.0
    %2525 = vmatpush.msra.mxu0 0.0
    %2526 = vmatpush.msra.mxu0 0.0
    %2527 = vmatpush.msra.mxu0 0.0
    %2528 = vmatpush.msra.mxu0 0.0
    %2529 = vmatpush.msra.mxu0 0.0
    %2530 = vmatpush.msra.mxu0 %v75
    %2531 = vmatpush.msra.mxu0 %v74
    %2532 = vmatpush.msra.mxu0 %v73
    %2533 = vmatpush.msra.mxu0 %v72
    %2534 = vmatmul.f32.gmra.mxu0 %v2496
    %v2535 = vpop.f32.mrf.mxu0
    %v2536 = vadd.f32 %v85, %v2535
    %2537 = vdwg.mxu0
    %v2538 = vmax.f32 %v2536, 0.0
    %v2539 = vand.u32 2147483647, %v2536
    %v2540 = vsub.f32 0.0, %v2539
    %v2541 = vmul.f32 %v2540, 1.442695
    %v2542 = vpow.pop %v2541
    %v2543 = vadd.f32 %v2542, 1.0
    %v2544 = vlog2.pop %v2543
    %v2545 = vmul.f32 %v2544, 0.6931472
    %v2546 = vmul.f32 -0.5, %v2542
    %v2547 = vadd.f32 %v2546, 1.0
    %v2548 = vmul.f32 %v2547, %v2542
    %v2549 = vand.u32 2147483647, %v2542
    %vm2550 = vcmp.lt.f32.partialorder %v2549, 0.0004427343
    %v2551 = vsel %vm2550, %v2548, %v2545
    %v2552 = vadd.f32 %v2538, %v2551
    %v2553 = vadd.f32 %v2552, 0.1
    %v2554 = vadd.f32 %v2553, 1000000.0
    %v2555 = vadd.f32 %v2516, 1000000.0
    %v2556 = vrot.slane %v149, 5
    %v2558 = vmul.f32 %v2554, %v2556
    %v2559 = vadd.f32 %v2555, %v2558
    %v2560 = vadd.f32 %v2559, 1000000.0
    %2561 = vmatpush.msra.mxu0 0.0
    %2562 = vmatpush.msra.mxu0 0.0
    %2563 = vmatpush.msra.mxu0 0.0
    %2564 = vmatpush.msra.mxu0 0.0
    %2565 = vmatpush.msra.mxu0 0.0
    %2566 = vmatpush.msra.mxu0 0.0
    %2567 = vmatpush.msra.mxu0 0.0
    %2568 = vmatpush.msra.mxu0 0.0
    %2569 = vmatpush.msra.mxu0 0.0
    %2570 = vmatpush.msra.mxu0 0.0
    %2571 = vmatpush.msra.mxu0 0.0
    %2572 = vmatpush.msra.mxu0 0.0
    %2573 = vmatpush.msra.mxu0 %v67
    %2574 = vmatpush.msra.mxu0 %v66
    %2575 = vmatpush.msra.mxu0 %v65
    %2576 = vmatpush.msra.mxu0 %v64
    %2577 = vmatmul.f32.gmra.mxu0 %v2467
    %v2578 = vpop.f32.mrf.mxu0
    %v2579 = vadd.f32 0.0, %v2578
    %2580 = vdwg.mxu0
    %v2582 = vrot.slane %v2579, 3
    %v2584 = vadd.f32 %v147, %v2582
    %vm2585 = vcmp.gt.f32.partialorder %v2584, 0.0
    %v2586 = vmin.f32 %v2584, 0.0
    %v2587 = vmul.f32 %v2586, 1.442695
    %v2588 = vpow.pop %v2587
    %v2589 = vsub.f32 %v2588, 1.0
    %v2590 = vsel %vm2585, %v2584, %v2589
    %v2592 = vrot.slane %v2590, 5
    %v2593 = vsel %vm184, %v2592, 0
    %2595 = vmatpush.msra.mxu0 0.0
    %2596 = vmatpush.msra.mxu0 0.0
    %2597 = vmatpush.msra.mxu0 0.0
    %2598 = vmatpush.msra.mxu0 0.0
    %2599 = vmatpush.msra.mxu0 0.0
    %2600 = vmatpush.msra.mxu0 0.0
    %2601 = vmatpush.msra.mxu0 0.0
    %2602 = vmatpush.msra.mxu0 0.0
    %2603 = vmatpush.msra.mxu0 0.0
    %2604 = vmatpush.msra.mxu0 0.0
    %2605 = vmatpush.msra.mxu0 0.0
    %2606 = vmatpush.msra.mxu0 0.0
    %2607 = vmatpush.msra.mxu0 %v79
    %2608 = vmatpush.msra.mxu0 %v78
    %2609 = vmatpush.msra.mxu0 %v77
    %2610 = vmatpush.msra.mxu0 %v76
    %2611 = vmatmul.f32.gmra.mxu0 %v2593
    %v2612 = vpop.f32.mrf.mxu0
    %v2613 = vadd.f32 %v86, %v2612
    %2614 = vdwg.mxu0
    %2615 = vmatpush.msra.mxu0 0.0
    %2616 = vmatpush.msra.mxu0 0.0
    %2617 = vmatpush.msra.mxu0 0.0
    %2618 = vmatpush.msra.mxu0 0.0
    %2619 = vmatpush.msra.mxu0 0.0
    %2620 = vmatpush.msra.mxu0 0.0
    %2621 = vmatpush.msra.mxu0 0.0
    %2622 = vmatpush.msra.mxu0 0.0
    %2623 = vmatpush.msra.mxu0 0.0
    %2624 = vmatpush.msra.mxu0 0.0
    %2625 = vmatpush.msra.mxu0 0.0
    %2626 = vmatpush.msra.mxu0 0.0
    %2627 = vmatpush.msra.mxu0 %v83
    %2628 = vmatpush.msra.mxu0 %v82
    %2629 = vmatpush.msra.mxu0 %v81
    %2630 = vmatpush.msra.mxu0 %v80
    %2631 = vmatmul.f32.gmra.mxu0 %v2593
    %v2632 = vpop.f32.mrf.mxu0
    %v2633 = vadd.f32 %v87, %v2632
    %2634 = vdwg.mxu0
    %v2635 = vmax.f32 %v2633, 0.0
    %v2636 = vand.u32 2147483647, %v2633
    %v2637 = vsub.f32 0.0, %v2636
    %v2638 = vmul.f32 %v2637, 1.442695
    %v2639 = vpow.pop %v2638
    %v2640 = vadd.f32 %v2639, 1.0
    %v2641 = vlog2.pop %v2640
    %v2642 = vmul.f32 %v2641, 0.6931472
    %v2643 = vmul.f32 -0.5, %v2639
    %v2644 = vadd.f32 %v2643, 1.0
    %v2645 = vmul.f32 %v2644, %v2639
    %v2646 = vand.u32 2147483647, %v2639
    %vm2647 = vcmp.lt.f32.partialorder %v2646, 0.0004427343
    %v2648 = vsel %vm2647, %v2645, %v2642
    %v2649 = vadd.f32 %v2635, %v2648
    %v2650 = vadd.f32 %v2649, 0.1
    %v2651 = vrot.slane %v150, 5
    %v2653 = vmul.f32 %v2650, %v2651
    %v2654 = vadd.f32 %v2613, %v2653
    %2656 = vrot.lane.b32.xlu0 %v2554, 8
    %v2657 = vpop.permute.xlu0 %2656
    %2660 = vrot.lane.b32.xlu0 %v2560, 16
    %v2661 = vpop.permute.xlu0 %2660
    %2664 = vrot.lane.b32.xlu0 %v2613, 24
    %v2665 = vpop.permute.xlu0 %2664
    %2668 = vrot.lane.b32.xlu0 %v2650, 32
    %v2669 = vpop.permute.xlu0 %2668
    %2672 = vrot.lane.b32.xlu0 %v2654, 40
    %v2673 = vpop.permute.xlu0 %2672
    %2675 = vrot.lane.b32.xlu0 %v2465, 48
    %v2676 = vpop.permute.xlu0 %2675
    %v2678 = vsel %vm153, %v2516, %v2657
    %v2679 = vsel %vm125, %v2678, %v2661
    %v2680 = vsel %vm564, %v2679, %v2665
    %v2681 = vsel %vm184, %v2680, %v2669
    %v2682 = vsel %vm567, %v2681, %v2673
    %v2683 = vsel %vm569, %v2682, %v2676
    %v2684 = vsel %vm571, %v2683, 0.0
    %v2685 = vsel %vm153, %v2654, 0
    %2687 = vmatpush.msra.mxu0 0.0
    %2688 = vmatpush.msra.mxu0 0.0
    %2689 = vmatpush.msra.mxu0 0.0
    %2690 = vmatpush.msra.mxu0 0.0
    %2691 = vmatpush.msra.mxu0 0.0
    %2692 = vmatpush.msra.mxu0 0.0
    %2693 = vmatpush.msra.mxu0 0.0
    %2694 = vmatpush.msra.mxu0 0.0
    %2695 = vmatpush.msra.mxu0 0.0
    %2696 = vmatpush.msra.mxu0 0.0
    %2697 = vmatpush.msra.mxu0 0.0
    %2698 = vmatpush.msra.mxu0 0.0
    %2699 = vmatpush.msra.mxu0 0.0
    %2700 = vmatpush.msra.mxu0 0.0
    %2701 = vmatpush.msra.mxu0 0.0
    %2702 = vmatpush.msra.mxu0 %v30
    %2703 = vmatmul.f32.gmra.mxu0 %v2685
    %v2704 = vpop.f32.mrf.mxu0
    %v2705 = vadd.f32 0.0, %v2704
    %2706 = vdwg.mxu0
    %v2708 = vrot.slane %v2705, 2
    %v2710 = vadd.f32 %v118, %v2708
    %vm2711 = vcmp.gt.f32.partialorder %v2710, 0.0
    %v2712 = vmin.f32 %v2710, 0.0
    %v2713 = vmul.f32 %v2712, 1.442695
    %v2714 = vpow.pop %v2713
    %v2715 = vsub.f32 %v2714, 1.0
    %v2716 = vsel %vm2711, %v2710, %v2715
    %2717 = vmatpush.msra.mxu0 0.0
    %2718 = vmatpush.msra.mxu0 0.0
    %2719 = vmatpush.msra.mxu0 0.0
    %2720 = vmatpush.msra.mxu0 0.0
    %2721 = vmatpush.msra.mxu0 0.0
    %2722 = vmatpush.msra.mxu0 0.0
    %2723 = vmatpush.msra.mxu0 0.0
    %2724 = vmatpush.msra.mxu0 0.0
    %2725 = vmatpush.msra.mxu0 0.0
    %2726 = vmatpush.msra.mxu0 0.0
    %2727 = vmatpush.msra.mxu0 0.0
    %2728 = vmatpush.msra.mxu0 0.0
    %2729 = vmatpush.msra.mxu0 %v46
    %2730 = vmatpush.msra.mxu0 %v45
    %2731 = vmatpush.msra.mxu0 %v44
    %2732 = vmatpush.msra.mxu0 %v43
    %2733 = vmatmul.f32.gmra.mxu0 %v2467
    %v2734 = vpop.f32.mrf.mxu0
    %v2735 = vadd.f32 0.0, %v2734
    %2736 = vdwg.mxu0
    %v2738 = vrot.slane %v2716, 6
    %v2739 = vsel %vm184, %v2738, 0
    %2741 = vmatpush.msra.mxu0 0.0
    %2742 = vmatpush.msra.mxu0 0.0
    %2743 = vmatpush.msra.mxu0 0.0
    %2744 = vmatpush.msra.mxu0 0.0
    %2745 = vmatpush.msra.mxu0 0.0
    %2746 = vmatpush.msra.mxu0 0.0
    %2747 = vmatpush.msra.mxu0 0.0
    %2748 = vmatpush.msra.mxu0 0.0
    %2749 = vmatpush.msra.mxu0 0.0
    %2750 = vmatpush.msra.mxu0 0.0
    %2751 = vmatpush.msra.mxu0 0.0
    %2752 = vmatpush.msra.mxu0 0.0
    %2753 = vmatpush.msra.mxu0 %v34
    %2754 = vmatpush.msra.mxu0 %v33
    %2755 = vmatpush.msra.mxu0 %v32
    %2756 = vmatpush.msra.mxu0 %v31
    %2757 = vmatmul.f32.gmra.mxu0 %v2739
    %v2758 = vpop.f32.mrf.mxu0
    %v2759 = vadd.f32 %v2735, %v2758
    %2760 = vdwg.mxu0
    %v2761 = vadd.f32 %v2759, %v55
    %v2762 = vsub.f32 0.0, %v2761
    %v2763 = vmul.f32 %v2762, 1.442695
    %v2764 = vpow.pop %v2763
    %v2765 = vadd.f32 %v2764, 1.0
    %v2766 = vrcp.pop %v2765
    %v2767 = vmul.f32 %v2765, %v2766
    %v2768 = vsub.f32 1.0, %v2767
    %v2769 = vmul.f32 %v2766, %v2768
    %v2770 = vadd.f32 %v2766, %v2769
    %vm2771 = vweird.f32 %v2765
    %vm2772 = vweird.f32 %v2766
    %vm2773 = vmor %vm2771, %vm2772
    %v2774 = vsel %vm2773, %v2766, %v2770
    %v2775 = vand.u32 2147483647, %v2765
    %vm2776 = vcmp.eq.f32.partialorder %v2775, 8.507059e+37
    %v2777 = vand.u32 %v2765, 2147483648
    %v2778 = vor.u32 1.1754944e-38, %v2777
    %v2779 = vsel %vm2776, %v2778, %v2774
    %v2780 = vmul.f32 1.0, %v2779
    %2781 = vmatpush.msra.mxu0 0.0
    %2782 = vmatpush.msra.mxu0 0.0
    %2783 = vmatpush.msra.mxu0 0.0
    %2784 = vmatpush.msra.mxu0 0.0
    %2785 = vmatpush.msra.mxu0 0.0
    %2786 = vmatpush.msra.mxu0 0.0
    %2787 = vmatpush.msra.mxu0 0.0
    %2788 = vmatpush.msra.mxu0 0.0
    %2789 = vmatpush.msra.mxu0 0.0
    %2790 = vmatpush.msra.mxu0 0.0
    %2791 = vmatpush.msra.mxu0 0.0
    %2792 = vmatpush.msra.mxu0 0.0
    %2793 = vmatpush.msra.mxu0 %v50
    %2794 = vmatpush.msra.mxu0 %v49
    %2795 = vmatpush.msra.mxu0 %v48
    %2796 = vmatpush.msra.mxu0 %v47
    %2797 = vmatmul.f32.gmra.mxu0 %v2467
    %v2798 = vpop.f32.mrf.mxu0
    %v2799 = vadd.f32 0.0, %v2798
    %2800 = vdwg.mxu0
    %2801 = vmatpush.msra.mxu0 0.0
    %2802 = vmatpush.msra.mxu0 0.0
    %2803 = vmatpush.msra.mxu0 0.0
    %2804 = vmatpush.msra.mxu0 0.0
    %2805 = vmatpush.msra.mxu0 0.0
    %2806 = vmatpush.msra.mxu0 0.0
    %2807 = vmatpush.msra.mxu0 0.0
    %2808 = vmatpush.msra.mxu0 0.0
    %2809 = vmatpush.msra.mxu0 0.0
    %2810 = vmatpush.msra.mxu0 0.0
    %2811 = vmatpush.msra.mxu0 0.0
    %2812 = vmatpush.msra.mxu0 0.0
    %2813 = vmatpush.msra.mxu0 %v38
    %2814 = vmatpush.msra.mxu0 %v37
    %2815 = vmatpush.msra.mxu0 %v36
    %2816 = vmatpush.msra.mxu0 %v35
    %2817 = vmatmul.f32.gmra.mxu0 %v2739
    %v2818 = vpop.f32.mrf.mxu0
    %v2819 = vadd.f32 %v2799, %v2818
    %2820 = vdwg.mxu0
    %v2821 = vadd.f32 %v2819, %v56
    %v2822 = vsub.f32 0.0, %v2821
    %v2823 = vmul.f32 %v2822, 1.442695
    %v2824 = vpow.pop %v2823
    %v2825 = vadd.f32 %v2824, 1.0
    %v2826 = vrcp.pop %v2825
    %v2827 = vmul.f32 %v2825, %v2826
    %v2828 = vsub.f32 1.0, %v2827
    %v2829 = vmul.f32 %v2826, %v2828
    %v2830 = vadd.f32 %v2826, %v2829
    %vm2831 = vweird.f32 %v2825
    %vm2832 = vweird.f32 %v2826
    %vm2833 = vmor %vm2831, %vm2832
    %v2834 = vsel %vm2833, %v2826, %v2830
    %v2835 = vand.u32 2147483647, %v2825
    %vm2836 = vcmp.eq.f32.partialorder %v2835, 8.507059e+37
    %v2837 = vand.u32 %v2825, 2147483648
    %v2838 = vor.u32 1.1754944e-38, %v2837
    %v2839 = vsel %vm2836, %v2838, %v2834
    %v2840 = vmul.f32 1.0, %v2839
    %2841 = vmatpush.msra.mxu0 0.0
    %2842 = vmatpush.msra.mxu0 0.0
    %2843 = vmatpush.msra.mxu0 0.0
    %2844 = vmatpush.msra.mxu0 0.0
    %2845 = vmatpush.msra.mxu0 0.0
    %2846 = vmatpush.msra.mxu0 0.0
    %2847 = vmatpush.msra.mxu0 0.0
    %2848 = vmatpush.msra.mxu0 0.0
    %2849 = vmatpush.msra.mxu0 0.0
    %2850 = vmatpush.msra.mxu0 0.0
    %2851 = vmatpush.msra.mxu0 0.0
    %2852 = vmatpush.msra.mxu0 0.0
    %2853 = vmatpush.msra.mxu0 %v42
    %2854 = vmatpush.msra.mxu0 %v41
    %2855 = vmatpush.msra.mxu0 %v40
    %2856 = vmatpush.msra.mxu0 %v39
    %2857 = vmatmul.f32.gmra.mxu0 %v2739
    %v2858 = vpop.f32.mrf.mxu0
    %v2859 = vadd.f32 %v57, %v2858
    %2860 = vdwg.mxu0
    %2861 = vmatpush.msra.mxu0 0.0
    %2862 = vmatpush.msra.mxu0 0.0
    %2863 = vmatpush.msra.mxu0 0.0
    %2864 = vmatpush.msra.mxu0 0.0
    %2865 = vmatpush.msra.mxu0 0.0
    %2866 = vmatpush.msra.mxu0 0.0
    %2867 = vmatpush.msra.mxu0 0.0
    %2868 = vmatpush.msra.mxu0 0.0
    %2869 = vmatpush.msra.mxu0 0.0
    %2870 = vmatpush.msra.mxu0 0.0
    %2871 = vmatpush.msra.mxu0 0.0
    %2872 = vmatpush.msra.mxu0 0.0
    %2873 = vmatpush.msra.mxu0 %v54
    %2874 = vmatpush.msra.mxu0 %v53
    %2875 = vmatpush.msra.mxu0 %v52
    %2876 = vmatpush.msra.mxu0 %v51
    %2877 = vmatmul.f32.gmra.mxu0 %v2467
    %v2878 = vpop.f32.mrf.mxu0
    %v2879 = vadd.f32 %v58, %v2878
    %2880 = vdwg.mxu0
    %v2881 = vmul.f32 %v2780, %v2879
    %v2882 = vadd.f32 %v2859, %v2881
    %v2883 = vtanh.pop %v2882
    %v2884 = vsub.f32 1.0, %v2840
    %v2885 = vmul.f32 %v2884, %v2883
    %v2886 = vmul.f32 %v2840, %v2465
    %v2887 = vadd.f32 %v2885, %v2886
    %v2889 = vsel %vm184, %v2887, 0
    %2891 = vmatpush.msra.mxu0 0.0
    %2892 = vmatpush.msra.mxu0 0.0
    %2893 = vmatpush.msra.mxu0 0.0
    %2894 = vmatpush.msra.mxu0 0.0
    %2895 = vmatpush.msra.mxu0 0.0
    %2896 = vmatpush.msra.mxu0 0.0
    %2897 = vmatpush.msra.mxu0 0.0
    %2898 = vmatpush.msra.mxu0 0.0
    %2899 = vmatpush.msra.mxu0 0.0
    %2900 = vmatpush.msra.mxu0 0.0
    %2901 = vmatpush.msra.mxu0 0.0
    %2902 = vmatpush.msra.mxu0 0.0
    %2903 = vmatpush.msra.mxu0 %v62
    %2904 = vmatpush.msra.mxu0 %v61
    %2905 = vmatpush.msra.mxu0 %v60
    %2906 = vmatpush.msra.mxu0 %v59
    %2907 = vmatmul.f32.gmra.mxu0 %v2889
    %v2908 = vpop.f32.mrf.mxu0
    %v2909 = vadd.f32 %v63, %v2908
    %2910 = vdwg.mxu0
    %vm2911 = vcmp.gt.f32.partialorder %v2909, 0.0
    %v2912 = vmin.f32 %v2909, 0.0
    %v2913 = vmul.f32 %v2912, 1.442695
    %v2914 = vpow.pop %v2913
    %v2915 = vsub.f32 %v2914, 1.0
    %v2916 = vsel %vm2911, %v2909, %v2915
    %v2918 = vsel %vm184, %v2916, 0
    %2920 = vmatpush.msra.mxu0 0.0
    %2921 = vmatpush.msra.mxu0 0.0
    %2922 = vmatpush.msra.mxu0 0.0
    %2923 = vmatpush.msra.mxu0 0.0
    %2924 = vmatpush.msra.mxu0 0.0
    %2925 = vmatpush.msra.mxu0 0.0
    %2926 = vmatpush.msra.mxu0 0.0
    %2927 = vmatpush.msra.mxu0 0.0
    %2928 = vmatpush.msra.mxu0 0.0
    %2929 = vmatpush.msra.mxu0 0.0
    %2930 = vmatpush.msra.mxu0 0.0
    %2931 = vmatpush.msra.mxu0 0.0
    %2932 = vmatpush.msra.mxu0 %v71
    %2933 = vmatpush.msra.mxu0 %v70
    %2934 = vmatpush.msra.mxu0 %v69
    %2935 = vmatpush.msra.mxu0 %v68
    %2936 = vmatmul.f32.gmra.mxu0 %v2918
    %v2937 = vpop.f32.mrf.mxu0
    %v2938 = vadd.f32 %v84, %v2937
    %2939 = vdwg.mxu0
    %2940 = vmatpush.msra.mxu0 0.0
    %2941 = vmatpush.msra.mxu0 0.0
    %2942 = vmatpush.msra.mxu0 0.0
    %2943 = vmatpush.msra.mxu0 0.0
    %2944 = vmatpush.msra.mxu0 0.0
    %2945 = vmatpush.msra.mxu0 0.0
    %2946 = vmatpush.msra.mxu0 0.0
    %2947 = vmatpush.msra.mxu0 0.0
    %2948 = vmatpush.msra.mxu0 0.0
    %2949 = vmatpush.msra.mxu0 0.0
    %2950 = vmatpush.msra.mxu0 0.0
    %2951 = vmatpush.msra.mxu0 0.0
    %2952 = vmatpush.msra.mxu0 %v75
    %2953 = vmatpush.msra.mxu0 %v74
    %2954 = vmatpush.msra.mxu0 %v73
    %2955 = vmatpush.msra.mxu0 %v72
    %2956 = vmatmul.f32.gmra.mxu0 %v2918
    %v2957 = vpop.f32.mrf.mxu0
    %v2958 = vadd.f32 %v85, %v2957
    %2959 = vdwg.mxu0
    %v2960 = vmax.f32 %v2958, 0.0
    %v2961 = vand.u32 2147483647, %v2958
    %v2962 = vsub.f32 0.0, %v2961
    %v2963 = vmul.f32 %v2962, 1.442695
    %v2964 = vpow.pop %v2963
    %v2965 = vadd.f32 %v2964, 1.0
    %v2966 = vlog2.pop %v2965
    %v2967 = vmul.f32 %v2966, 0.6931472
    %v2968 = vmul.f32 -0.5, %v2964
    %v2969 = vadd.f32 %v2968, 1.0
    %v2970 = vmul.f32 %v2969, %v2964
    %v2971 = vand.u32 2147483647, %v2964
    %vm2972 = vcmp.lt.f32.partialorder %v2971, 0.0004427343
    %v2973 = vsel %vm2972, %v2970, %v2967
    %v2974 = vadd.f32 %v2960, %v2973
    %v2975 = vadd.f32 %v2974, 0.1
    %v2976 = vadd.f32 %v2975, 1000000.0
    %v2977 = vadd.f32 %v2938, 1000000.0
    %v2978 = vrot.slane %v149, 6
    %v2980 = vmul.f32 %v2976, %v2978
    %v2981 = vadd.f32 %v2977, %v2980
    %v2982 = vadd.f32 %v2981, 1000000.0
    %2983 = vmatpush.msra.mxu0 0.0
    %2984 = vmatpush.msra.mxu0 0.0
    %2985 = vmatpush.msra.mxu0 0.0
    %2986 = vmatpush.msra.mxu0 0.0
    %2987 = vmatpush.msra.mxu0 0.0
    %2988 = vmatpush.msra.mxu0 0.0
    %2989 = vmatpush.msra.mxu0 0.0
    %2990 = vmatpush.msra.mxu0 0.0
    %2991 = vmatpush.msra.mxu0 0.0
    %2992 = vmatpush.msra.mxu0 0.0
    %2993 = vmatpush.msra.mxu0 0.0
    %2994 = vmatpush.msra.mxu0 0.0
    %2995 = vmatpush.msra.mxu0 %v67
    %2996 = vmatpush.msra.mxu0 %v66
    %2997 = vmatpush.msra.mxu0 %v65
    %2998 = vmatpush.msra.mxu0 %v64
    %2999 = vmatmul.f32.gmra.mxu0 %v2889
    %v3000 = vpop.f32.mrf.mxu0
    %v3001 = vadd.f32 0.0, %v3000
    %3002 = vdwg.mxu0
    %v3004 = vrot.slane %v3001, 2
    %v3006 = vadd.f32 %v147, %v3004
    %vm3007 = vcmp.gt.f32.partialorder %v3006, 0.0
    %v3008 = vmin.f32 %v3006, 0.0
    %v3009 = vmul.f32 %v3008, 1.442695
    %v3010 = vpow.pop %v3009
    %v3011 = vsub.f32 %v3010, 1.0
    %v3012 = vsel %vm3007, %v3006, %v3011
    %v3014 = vrot.slane %v3012, 6
    %v3015 = vsel %vm184, %v3014, 0
    %3017 = vmatpush.msra.mxu0 0.0
    %3018 = vmatpush.msra.mxu0 0.0
    %3019 = vmatpush.msra.mxu0 0.0
    %3020 = vmatpush.msra.mxu0 0.0
    %3021 = vmatpush.msra.mxu0 0.0
    %3022 = vmatpush.msra.mxu0 0.0
    %3023 = vmatpush.msra.mxu0 0.0
    %3024 = vmatpush.msra.mxu0 0.0
    %3025 = vmatpush.msra.mxu0 0.0
    %3026 = vmatpush.msra.mxu0 0.0
    %3027 = vmatpush.msra.mxu0 0.0
    %3028 = vmatpush.msra.mxu0 0.0
    %3029 = vmatpush.msra.mxu0 %v79
    %3030 = vmatpush.msra.mxu0 %v78
    %3031 = vmatpush.msra.mxu0 %v77
    %3032 = vmatpush.msra.mxu0 %v76
    %3033 = vmatmul.f32.gmra.mxu0 %v3015
    %v3034 = vpop.f32.mrf.mxu0
    %v3035 = vadd.f32 %v86, %v3034
    %3036 = vdwg.mxu0
    %3037 = vmatpush.msra.mxu0 0.0
    %3038 = vmatpush.msra.mxu0 0.0
    %3039 = vmatpush.msra.mxu0 0.0
    %3040 = vmatpush.msra.mxu0 0.0
    %3041 = vmatpush.msra.mxu0 0.0
    %3042 = vmatpush.msra.mxu0 0.0
    %3043 = vmatpush.msra.mxu0 0.0
    %3044 = vmatpush.msra.mxu0 0.0
    %3045 = vmatpush.msra.mxu0 0.0
    %3046 = vmatpush.msra.mxu0 0.0
    %3047 = vmatpush.msra.mxu0 0.0
    %3048 = vmatpush.msra.mxu0 0.0
    %3049 = vmatpush.msra.mxu0 %v83
    %3050 = vmatpush.msra.mxu0 %v82
    %3051 = vmatpush.msra.mxu0 %v81
    %3052 = vmatpush.msra.mxu0 %v80
    %3053 = vmatmul.f32.gmra.mxu0 %v3015
    %v3054 = vpop.f32.mrf.mxu0
    %v3055 = vadd.f32 %v87, %v3054
    %3056 = vdwg.mxu0
    %v3057 = vmax.f32 %v3055, 0.0
    %v3058 = vand.u32 2147483647, %v3055
    %v3059 = vsub.f32 0.0, %v3058
    %v3060 = vmul.f32 %v3059, 1.442695
    %v3061 = vpow.pop %v3060
    %v3062 = vadd.f32 %v3061, 1.0
    %v3063 = vlog2.pop %v3062
    %v3064 = vmul.f32 %v3063, 0.6931472
    %v3065 = vmul.f32 -0.5, %v3061
    %v3066 = vadd.f32 %v3065, 1.0
    %v3067 = vmul.f32 %v3066, %v3061
    %v3068 = vand.u32 2147483647, %v3061
    %vm3069 = vcmp.lt.f32.partialorder %v3068, 0.0004427343
    %v3070 = vsel %vm3069, %v3067, %v3064
    %v3071 = vadd.f32 %v3057, %v3070
    %v3072 = vadd.f32 %v3071, 0.1
    %v3073 = vrot.slane %v150, 6
    %v3075 = vmul.f32 %v3072, %v3073
    %v3076 = vadd.f32 %v3035, %v3075
    %3078 = vrot.lane.b32.xlu0 %v2976, 8
    %v3079 = vpop.permute.xlu0 %3078
    %3082 = vrot.lane.b32.xlu0 %v2982, 16
    %v3083 = vpop.permute.xlu0 %3082
    %3086 = vrot.lane.b32.xlu0 %v3035, 24
    %v3087 = vpop.permute.xlu0 %3086
    %3090 = vrot.lane.b32.xlu0 %v3072, 32
    %v3091 = vpop.permute.xlu0 %3090
    %3094 = vrot.lane.b32.xlu0 %v3076, 40
    %v3095 = vpop.permute.xlu0 %3094
    %3097 = vrot.lane.b32.xlu0 %v2887, 48
    %v3098 = vpop.permute.xlu0 %3097
    %v3100 = vsel %vm153, %v2938, %v3079
    %v3101 = vsel %vm125, %v3100, %v3083
    %v3102 = vsel %vm564, %v3101, %v3087
    %v3103 = vsel %vm184, %v3102, %v3091
    %v3104 = vsel %vm567, %v3103, %v3095
    %v3105 = vsel %vm569, %v3104, %v3098
    %v3106 = vsel %vm571, %v3105, 0.0
    %v3107 = vsel %vm153, %v3076, 0
    %3109 = vmatpush.msra.mxu0 0.0
    %3110 = vmatpush.msra.mxu0 0.0
    %3111 = vmatpush.msra.mxu0 0.0
    %3112 = vmatpush.msra.mxu0 0.0
    %3113 = vmatpush.msra.mxu0 0.0
    %3114 = vmatpush.msra.mxu0 0.0
    %3115 = vmatpush.msra.mxu0 0.0
    %3116 = vmatpush.msra.mxu0 0.0
    %3117 = vmatpush.msra.mxu0 0.0
    %3118 = vmatpush.msra.mxu0 0.0
    %3119 = vmatpush.msra.mxu0 0.0
    %3120 = vmatpush.msra.mxu0 0.0
    %3121 = vmatpush.msra.mxu0 0.0
    %3122 = vmatpush.msra.mxu0 0.0
    %3123 = vmatpush.msra.mxu0 0.0
    %3124 = vmatpush.msra.mxu0 %v30
    %3125 = vmatmul.f32.gmra.mxu0 %v3107
    %v3126 = vpop.f32.mrf.mxu0
    %v3127 = vadd.f32 0.0, %v3126
    %3128 = vdwg.mxu0
    %v3130 = vrot.slane %v3127, 1
    %v3132 = vadd.f32 %v118, %v3130
    %vm3133 = vcmp.gt.f32.partialorder %v3132, 0.0
    %v3134 = vmin.f32 %v3132, 0.0
    %v3135 = vmul.f32 %v3134, 1.442695
    %v3136 = vpow.pop %v3135
    %v3137 = vsub.f32 %v3136, 1.0
    %v3138 = vsel %vm3133, %v3132, %v3137
    %3139 = vmatpush.msra.mxu0 0.0
    %3140 = vmatpush.msra.mxu0 0.0
    %3141 = vmatpush.msra.mxu0 0.0
    %3142 = vmatpush.msra.mxu0 0.0
    %3143 = vmatpush.msra.mxu0 0.0
    %3144 = vmatpush.msra.mxu0 0.0
    %3145 = vmatpush.msra.mxu0 0.0
    %3146 = vmatpush.msra.mxu0 0.0
    %3147 = vmatpush.msra.mxu0 0.0
    %3148 = vmatpush.msra.mxu0 0.0
    %3149 = vmatpush.msra.mxu0 0.0
    %3150 = vmatpush.msra.mxu0 0.0
    %3151 = vmatpush.msra.mxu0 %v46
    %3152 = vmatpush.msra.mxu0 %v45
    %3153 = vmatpush.msra.mxu0 %v44
    %3154 = vmatpush.msra.mxu0 %v43
    %3155 = vmatmul.f32.gmra.mxu0 %v2889
    %v3156 = vpop.f32.mrf.mxu0
    %v3157 = vadd.f32 0.0, %v3156
    %3158 = vdwg.mxu0
    %v3160 = vrot.slane %v3138, 7
    %v3161 = vsel %vm184, %v3160, 0
    %3163 = vmatpush.msra.mxu0 0.0
    %3164 = vmatpush.msra.mxu0 0.0
    %3165 = vmatpush.msra.mxu0 0.0
    %3166 = vmatpush.msra.mxu0 0.0
    %3167 = vmatpush.msra.mxu0 0.0
    %3168 = vmatpush.msra.mxu0 0.0
    %3169 = vmatpush.msra.mxu0 0.0
    %3170 = vmatpush.msra.mxu0 0.0
    %3171 = vmatpush.msra.mxu0 0.0
    %3172 = vmatpush.msra.mxu0 0.0
    %3173 = vmatpush.msra.mxu0 0.0
    %3174 = vmatpush.msra.mxu0 0.0
    %3175 = vmatpush.msra.mxu0 %v34
    %3176 = vmatpush.msra.mxu0 %v33
    %3177 = vmatpush.msra.mxu0 %v32
    %3178 = vmatpush.msra.mxu0 %v31
    %3179 = vmatmul.f32.gmra.mxu0 %v3161
    %v3180 = vpop.f32.mrf.mxu0
    %v3181 = vadd.f32 %v3157, %v3180
    %3182 = vdwg.mxu0
    %v3183 = vadd.f32 %v3181, %v55
    %v3184 = vsub.f32 0.0, %v3183
    %v3185 = vmul.f32 %v3184, 1.442695
    %v3186 = vpow.pop %v3185
    %v3187 = vadd.f32 %v3186, 1.0
    %v3188 = vrcp.pop %v3187
    %v3189 = vmul.f32 %v3187, %v3188
    %v3190 = vsub.f32 1.0, %v3189
    %v3191 = vmul.f32 %v3188, %v3190
    %v3192 = vadd.f32 %v3188, %v3191
    %vm3193 = vweird.f32 %v3187
    %vm3194 = vweird.f32 %v3188
    %vm3195 = vmor %vm3193, %vm3194
    %v3196 = vsel %vm3195, %v3188, %v3192
    %v3197 = vand.u32 2147483647, %v3187
    %vm3198 = vcmp.eq.f32.partialorder %v3197, 8.507059e+37
    %v3199 = vand.u32 %v3187, 2147483648
    %v3200 = vor.u32 1.1754944e-38, %v3199
    %v3201 = vsel %vm3198, %v3200, %v3196
    %v3202 = vmul.f32 1.0, %v3201
    %3203 = vmatpush.msra.mxu0 0.0
    %3204 = vmatpush.msra.mxu0 0.0
    %3205 = vmatpush.msra.mxu0 0.0
    %3206 = vmatpush.msra.mxu0 0.0
    %3207 = vmatpush.msra.mxu0 0.0
    %3208 = vmatpush.msra.mxu0 0.0
    %3209 = vmatpush.msra.mxu0 0.0
    %3210 = vmatpush.msra.mxu0 0.0
    %3211 = vmatpush.msra.mxu0 0.0
    %3212 = vmatpush.msra.mxu0 0.0
    %3213 = vmatpush.msra.mxu0 0.0
    %3214 = vmatpush.msra.mxu0 0.0
    %3215 = vmatpush.msra.mxu0 %v50
    %3216 = vmatpush.msra.mxu0 %v49
    %3217 = vmatpush.msra.mxu0 %v48
    %3218 = vmatpush.msra.mxu0 %v47
    %3219 = vmatmul.f32.gmra.mxu0 %v2889
    %v3220 = vpop.f32.mrf.mxu0
    %v3221 = vadd.f32 0.0, %v3220
    %3222 = vdwg.mxu0
    %3223 = vmatpush.msra.mxu0 0.0
    %3224 = vmatpush.msra.mxu0 0.0
    %3225 = vmatpush.msra.mxu0 0.0
    %3226 = vmatpush.msra.mxu0 0.0
    %3227 = vmatpush.msra.mxu0 0.0
    %3228 = vmatpush.msra.mxu0 0.0
    %3229 = vmatpush.msra.mxu0 0.0
    %3230 = vmatpush.msra.mxu0 0.0
    %3231 = vmatpush.msra.mxu0 0.0
    %3232 = vmatpush.msra.mxu0 0.0
    %3233 = vmatpush.msra.mxu0 0.0
    %3234 = vmatpush.msra.mxu0 0.0
    %3235 = vmatpush.msra.mxu0 %v38
    %3236 = vmatpush.msra.mxu0 %v37
    %3237 = vmatpush.msra.mxu0 %v36
    %3238 = vmatpush.msra.mxu0 %v35
    %3239 = vmatmul.f32.gmra.mxu0 %v3161
    %v3240 = vpop.f32.mrf.mxu0
    %v3241 = vadd.f32 %v3221, %v3240
    %3242 = vdwg.mxu0
    %v3243 = vadd.f32 %v3241, %v56
    %v3244 = vsub.f32 0.0, %v3243
    %v3245 = vmul.f32 %v3244, 1.442695
    %v3246 = vpow.pop %v3245
    %v3247 = vadd.f32 %v3246, 1.0
    %v3248 = vrcp.pop %v3247
    %v3249 = vmul.f32 %v3247, %v3248
    %v3250 = vsub.f32 1.0, %v3249
    %v3251 = vmul.f32 %v3248, %v3250
    %v3252 = vadd.f32 %v3248, %v3251
    %vm3253 = vweird.f32 %v3247
    %vm3254 = vweird.f32 %v3248
    %vm3255 = vmor %vm3253, %vm3254
    %v3256 = vsel %vm3255, %v3248, %v3252
    %v3257 = vand.u32 2147483647, %v3247
    %vm3258 = vcmp.eq.f32.partialorder %v3257, 8.507059e+37
    %v3259 = vand.u32 %v3247, 2147483648
    %v3260 = vor.u32 1.1754944e-38, %v3259
    %v3261 = vsel %vm3258, %v3260, %v3256
    %v3262 = vmul.f32 1.0, %v3261
    %3263 = vmatpush.msra.mxu0 0.0
    %3264 = vmatpush.msra.mxu0 0.0
    %3265 = vmatpush.msra.mxu0 0.0
    %3266 = vmatpush.msra.mxu0 0.0
    %3267 = vmatpush.msra.mxu0 0.0
    %3268 = vmatpush.msra.mxu0 0.0
    %3269 = vmatpush.msra.mxu0 0.0
    %3270 = vmatpush.msra.mxu0 0.0
    %3271 = vmatpush.msra.mxu0 0.0
    %3272 = vmatpush.msra.mxu0 0.0
    %3273 = vmatpush.msra.mxu0 0.0
    %3274 = vmatpush.msra.mxu0 0.0
    %3275 = vmatpush.msra.mxu0 %v42
    %3276 = vmatpush.msra.mxu0 %v41
    %3277 = vmatpush.msra.mxu0 %v40
    %3278 = vmatpush.msra.mxu0 %v39
    %3279 = vmatmul.f32.gmra.mxu0 %v3161
    %v3280 = vpop.f32.mrf.mxu0
    %v3281 = vadd.f32 %v57, %v3280
    %3282 = vdwg.mxu0
    %3283 = vmatpush.msra.mxu0 0.0
    %3284 = vmatpush.msra.mxu0 0.0
    %3285 = vmatpush.msra.mxu0 0.0
    %3286 = vmatpush.msra.mxu0 0.0
    %3287 = vmatpush.msra.mxu0 0.0
    %3288 = vmatpush.msra.mxu0 0.0
    %3289 = vmatpush.msra.mxu0 0.0
    %3290 = vmatpush.msra.mxu0 0.0
    %3291 = vmatpush.msra.mxu0 0.0
    %3292 = vmatpush.msra.mxu0 0.0
    %3293 = vmatpush.msra.mxu0 0.0
    %3294 = vmatpush.msra.mxu0 0.0
    %3295 = vmatpush.msra.mxu0 %v54
    %3296 = vmatpush.msra.mxu0 %v53
    %3297 = vmatpush.msra.mxu0 %v52
    %3298 = vmatpush.msra.mxu0 %v51
    %3299 = vmatmul.f32.gmra.mxu0 %v2889
    %v3300 = vpop.f32.mrf.mxu0
    %v3301 = vadd.f32 %v58, %v3300
    %3302 = vdwg.mxu0
    %v3303 = vmul.f32 %v3202, %v3301
    %v3304 = vadd.f32 %v3281, %v3303
    %v3305 = vtanh.pop %v3304
    %v3306 = vsub.f32 1.0, %v3262
    %v3307 = vmul.f32 %v3306, %v3305
    %v3308 = vmul.f32 %v3262, %v2887
    %v3309 = vadd.f32 %v3307, %v3308
    %v3311 = vsel %vm184, %v3309, 0
    %3313 = vmatpush.msra.mxu0 0.0
    %3314 = vmatpush.msra.mxu0 0.0
    %3315 = vmatpush.msra.mxu0 0.0
    %3316 = vmatpush.msra.mxu0 0.0
    %3317 = vmatpush.msra.mxu0 0.0
    %3318 = vmatpush.msra.mxu0 0.0
    %3319 = vmatpush.msra.mxu0 0.0
    %3320 = vmatpush.msra.mxu0 0.0
    %3321 = vmatpush.msra.mxu0 0.0
    %3322 = vmatpush.msra.mxu0 0.0
    %3323 = vmatpush.msra.mxu0 0.0
    %3324 = vmatpush.msra.mxu0 0.0
    %3325 = vmatpush.msra.mxu0 %v62
    %3326 = vmatpush.msra.mxu0 %v61
    %3327 = vmatpush.msra.mxu0 %v60
    %3328 = vmatpush.msra.mxu0 %v59
    %3329 = vmatmul.f32.gmra.mxu0 %v3311
    %v3330 = vpop.f32.mrf.mxu0
    %v3331 = vadd.f32 %v63, %v3330
    %3332 = vdwg.mxu0
    %vm3333 = vcmp.gt.f32.partialorder %v3331, 0.0
    %v3334 = vmin.f32 %v3331, 0.0
    %v3335 = vmul.f32 %v3334, 1.442695
    %v3336 = vpow.pop %v3335
    %v3337 = vsub.f32 %v3336, 1.0
    %v3338 = vsel %vm3333, %v3331, %v3337
    %v3340 = vsel %vm184, %v3338, 0
    %3342 = vmatpush.msra.mxu0 0.0
    %3343 = vmatpush.msra.mxu0 0.0
    %3344 = vmatpush.msra.mxu0 0.0
    %3345 = vmatpush.msra.mxu0 0.0
    %3346 = vmatpush.msra.mxu0 0.0
    %3347 = vmatpush.msra.mxu0 0.0
    %3348 = vmatpush.msra.mxu0 0.0
    %3349 = vmatpush.msra.mxu0 0.0
    %3350 = vmatpush.msra.mxu0 0.0
    %3351 = vmatpush.msra.mxu0 0.0
    %3352 = vmatpush.msra.mxu0 0.0
    %3353 = vmatpush.msra.mxu0 0.0
    %3354 = vmatpush.msra.mxu0 %v71
    %3355 = vmatpush.msra.mxu0 %v70
    %3356 = vmatpush.msra.mxu0 %v69
    %3357 = vmatpush.msra.mxu0 %v68
    %3358 = vmatmul.f32.gmra.mxu0 %v3340
    %v3359 = vpop.f32.mrf.mxu0
    %v3360 = vadd.f32 %v84, %v3359
    %3361 = vdwg.mxu0
    %3362 = vmatpush.msra.mxu0 0.0
    %3363 = vmatpush.msra.mxu0 0.0
    %3364 = vmatpush.msra.mxu0 0.0
    %3365 = vmatpush.msra.mxu0 0.0
    %3366 = vmatpush.msra.mxu0 0.0
    %3367 = vmatpush.msra.mxu0 0.0
    %3368 = vmatpush.msra.mxu0 0.0
    %3369 = vmatpush.msra.mxu0 0.0
    %3370 = vmatpush.msra.mxu0 0.0
    %3371 = vmatpush.msra.mxu0 0.0
    %3372 = vmatpush.msra.mxu0 0.0
    %3373 = vmatpush.msra.mxu0 0.0
    %3374 = vmatpush.msra.mxu0 %v75
    %3375 = vmatpush.msra.mxu0 %v74
    %3376 = vmatpush.msra.mxu0 %v73
    %3377 = vmatpush.msra.mxu0 %v72
    %3378 = vmatmul.f32.gmra.mxu0 %v3340
    %v3379 = vpop.f32.mrf.mxu0
    %v3380 = vadd.f32 %v85, %v3379
    %3381 = vdwg.mxu0
    %v3382 = vmax.f32 %v3380, 0.0
    %v3383 = vand.u32 2147483647, %v3380
    %v3384 = vsub.f32 0.0, %v3383
    %v3385 = vmul.f32 %v3384, 1.442695
    %v3386 = vpow.pop %v3385
    %v3387 = vadd.f32 %v3386, 1.0
    %v3388 = vlog2.pop %v3387
    %v3389 = vmul.f32 %v3388, 0.6931472
    %v3390 = vmul.f32 -0.5, %v3386
    %v3391 = vadd.f32 %v3390, 1.0
    %v3392 = vmul.f32 %v3391, %v3386
    %v3393 = vand.u32 2147483647, %v3386
    %vm3394 = vcmp.lt.f32.partialorder %v3393, 0.0004427343
    %v3395 = vsel %vm3394, %v3392, %v3389
    %v3396 = vadd.f32 %v3382, %v3395
    %v3397 = vadd.f32 %v3396, 0.1
    %v3398 = vadd.f32 %v3397, 1000000.0
    %v3399 = vadd.f32 %v3360, 1000000.0
    %v3400 = vrot.slane %v149, 7
    %v3402 = vmul.f32 %v3398, %v3400
    %v3403 = vadd.f32 %v3399, %v3402
    %v3404 = vadd.f32 %v3403, 1000000.0
    %3405 = vmatpush.msra.mxu0 0.0
    %3406 = vmatpush.msra.mxu0 0.0
    %3407 = vmatpush.msra.mxu0 0.0
    %3408 = vmatpush.msra.mxu0 0.0
    %3409 = vmatpush.msra.mxu0 0.0
    %3410 = vmatpush.msra.mxu0 0.0
    %3411 = vmatpush.msra.mxu0 0.0
    %3412 = vmatpush.msra.mxu0 0.0
    %3413 = vmatpush.msra.mxu0 0.0
    %3414 = vmatpush.msra.mxu0 0.0
    %3415 = vmatpush.msra.mxu0 0.0
    %3416 = vmatpush.msra.mxu0 0.0
    %3417 = vmatpush.msra.mxu0 %v67
    %3418 = vmatpush.msra.mxu0 %v66
    %3419 = vmatpush.msra.mxu0 %v65
    %3420 = vmatpush.msra.mxu0 %v64
    %3421 = vmatmul.f32.gmra.mxu0 %v3311
    %v3422 = vpop.f32.mrf.mxu0
    %v3423 = vadd.f32 0.0, %v3422
    %3424 = vdwg.mxu0
    %v3426 = vrot.slane %v3423, 1
    %v3428 = vadd.f32 %v147, %v3426
    %vm3429 = vcmp.gt.f32.partialorder %v3428, 0.0
    %v3430 = vmin.f32 %v3428, 0.0
    %v3431 = vmul.f32 %v3430, 1.442695
    %v3432 = vpow.pop %v3431
    %v3433 = vsub.f32 %v3432, 1.0
    %v3434 = vsel %vm3429, %v3428, %v3433
    %v3436 = vrot.slane %v3434, 7
    %v3437 = vsel %vm184, %v3436, 0
    %3439 = vmatpush.msra.mxu0 0.0
    %3440 = vmatpush.msra.mxu0 0.0
    %3441 = vmatpush.msra.mxu0 0.0
    %3442 = vmatpush.msra.mxu0 0.0
    %3443 = vmatpush.msra.mxu0 0.0
    %3444 = vmatpush.msra.mxu0 0.0
    %3445 = vmatpush.msra.mxu0 0.0
    %3446 = vmatpush.msra.mxu0 0.0
    %3447 = vmatpush.msra.mxu0 0.0
    %3448 = vmatpush.msra.mxu0 0.0
    %3449 = vmatpush.msra.mxu0 0.0
    %3450 = vmatpush.msra.mxu0 0.0
    %3451 = vmatpush.msra.mxu0 %v79
    %3452 = vmatpush.msra.mxu0 %v78
    %3453 = vmatpush.msra.mxu0 %v77
    %3454 = vmatpush.msra.mxu0 %v76
    %3455 = vmatmul.f32.gmra.mxu0 %v3437
    %v3456 = vpop.f32.mrf.mxu0
    %v3457 = vadd.f32 %v86, %v3456
    %3458 = vdwg.mxu0
    %3459 = vmatpush.msra.mxu0 0.0
    %3460 = vmatpush.msra.mxu0 0.0
    %3461 = vmatpush.msra.mxu0 0.0
    %3462 = vmatpush.msra.mxu0 0.0
    %3463 = vmatpush.msra.mxu0 0.0
    %3464 = vmatpush.msra.mxu0 0.0
    %3465 = vmatpush.msra.mxu0 0.0
    %3466 = vmatpush.msra.mxu0 0.0
    %3467 = vmatpush.msra.mxu0 0.0
    %3468 = vmatpush.msra.mxu0 0.0
    %3469 = vmatpush.msra.mxu0 0.0
    %3470 = vmatpush.msra.mxu0 0.0
    %3471 = vmatpush.msra.mxu0 %v83
    %3472 = vmatpush.msra.mxu0 %v82
    %3473 = vmatpush.msra.mxu0 %v81
    %3474 = vmatpush.msra.mxu0 %v80
    %3475 = vmatmul.f32.gmra.mxu0 %v3437
    %v3476 = vpop.f32.mrf.mxu0
    %v3477 = vadd.f32 %v87, %v3476
    %3478 = vdwg.mxu0
    %v3479 = vmax.f32 %v3477, 0.0
    %v3480 = vand.u32 2147483647, %v3477
    %v3481 = vsub.f32 0.0, %v3480
    %v3482 = vmul.f32 %v3481, 1.442695
    %v3483 = vpow.pop %v3482
    %v3484 = vadd.f32 %v3483, 1.0
    %v3485 = vlog2.pop %v3484
    %v3486 = vmul.f32 %v3485, 0.6931472
    %v3487 = vmul.f32 -0.5, %v3483
    %v3488 = vadd.f32 %v3487, 1.0
    %v3489 = vmul.f32 %v3488, %v3483
    %v3490 = vand.u32 2147483647, %v3483
    %vm3491 = vcmp.lt.f32.partialorder %v3490, 0.0004427343
    %v3492 = vsel %vm3491, %v3489, %v3486
    %v3493 = vadd.f32 %v3479, %v3492
    %v3494 = vadd.f32 %v3493, 0.1
    %v3495 = vrot.slane %v150, 7
    %v3497 = vmul.f32 %v3494, %v3495
    %v3498 = vadd.f32 %v3457, %v3497
    %3500 = vrot.lane.b32.xlu0 %v3398, 8
    %v3501 = vpop.permute.xlu0 %3500
    %3504 = vrot.lane.b32.xlu0 %v3404, 16
    %v3505 = vpop.permute.xlu0 %3504
    %3508 = vrot.lane.b32.xlu0 %v3457, 24
    %v3509 = vpop.permute.xlu0 %3508
    %3512 = vrot.lane.b32.xlu0 %v3494, 32
    %v3513 = vpop.permute.xlu0 %3512
    %3516 = vrot.lane.b32.xlu0 %v3498, 40
    %v3517 = vpop.permute.xlu0 %3516
    %3519 = vrot.lane.b32.xlu0 %v3309, 48
    %v3520 = vpop.permute.xlu0 %3519
    %v3522 = vsel %vm153, %v3360, %v3501
    %v3523 = vsel %vm125, %v3522, %v3505
    %v3524 = vsel %vm564, %v3523, %v3509
    %v3525 = vsel %vm184, %v3524, %v3513
    %v3526 = vsel %vm567, %v3525, %v3517
    %v3527 = vsel %vm569, %v3526, %v3520
    %v3528 = vsel %vm571, %v3527, 0.0
    %v3530 = vrot.slane %v996, 7
    %v3533 = vrot.slane %v1418, 6
    %v3536 = vrot.slane %v1840, 5
    %v3539 = vrot.slane %v2262, 4
    %v3542 = vrot.slane %v2684, 3
    %v3545 = vrot.slane %v3106, 2
    %v3548 = vrot.slane %v3528, 1
    %vm3550 = vcmask 1040384
    %v3551 = vsel %vm3550, %v572, %v3530
    %vm3552 = vcmask 1041408
    %v3553 = vsel %vm3552, %v3551, %v3533
    %vm3554 = vcmask 1042432
    %v3555 = vsel %vm3554, %v3553, %v3536
    %v3556 = vsel %vm96, %v3555, %v3539
    %vm3557 = vcmask 1044480
    %v3558 = vsel %vm3557, %v3556, %v3542
    %vm3559 = vcmask 1045504
    %v3560 = vsel %vm3559, %v3558, %v3545
    %vm3561 = vcmask 1046528
    %v3562 = vsel %vm3561, %v3560, %v3548
    %3563 = vst [vmem:[#allocation2] sm:$0xff] %v3562
    // Predicated region
    $region34: #{tpu_custom_call.1} parent=1 // pred_check
      _
    $region35: #{tpu_custom_call.1} parent=1 // pred_check_branch
      %3565 = sbr.rel (0) target = $region37
    $region36: #{tpu_custom_call.1} parent=1 // pred_region
      %3567 = vsyncadd [#allocation3], 0
      %s3569 = sshll.u32 [#allocation2], 4
      %s3570 = int_to_ptr.vmem [resolvable:$true] %s3569
      %s3571 = sshll.u32 %s8, 4
      %s3572 = int_to_ptr.hbm [resolvable:$true] %s3571
      %3574 = dma.vmem_to_hbm [thread:$0]  %s3570, 128, %s3572, [#allocation3]
    $region37: #{tpu_custom_call.1} parent=1 // pred_fallthru
      _
    // Predicated region
    $region38: #{tpu_custom_call.1} parent=1 // pred_check
      _
    $region39: #{tpu_custom_call.1} parent=1 // pred_check_branch
      %3576 = sbr.rel (0) target = $region41
    $region40: #{tpu_custom_call.1} parent=1 // pred_region
      %3578 = dma.done [#allocation3], 128
    $region41: #{tpu_custom_call.1} parent=1 // pred_fallthru
      _
    %3579 = vsyncpa [#allocation3], 1

</llo_original>
